<compile_context>
chip_gen: v6e
topology: v6e:2x2x1
jax: 0.10.0
libtpu: 0.0.40
codegen_flags: <defaults>
</compile_context>

<pallas_src>
import functools
import math

import jax
import jax.numpy as jnp
import numpy as np
from jax.experimental import pallas as pl
from jax.experimental.pallas import tpu as pltpu


# ----------------------------- in-kernel helpers -----------------------------

def _layer_norm(x, gamma, beta, eps=1e-12):
    mu = jnp.mean(x, axis=-1, keepdims=True)
    var = jnp.mean((x - mu) ** 2, axis=-1, keepdims=True)
    return (x - mu) * jax.lax.rsqrt(var + eps) * gamma + beta


def _gelu(x):
    # exact GELU (BERT's default "gelu" activation)
    return 0.5 * x * (1.0 + jax.lax.erf(x * (1.0 / math.sqrt(2.0))))


# ------------------------------- layer kernel --------------------------------

def _layer_body(x, mask,
                wqkv_ref, bqkv_ref, wo_ref, bo_ref, g1_ref, be1_ref,
                wi_ref, bi_ref, w2_ref, b2_ref, g2_ref, be2_ref, o_ref,
                *, num_heads, head_dim):
    S, H = x.shape
    x_bf = x.astype(jnp.bfloat16)

    # Fused QKV projection: one (S,H)@(H,3H) bf16 MXU op, f32 accumulation.
    qkv = jnp.dot(x_bf, wqkv_ref[...],
                  preferred_element_type=jnp.float32) + bqkv_ref[...]

    def heads(z):  # (S, H) -> (nh, S, hd), bf16 operands for the MXU
        return jnp.swapaxes(
            z.reshape(S, num_heads, head_dim), 0, 1).astype(jnp.bfloat16)

    qh = heads(qkv[:, 0 * H:1 * H])
    kh = heads(qkv[:, 1 * H:2 * H])
    vh = heads(qkv[:, 2 * H:3 * H])

    # Batched-over-heads attention; scores / softmax stay in f32.
    scores = jnp.einsum("nqd,nkd->nqk", qh, kh,
                        preferred_element_type=jnp.float32)
    scores = scores * (1.0 / math.sqrt(head_dim)) + mask      # mask: (1,1,S)
    m = jnp.max(scores, axis=-1, keepdims=True)
    e = jnp.exp(scores - m)
    p = e * pl.reciprocal(jnp.sum(e, axis=-1, keepdims=True), approx=True)
    ctx = jnp.einsum("nqk,nkd->nqd", p.astype(jnp.bfloat16), vh,
                     preferred_element_type=jnp.float32)      # (nh, S, hd)
    context = jnp.swapaxes(ctx, 0, 1).reshape(S, H)

    attn_out = jnp.dot(context.astype(jnp.bfloat16), wo_ref[...],
                       preferred_element_type=jnp.float32) + bo_ref[...]
    h1 = _layer_norm(attn_out + x, g1_ref[...], be1_ref[...])

    inter = _gelu(jnp.dot(h1.astype(jnp.bfloat16), wi_ref[...],
                          preferred_element_type=jnp.float32) + bi_ref[...])
    out = jnp.dot(inter.astype(jnp.bfloat16), w2_ref[...],
                  preferred_element_type=jnp.float32) + b2_ref[...]
    o_ref[0] = _layer_norm(out + h1, g2_ref[...], be2_ref[...])


def _bert_layer_kernel(x_ref, mask_ref, *refs, num_heads, head_dim):
    _layer_body(x_ref[0], mask_ref[...], *refs,
                num_heads=num_heads, head_dim=head_dim)


def _bert_layer_mix_kernel(per_ref, x_ref, xp_ref, mask_ref, *refs,
                           num_heads, head_dim, alpha):
    del per_ref  # consumed only by the index_maps
    # tmix fused into this layer's input read (mix of the previous layer's
    # output at b and at perindex[b]); done in f32.
    x = alpha * x_ref[0] + (1.0 - alpha) * xp_ref[0]
    _layer_body(x, mask_ref[...], *refs,
                num_heads=num_heads, head_dim=head_dim)


def prepare_layer_params(p):
    """Host-side: fuse QKV weights and cast matmul weights to bf16."""
    bf16, f32 = jnp.bfloat16, jnp.float32
    return {
        "wqkv": jnp.concatenate([p["wq"], p["wk"], p["wv"]], axis=1).astype(bf16),
        "bqkv": jnp.concatenate([p["bq"], p["bk"], p["bv"]], axis=1).astype(f32),
        "wo": p["wo"].astype(bf16), "bo": p["bo"].astype(f32),
        "g1": p["g1"].astype(f32), "be1": p["be1"].astype(f32),
        "wi": p["wi"].astype(bf16), "bi": p["bi"].astype(f32),
        "w2": p["w2"].astype(bf16), "b2": p["b2"].astype(f32),
        "g2": p["g2"].astype(f32), "be2": p["be2"].astype(f32),
    }


def bert_layer_pallas(hidden, mask3, pp, *, num_heads, mix=None):
    """One BertLayer. `pp` is a prepared (bf16/fused) param dict.

    If mix=(perindex, alpha), the tmix step from the previous layer is fused
    into this layer's input read via scalar-prefetched perindex.
    """
    B, S, H = hidden.shape
    I = pp["wi"].shape[1]
    HD = H // num_heads

    def wspec(shape):  # weights: constant block index across the batch grid
        n = len(shape)
        if mix is None:
            return pl.BlockSpec(shape, lambda b: (0,) * n)
        return pl.BlockSpec(shape, lambda b, per: (0,) * n)

    weight_specs = [
        wspec((H, 3 * H)), wspec((1, 3 * H)),     # fused QKV dense
        wspec((H, H)), wspec((1, H)),             # attn output dense
        wspec((1, H)), wspec((1, H)),             # LN1 gamma/beta
        wspec((H, I)), wspec((1, I)),             # intermediate dense
        wspec((I, H)), wspec((1, H)),             # output dense
        wspec((1, H)), wspec((1, H)),             # LN2 gamma/beta
    ]
    weights = (pp["wqkv"], pp["bqkv"], pp["wo"], pp["bo"], pp["g1"], pp["be1"],
               pp["wi"], pp["bi"], pp["w2"], pp["b2"], pp["g2"], pp["be2"])

    cparams = pltpu.CompilerParams(
        dimension_semantics=("parallel",),
        vmem_limit_bytes=64 * 1024 * 1024,   # safe on v5e/v6e/v7x
    )
    out_shape = jax.ShapeDtypeStruct((B, S, H), jnp.float32)

    if mix is None:
        kernel = functools.partial(_bert_layer_kernel,
                                   num_heads=num_heads, head_dim=HD)
        in_specs = [pl.BlockSpec((1, S, H), lambda b: (b, 0, 0)),   # hidden[b]
                    pl.BlockSpec((1, 1, S), lambda b: (b, 0, 0))    # mask[b]
                    ] + weight_specs
        return pl.pallas_call(
            kernel,
            out_shape=out_shape,
            grid=(B,),
            in_specs=in_specs,
            out_specs=pl.BlockSpec((1, S, H), lambda b: (b, 0, 0)),
            compiler_params=cparams,
        )(hidden, mask3, *weights)

    perindex, alpha = mix
    kernel = functools.partial(_bert_layer_mix_kernel,
                               num_heads=num_heads, head_dim=HD,
                               alpha=float(alpha))
    gs = pltpu.PrefetchScalarGridSpec(
        num_scalar_prefetch=1,
        grid=(B,),
        in_specs=[pl.BlockSpec((1, S, H), lambda b, per: (b, 0, 0)),       # h[b]
                  pl.BlockSpec((1, S, H), lambda b, per: (per[b], 0, 0)),  # h[per[b]]
                  pl.BlockSpec((1, 1, S), lambda b, per: (b, 0, 0)),       # mask[b]
                  ] + weight_specs,
        out_specs=pl.BlockSpec((1, S, H), lambda b, per: (b, 0, 0)),
    )
    return pl.pallas_call(
        kernel,
        grid_spec=gs,
        out_shape=out_shape,
        compiler_params=cparams,
    )(perindex, hidden, hidden, mask3, *weights)


# ----------------------- standalone tmix (last-layer case) -------------------

def _mix_kernel(per_ref, x_ref, xp_ref, o_ref, *, alpha):
    del per_ref
    o_ref[...] = alpha * x_ref[...] + (1.0 - alpha) * xp_ref[...]


def mixup_pallas(hidden, perindex, alpha):
    B, S, H = hidden.shape
    gs = pltpu.PrefetchScalarGridSpec(
        num_scalar_prefetch=1,
        grid=(B,),
        in_specs=[pl.BlockSpec((1, S, H), lambda b, per: (b, 0, 0)),
                  pl.BlockSpec((1, S, H), lambda b, per: (per[b], 0, 0))],
        out_specs=pl.BlockSpec((1, S, H), lambda b, per: (b, 0, 0)),
    )
    return pl.pallas_call(
        functools.partial(_mix_kernel, alpha=float(alpha)),
        grid_spec=gs,
        out_shape=jax.ShapeDtypeStruct((B, S, H), jnp.float32),
        compiler_params=pltpu.CompilerParams(
            dimension_semantics=("parallel",)),
    )(perindex, hidden, hidden)


# ------------------------------ encoder wrapper -------------------------------

def bert_encoder_pallas(perindex, mixlayer, alpha, hidden, mask3, layer_params,
                        *, num_heads):
    prepared = [prepare_layer_params(p) for p in layer_params]
    pending_mix = False
    for i, pp in enumerate(prepared):
        if pending_mix:
            hidden = bert_layer_pallas(hidden, mask3, pp, num_heads=num_heads,
                                       mix=(perindex, alpha))
        else:
            hidden = bert_layer_pallas(hidden, mask3, pp, num_heads=num_heads)
        pending_mix = (i == mixlayer)
    if pending_mix:  # mixlayer was the last layer: mix the final output
        hidden = mixup_pallas(hidden, perindex, alpha)
    return hidden   # last_hidden_state


# ------------------------------ pure-JAX reference ----------------------------

def _bert_layer_ref(x, mask3, p, nh):
    B, S, H = x.shape
    hd = H // nh
    q = x @ p["wq"] + p["bq"]
    k = x @ p["wk"] + p["bk"]
    v = x @ p["wv"] + p["bv"]
    qh = q.reshape(B, S, nh, hd).transpose(0, 2, 1, 3)
    kh = k.reshape(B, S, nh, hd).transpose(0, 2, 1, 3)
    vh = v.reshape(B, S, nh, hd).transpose(0, 2, 1, 3)
    scores = jnp.einsum("bhqd,bhkd->bhqk", qh, kh) / math.sqrt(hd)
    scores = scores + mask3[:, None, :, :]
    probs = jax.nn.softmax(scores, axis=-1)
    ctx = jnp.einsum("bhqk,bhkd->bhqd", probs, vh).transpose(0, 2, 1, 3).reshape(B, S, H)
    attn = ctx @ p["wo"] + p["bo"]
    h1 = _layer_norm(attn + x, p["g1"], p["be1"])
    inter = _gelu(h1 @ p["wi"] + p["bi"])
    out = inter @ p["w2"] + p["b2"]
    return _layer_norm(out + h1, p["g2"], p["be2"])


def bert_encoder_ref(perindex, mixlayer, alpha, hidden, mask3, layer_params, *, num_heads):
    for i, p in enumerate(layer_params):
        hidden = _bert_layer_ref(hidden, mask3, p, num_heads)
        if i == mixlayer:
            hidden = alpha * hidden + (1.0 - alpha) * hidden[perindex]
    return hidden


# ------------------------------------ main ------------------------------------

def _init_layer_params(key, H, I):
    ks = jax.random.split(key, 6)
    std = 0.02
    return {
        "wq": jax.random.normal(ks[0], (H, H), jnp.float32) * std,
        "bq": jnp.zeros((1, H), jnp.float32),
        "wk": jax.random.normal(ks[1], (H, H), jnp.float32) * std,
        "bk": jnp.zeros((1, H), jnp.float32),
        "wv": jax.random.normal(ks[2], (H, H), jnp.float32) * std,
        "bv": jnp.zeros((1, H), jnp.float32),
        "wo": jax.random.normal(ks[3], (H, H), jnp.float32) * std,
        "bo": jnp.zeros((1, H), jnp.float32),
        "g1": jnp.ones((1, H), jnp.float32),
        "be1": jnp.zeros((1, H), jnp.float32),
        "wi": jax.random.normal(ks[4], (H, I), jnp.float32) * std,
        "bi": jnp.zeros((1, I), jnp.float32),
        "w2": jax.random.normal(ks[5], (I, H), jnp.float32) * std,
        "b2": jnp.zeros((1, H), jnp.float32),
        "g2": jnp.ones((1, H), jnp.float32),
        "be2": jnp.zeros((1, H), jnp.float32),
    }


if __name__ == "__main__":
    # Small but lane-dense config: H, I multiples of 128; S multiple of 8.
    B, S, H, NH, I, L = 4, 16, 128, 4, 256, 2

    root = jax.random.PRNGKey(0)
    k_hid, k_params = jax.random.split(root)

    hidden = jax.random.normal(k_hid, (B, S, H), jnp.float32)
    # additive attention mask: batch element 1 has its last three tokens masked.
    mask = np.zeros((B, 1, S), np.float32)
    mask[1, 0, -3:] = -10000.0
    mask3 = jnp.asarray(mask)
    perindex = jnp.asarray([1, 0, 3, 2], jnp.int32)   # batch permutation for tmix

    layer_keys = jax.random.split(k_params, L)
    layer_params = [_init_layer_params(layer_keys[i], H, I) for i in range(L)]

    # Exercise both mix paths: fused into next layer (mixlayer=0) and
    # standalone mix of the final output (mixlayer=L-1).
    for mixlayer, alpha in [(0, 0.7), (L - 1, 0.3)]:
        out = bert_encoder_pallas(perindex, mixlayer, alpha, hidden, mask3,
                                  layer_params, num_heads=NH)
        out = jax.block_until_ready(out)
        ref = bert_encoder_ref(perindex, mixlayer, alpha, hidden, mask3,
                               layer_params, num_heads=NH)
        np.testing.assert_allclose(np.asarray(out), np.asarray(ref),
                                   rtol=2e-2, atol=2e-2)
    print("KERNEL_OK")
</pallas_src>

<mosaic_0001>
module attributes {stable_mosaic.version = 11 : i64} {
  func.func @_bert_layer_kernel(%arg0: i32, %arg1: memref<1x16x128xf32, #tpu.memory_space<vmem>>, %arg2: memref<1x1x16xf32, #tpu.memory_space<vmem>>, %arg3: memref<128x384xbf16, #tpu.memory_space<vmem>>, %arg4: memref<1x384xf32, #tpu.memory_space<vmem>>, %arg5: memref<128x128xbf16, #tpu.memory_space<vmem>>, %arg6: memref<1x128xf32, #tpu.memory_space<vmem>>, %arg7: memref<1x128xf32, #tpu.memory_space<vmem>>, %arg8: memref<1x128xf32, #tpu.memory_space<vmem>>, %arg9: memref<128x256xbf16, #tpu.memory_space<vmem>>, %arg10: memref<1x256xf32, #tpu.memory_space<vmem>>, %arg11: memref<256x128xbf16, #tpu.memory_space<vmem>>, %arg12: memref<1x128xf32, #tpu.memory_space<vmem>>, %arg13: memref<1x128xf32, #tpu.memory_space<vmem>>, %arg14: memref<1x128xf32, #tpu.memory_space<vmem>>, %arg15: memref<1x16x128xf32, #tpu.memory_space<vmem>>) attributes {dimension_semantics = [#tpu.dimension_semantics<parallel>], iteration_bounds = array<i64: 4>, scalar_prefetch = 0 : i64, scratch_operands = 0 : i64, tpu.core_type = #tpu.core_type<tc>, window_params = [{transform_indices = @transform_0, window_bounds = array<i64: 1, 16, 128>}, {transform_indices = @transform_1, window_bounds = array<i64: 1, 1, 16>}, {pipeline_mode = #tpu.pipeline_mode<synchronous>, transform_indices = @transform_2, window_bounds = array<i64: 128, 384>}, {pipeline_mode = #tpu.pipeline_mode<synchronous>, transform_indices = @transform_3, window_bounds = array<i64: 1, 384>}, {pipeline_mode = #tpu.pipeline_mode<synchronous>, transform_indices = @transform_4, window_bounds = array<i64: 128, 128>}, {pipeline_mode = #tpu.pipeline_mode<synchronous>, transform_indices = @transform_5, window_bounds = array<i64: 1, 128>}, {pipeline_mode = #tpu.pipeline_mode<synchronous>, transform_indices = @transform_6, window_bounds = array<i64: 1, 128>}, {pipeline_mode = #tpu.pipeline_mode<synchronous>, transform_indices = @transform_7, window_bounds = array<i64: 1, 128>}, {pipeline_mode = #tpu.pipeline_mode<synchronous>, transform_indices = @transform_8, window_bounds = array<i64: 128, 256>}, {pipeline_mode = #tpu.pipeline_mode<synchronous>, transform_indices = @transform_9, window_bounds = array<i64: 1, 256>}, {pipeline_mode = #tpu.pipeline_mode<synchronous>, transform_indices = @transform_10, window_bounds = array<i64: 256, 128>}, {pipeline_mode = #tpu.pipeline_mode<synchronous>, transform_indices = @transform_11, window_bounds = array<i64: 1, 128>}, {pipeline_mode = #tpu.pipeline_mode<synchronous>, transform_indices = @transform_12, window_bounds = array<i64: 1, 128>}, {pipeline_mode = #tpu.pipeline_mode<synchronous>, transform_indices = @transform_13, window_bounds = array<i64: 1, 128>}, {transform_indices = @transform_14, window_bounds = array<i64: 1, 16, 128>}]} {
    %c0 = arith.constant 0 : index
    %c0_0 = arith.constant 0 : index
    %c0_1 = arith.constant 0 : index
    %0 = vector.load %arg1[%c0, %c0_0, %c0_1] : memref<1x16x128xf32, #tpu.memory_space<vmem>>, vector<1x16x128xf32>
    %1 = vector.shape_cast %0 : vector<1x16x128xf32> to vector<16x128xf32>
    %c0_2 = arith.constant 0 : index
    %c0_3 = arith.constant 0 : index
    %c0_4 = arith.constant 0 : index
    %2 = vector.load %arg2[%c0_2, %c0_3, %c0_4] : memref<1x1x16xf32, #tpu.memory_space<vmem>>, vector<1x1x16xf32>
    %3 = arith.truncf %1 : vector<16x128xf32> to vector<16x128xbf16>
    %c0_5 = arith.constant 0 : index
    %c0_6 = arith.constant 0 : index
    %4 = vector.load %arg3[%c0_5, %c0_6] : memref<128x384xbf16, #tpu.memory_space<vmem>>, vector<128x384xbf16>
    %cst = arith.constant dense<0.000000e+00> : vector<16x384xf32>
    %5 = tpu.matmul %3, %4, %cst {dimension_numbers = #tpu.dot_dimension_numbers<[1], [0], [0], [1], [0, 0, 1, 1], [], []>} : vector<16x128xbf16>, vector<128x384xbf16>, vector<16x384xf32> -> vector<16x384xf32>
    %c0_7 = arith.constant 0 : index
    %c0_8 = arith.constant 0 : index
    %6 = vector.load %arg4[%c0_7, %c0_8] : memref<1x384xf32, #tpu.memory_space<vmem>>, vector<1x384xf32>
    %7 = vector.broadcast %6 : vector<1x384xf32> to vector<16x384xf32>
    %8 = arith.addf %5, %7 : vector<16x384xf32>
    %9 = vector.extract_strided_slice %8 {offsets = [0, 0], sizes = [16, 128], strides = [1, 1]} : vector<16x384xf32> to vector<16x128xf32>
    %10 = vector.shape_cast %9 : vector<16x128xf32> to vector<16x4x32xf32>
    %11 = tpu.transpose %10, [1, 0, 2] : vector<16x4x32xf32> -> vector<4x16x32xf32>
    %12 = arith.truncf %11 : vector<4x16x32xf32> to vector<4x16x32xbf16>
    %13 = vector.extract_strided_slice %8 {offsets = [0, 128], sizes = [16, 128], strides = [1, 1]} : vector<16x384xf32> to vector<16x128xf32>
    %14 = vector.shape_cast %13 : vector<16x128xf32> to vector<16x4x32xf32>
    %15 = tpu.transpose %14, [1, 0, 2] : vector<16x4x32xf32> -> vector<4x16x32xf32>
    %16 = arith.truncf %15 : vector<4x16x32xf32> to vector<4x16x32xbf16>
    %17 = vector.extract_strided_slice %8 {offsets = [0, 256], sizes = [16, 128], strides = [1, 1]} : vector<16x384xf32> to vector<16x128xf32>
    %18 = vector.shape_cast %17 : vector<16x128xf32> to vector<16x4x32xf32>
    %19 = tpu.transpose %18, [1, 0, 2] : vector<16x4x32xf32> -> vector<4x16x32xf32>
    %20 = arith.truncf %19 : vector<4x16x32xf32> to vector<4x16x32xbf16>
    "tpu.trace_start"() <{level = 10 : i32, message = "nqd,nkd->nqk"}> : () -> ()
    %cst_9 = arith.constant dense<0.000000e+00> : vector<4x16x16xf32>
    %21 = tpu.matmul %12, %16, %cst_9 {dimension_numbers = #tpu.dot_dimension_numbers<[2], [2], [1], [1], [0, 0, 0, 1, 1, 1], [0], [0]>} : vector<4x16x32xbf16>, vector<4x16x32xbf16>, vector<4x16x16xf32> -> vector<4x16x16xf32>
    "tpu.trace_stop"() : () -> ()
    %cst_10 = arith.constant 0.176776692 : f32
    %22 = vector.broadcast %cst_10 : f32 to vector<4x16x16xf32>
    %23 = arith.mulf %21, %22 : vector<4x16x16xf32>
    %24 = vector.broadcast %2 : vector<1x1x16xf32> to vector<4x16x16xf32>
    %25 = arith.addf %23, %24 : vector<4x16x16xf32>
    %cst_11 = arith.constant dense<0xFF800000> : vector<4x16xf32>
    %26 = vector.multi_reduction <maximumf>, %25, %cst_11 [2] : vector<4x16x16xf32> to vector<4x16xf32>
    %27 = vector.shape_cast %26 : vector<4x16xf32> to vector<4x16x1xf32>
    %28 = vector.broadcast %27 : vector<4x16x1xf32> to vector<4x16x16xf32>
    %29 = arith.subf %25, %28 : vector<4x16x16xf32>
    %30 = math.exp %29 : vector<4x16x16xf32>
    %cst_12 = arith.constant dense<0.000000e+00> : vector<4x16xf32>
    %31 = vector.multi_reduction <add>, %30, %cst_12 [2] : vector<4x16x16xf32> to vector<4x16xf32>
    %32 = vector.shape_cast %31 : vector<4x16xf32> to vector<4x16x1xf32>
    %33 = tpu.reciprocal %32 {approx = true} : vector<4x16x1xf32> -> vector<4x16x1xf32>
    %34 = vector.broadcast %33 : vector<4x16x1xf32> to vector<4x16x16xf32>
    %35 = arith.mulf %30, %34 : vector<4x16x16xf32>
    %36 = arith.truncf %35 : vector<4x16x16xf32> to vector<4x16x16xbf16>
    "tpu.trace_start"() <{level = 10 : i32, message = "nqk,nkd->nqd"}> : () -> ()
    %cst_13 = arith.constant dense<0.000000e+00> : vector<4x16x32xf32>
    %37 = tpu.matmul %36, %20, %cst_13 {dimension_numbers = #tpu.dot_dimension_numbers<[2], [1], [1], [2], [0, 0, 0, 1, 1, 2], [0], [0]>} : vector<4x16x16xbf16>, vector<4x16x32xbf16>, vector<4x16x32xf32> -> vector<4x16x32xf32>
    "tpu.trace_stop"() : () -> ()
    %38 = tpu.transpose %37, [1, 0, 2] : vector<4x16x32xf32> -> vector<16x4x32xf32>
    %39 = vector.shape_cast %38 : vector<16x4x32xf32> to vector<16x128xf32>
    %40 = arith.truncf %39 : vector<16x128xf32> to vector<16x128xbf16>
    %c0_14 = arith.constant 0 : index
    %c0_15 = arith.constant 0 : index
    %41 = vector.load %arg5[%c0_14, %c0_15] : memref<128x128xbf16, #tpu.memory_space<vmem>>, vector<128x128xbf16>
    %cst_16 = arith.constant dense<0.000000e+00> : vector<16x128xf32>
    %42 = tpu.matmul %40, %41, %cst_16 {dimension_numbers = #tpu.dot_dimension_numbers<[1], [0], [0], [1], [0, 0, 1, 1], [], []>} : vector<16x128xbf16>, vector<128x128xbf16>, vector<16x128xf32> -> vector<16x128xf32>
    %c0_17 = arith.constant 0 : index
    %c0_18 = arith.constant 0 : index
    %43 = vector.load %arg6[%c0_17, %c0_18] : memref<1x128xf32, #tpu.memory_space<vmem>>, vector<1x128xf32>
    %44 = vector.broadcast %43 : vector<1x128xf32> to vector<16x128xf32>
    %45 = arith.addf %42, %44 : vector<16x128xf32>
    %46 = arith.addf %45, %1 : vector<16x128xf32>
    %c0_19 = arith.constant 0 : index
    %c0_20 = arith.constant 0 : index
    %47 = vector.load %arg7[%c0_19, %c0_20] : memref<1x128xf32, #tpu.memory_space<vmem>>, vector<1x128xf32>
    %c0_21 = arith.constant 0 : index
    %c0_22 = arith.constant 0 : index
    %48 = vector.load %arg8[%c0_21, %c0_22] : memref<1x128xf32, #tpu.memory_space<vmem>>, vector<1x128xf32>
    %cst_23 = arith.constant dense<0.000000e+00> : vector<16xf32>
    %49 = vector.multi_reduction <add>, %46, %cst_23 [1] : vector<16x128xf32> to vector<16xf32>
    %50 = vector.shape_cast %49 : vector<16xf32> to vector<16x1xf32>
    %cst_24 = arith.constant 1.280000e+02 : f32
    %51 = vector.broadcast %cst_24 : f32 to vector<16x1xf32>
    %52 = arith.divf %50, %51 : vector<16x1xf32>
    %53 = vector.broadcast %52 : vector<16x1xf32> to vector<16x128xf32>
    %54 = arith.subf %46, %53 : vector<16x128xf32>
    %55 = arith.mulf %54, %54 : vector<16x128xf32>
    %cst_25 = arith.constant dense<0.000000e+00> : vector<16xf32>
    %56 = vector.multi_reduction <add>, %55, %cst_25 [1] : vector<16x128xf32> to vector<16xf32>
    %57 = vector.shape_cast %56 : vector<16xf32> to vector<16x1xf32>
    %cst_26 = arith.constant 1.280000e+02 : f32
    %58 = vector.broadcast %cst_26 : f32 to vector<16x1xf32>
    %59 = arith.divf %57, %58 : vector<16x1xf32>
    %60 = vector.broadcast %52 : vector<16x1xf32> to vector<16x128xf32>
    %61 = arith.subf %46, %60 : vector<16x128xf32>
    %cst_27 = arith.constant 9.99999996E-13 : f32
    %62 = vector.broadcast %cst_27 : f32 to vector<16x1xf32>
    %63 = arith.addf %59, %62 : vector<16x1xf32>
    %64 = math.rsqrt %63 : vector<16x1xf32>
    %65 = vector.broadcast %64 : vector<16x1xf32> to vector<16x128xf32>
    %66 = arith.mulf %61, %65 : vector<16x128xf32>
    %67 = vector.broadcast %47 : vector<1x128xf32> to vector<16x128xf32>
    %68 = arith.mulf %66, %67 : vector<16x128xf32>
    %69 = vector.broadcast %48 : vector<1x128xf32> to vector<16x128xf32>
    %70 = arith.addf %68, %69 : vector<16x128xf32>
    %71 = arith.truncf %70 : vector<16x128xf32> to vector<16x128xbf16>
    %c0_28 = arith.constant 0 : index
    %c0_29 = arith.constant 0 : index
    %72 = vector.load %arg9[%c0_28, %c0_29] : memref<128x256xbf16, #tpu.memory_space<vmem>>, vector<128x256xbf16>
    %cst_30 = arith.constant dense<0.000000e+00> : vector<16x256xf32>
    %73 = tpu.matmul %71, %72, %cst_30 {dimension_numbers = #tpu.dot_dimension_numbers<[1], [0], [0], [1], [0, 0, 1, 1], [], []>} : vector<16x128xbf16>, vector<128x256xbf16>, vector<16x256xf32> -> vector<16x256xf32>
    %c0_31 = arith.constant 0 : index
    %c0_32 = arith.constant 0 : index
    %74 = vector.load %arg10[%c0_31, %c0_32] : memref<1x256xf32, #tpu.memory_space<vmem>>, vector<1x256xf32>
    %75 = vector.broadcast %74 : vector<1x256xf32> to vector<16x256xf32>
    %76 = arith.addf %73, %75 : vector<16x256xf32>
    %cst_33 = arith.constant 5.000000e-01 : f32
    %77 = vector.broadcast %cst_33 : f32 to vector<16x256xf32>
    %78 = arith.mulf %77, %76 : vector<16x256xf32>
    %cst_34 = arith.constant 0.707106769 : f32
    %79 = vector.broadcast %cst_34 : f32 to vector<16x256xf32>
    %80 = arith.mulf %76, %79 : vector<16x256xf32>
    %81 = math.erf %80 : vector<16x256xf32>
    %cst_35 = arith.constant 1.000000e+00 : f32
    %82 = vector.broadcast %cst_35 : f32 to vector<16x256xf32>
    %83 = arith.addf %82, %81 : vector<16x256xf32>
    %84 = arith.mulf %78, %83 : vector<16x256xf32>
    %85 = arith.truncf %84 : vector<16x256xf32> to vector<16x256xbf16>
    %c0_36 = arith.constant 0 : index
    %c0_37 = arith.constant 0 : index
    %86 = vector.load %arg11[%c0_36, %c0_37] : memref<256x128xbf16, #tpu.memory_space<vmem>>, vector<256x128xbf16>
    %cst_38 = arith.constant dense<0.000000e+00> : vector<16x128xf32>
    %87 = tpu.matmul %85, %86, %cst_38 {dimension_numbers = #tpu.dot_dimension_numbers<[1], [0], [0], [1], [0, 0, 1, 1], [], []>} : vector<16x256xbf16>, vector<256x128xbf16>, vector<16x128xf32> -> vector<16x128xf32>
    %c0_39 = arith.constant 0 : index
    %c0_40 = arith.constant 0 : index
    %88 = vector.load %arg12[%c0_39, %c0_40] : memref<1x128xf32, #tpu.memory_space<vmem>>, vector<1x128xf32>
    %89 = vector.broadcast %88 : vector<1x128xf32> to vector<16x128xf32>
    %90 = arith.addf %87, %89 : vector<16x128xf32>
    %91 = arith.addf %90, %70 : vector<16x128xf32>
    %c0_41 = arith.constant 0 : index
    %c0_42 = arith.constant 0 : index
    %92 = vector.load %arg13[%c0_41, %c0_42] : memref<1x128xf32, #tpu.memory_space<vmem>>, vector<1x128xf32>
    %c0_43 = arith.constant 0 : index
    %c0_44 = arith.constant 0 : index
    %93 = vector.load %arg14[%c0_43, %c0_44] : memref<1x128xf32, #tpu.memory_space<vmem>>, vector<1x128xf32>
    %cst_45 = arith.constant dense<0.000000e+00> : vector<16xf32>
    %94 = vector.multi_reduction <add>, %91, %cst_45 [1] : vector<16x128xf32> to vector<16xf32>
    %95 = vector.shape_cast %94 : vector<16xf32> to vector<16x1xf32>
    %cst_46 = arith.constant 1.280000e+02 : f32
    %96 = vector.broadcast %cst_46 : f32 to vector<16x1xf32>
    %97 = arith.divf %95, %96 : vector<16x1xf32>
    %98 = vector.broadcast %97 : vector<16x1xf32> to vector<16x128xf32>
    %99 = arith.subf %91, %98 : vector<16x128xf32>
    %100 = arith.mulf %99, %99 : vector<16x128xf32>
    %cst_47 = arith.constant dense<0.000000e+00> : vector<16xf32>
    %101 = vector.multi_reduction <add>, %100, %cst_47 [1] : vector<16x128xf32> to vector<16xf32>
    %102 = vector.shape_cast %101 : vector<16xf32> to vector<16x1xf32>
    %cst_48 = arith.constant 1.280000e+02 : f32
    %103 = vector.broadcast %cst_48 : f32 to vector<16x1xf32>
    %104 = arith.divf %102, %103 : vector<16x1xf32>
    %105 = vector.broadcast %97 : vector<16x1xf32> to vector<16x128xf32>
    %106 = arith.subf %91, %105 : vector<16x128xf32>
    %cst_49 = arith.constant 9.99999996E-13 : f32
    %107 = vector.broadcast %cst_49 : f32 to vector<16x1xf32>
    %108 = arith.addf %104, %107 : vector<16x1xf32>
    %109 = math.rsqrt %108 : vector<16x1xf32>
    %110 = vector.broadcast %109 : vector<16x1xf32> to vector<16x128xf32>
    %111 = arith.mulf %106, %110 : vector<16x128xf32>
    %112 = vector.broadcast %92 : vector<1x128xf32> to vector<16x128xf32>
    %113 = arith.mulf %111, %112 : vector<16x128xf32>
    %114 = vector.broadcast %93 : vector<1x128xf32> to vector<16x128xf32>
    %115 = arith.addf %113, %114 : vector<16x128xf32>
    %c0_50 = arith.constant 0 : index
    %c0_51 = arith.constant 0 : index
    %c0_52 = arith.constant 0 : index
    %116 = vector.load %arg15[%c0_50, %c0_51, %c0_52] : memref<1x16x128xf32, #tpu.memory_space<vmem>>, vector<1x16x128xf32>
    %117 = vector.shape_cast %116 : vector<1x16x128xf32> to vector<16x128xf32>
    %118 = vector.shape_cast %115 : vector<16x128xf32> to vector<1x16x128xf32>
    tpu.vector_store %arg15[%c0_50, %c0_51, %c0_52], %118 {strides = array<i32>} : memref<1x16x128xf32, #tpu.memory_space<vmem>>, vector<1x16x128xf32>,
    return
  }
  func.func @transform_0(%arg0: i32) -> (i32, i32, i32) {
    %c0_i32 = arith.constant 0 : i32
    %c0_i32_0 = arith.constant 0 : i32
    %c0_i32_1 = arith.constant 0 : i32
    return %arg0, %c0_i32, %c0_i32_0 : i32, i32, i32
  }
  func.func @transform_1(%arg0: i32) -> (i32, i32, i32) {
    %c0_i32 = arith.constant 0 : i32
    %c0_i32_0 = arith.constant 0 : i32
    %c0_i32_1 = arith.constant 0 : i32
    return %arg0, %c0_i32, %c0_i32_0 : i32, i32, i32
  }
  func.func @transform_2(%arg0: i32) -> (i32, i32) {
    %c0_i32 = arith.constant 0 : i32
    %c0_i32_0 = arith.constant 0 : i32
    %c0_i32_1 = arith.constant 0 : i32
    return %c0_i32, %c0_i32_0 : i32, i32
  }
  func.func @transform_3(%arg0: i32) -> (i32, i32) {
    %c0_i32 = arith.constant 0 : i32
    %c0_i32_0 = arith.constant 0 : i32
    %c0_i32_1 = arith.constant 0 : i32
    return %c0_i32, %c0_i32_0 : i32, i32
  }
  func.func @transform_4(%arg0: i32) -> (i32, i32) {
    %c0_i32 = arith.constant 0 : i32
    %c0_i32_0 = arith.constant 0 : i32
    %c0_i32_1 = arith.constant 0 : i32
    return %c0_i32, %c0_i32_0 : i32, i32
  }
  func.func @transform_5(%arg0: i32) -> (i32, i32) {
    %c0_i32 = arith.constant 0 : i32
    %c0_i32_0 = arith.constant 0 : i32
    %c0_i32_1 = arith.constant 0 : i32
    return %c0_i32, %c0_i32_0 : i32, i32
  }
  func.func @transform_6(%arg0: i32) -> (i32, i32) {
    %c0_i32 = arith.constant 0 : i32
    %c0_i32_0 = arith.constant 0 : i32
    %c0_i32_1 = arith.constant 0 : i32
    return %c0_i32, %c0_i32_0 : i32, i32
  }
  func.func @transform_7(%arg0: i32) -> (i32, i32) {
    %c0_i32 = arith.constant 0 : i32
    %c0_i32_0 = arith.constant 0 : i32
    %c0_i32_1 = arith.constant 0 : i32
    return %c0_i32, %c0_i32_0 : i32, i32
  }
  func.func @transform_8(%arg0: i32) -> (i32, i32) {
    %c0_i32 = arith.constant 0 : i32
    %c0_i32_0 = arith.constant 0 : i32
    %c0_i32_1 = arith.constant 0 : i32
    return %c0_i32, %c0_i32_0 : i32, i32
  }
  func.func @transform_9(%arg0: i32) -> (i32, i32) {
    %c0_i32 = arith.constant 0 : i32
    %c0_i32_0 = arith.constant 0 : i32
    %c0_i32_1 = arith.constant 0 : i32
    return %c0_i32, %c0_i32_0 : i32, i32
  }
  func.func @transform_10(%arg0: i32) -> (i32, i32) {
    %c0_i32 = arith.constant 0 : i32
    %c0_i32_0 = arith.constant 0 : i32
    %c0_i32_1 = arith.constant 0 : i32
    return %c0_i32, %c0_i32_0 : i32, i32
  }
  func.func @transform_11(%arg0: i32) -> (i32, i32) {
    %c0_i32 = arith.constant 0 : i32
    %c0_i32_0 = arith.constant 0 : i32
    %c0_i32_1 = arith.constant 0 : i32
    return %c0_i32, %c0_i32_0 : i32, i32
  }
  func.func @transform_12(%arg0: i32) -> (i32, i32) {
    %c0_i32 = arith.constant 0 : i32
    %c0_i32_0 = arith.constant 0 : i32
    %c0_i32_1 = arith.constant 0 : i32
    return %c0_i32, %c0_i32_0 : i32, i32
  }
  func.func @transform_13(%arg0: i32) -> (i32, i32) {
    %c0_i32 = arith.constant 0 : i32
    %c0_i32_0 = arith.constant 0 : i32
    %c0_i32_1 = arith.constant 0 : i32
    return %c0_i32, %c0_i32_0 : i32, i32
  }
  func.func @transform_14(%arg0: i32) -> (i32, i32, i32) {
    %c0_i32 = arith.constant 0 : i32
    %c0_i32_0 = arith.constant 0 : i32
    %c0_i32_1 = arith.constant 0 : i32
    return %arg0, %c0_i32, %c0_i32_0 : i32, i32, i32
  }
}

</mosaic_0001>

<llo_original>
// kernel: tpu_custom_call.1
$region0: #{tpu_custom_call.1}
  #allocation0 [shape = 'u32[]', space=smem, size = 0x4, offset = 0x4, fixed_abs, tag = 'smem constant byte address 0x4 - core index']
  #allocation1 [shape = 'u32[144,128]{1,0:T(1,128)}', space=vmem, size = 0x12000, scoped, tag = 'internal scratch']
  %s0 = inlined_call_operand.hbm [shape: f32[4,16,128], index: 0, kind: input, shape index: {}]
  %s1 = inlined_call_operand.hbm [shape: f32[4,1,16], index: 1, kind: input, shape index: {}]
  %s2 = inlined_call_operand.hbm [shape: bf16[128,384], index: 2, kind: input, shape index: {}]
  %s3 = inlined_call_operand.vmem [shape: f32[1,384], index: 3, kind: input, shape index: {}]
  %s4 = inlined_call_operand.hbm [shape: bf16[128,128], index: 4, kind: input, shape index: {}]
  %s5 = inlined_call_operand.vmem [shape: f32[1,128], index: 5, kind: input, shape index: {}]
  %s6 = inlined_call_operand.vmem [shape: f32[1,128], index: 6, kind: input, shape index: {}]
  %s7 = inlined_call_operand.vmem [shape: f32[1,128], index: 7, kind: input, shape index: {}]
  %s8 = inlined_call_operand.hbm [shape: bf16[128,256], index: 8, kind: input, shape index: {}]
  %s9 = inlined_call_operand.vmem [shape: f32[1,256], index: 9, kind: input, shape index: {}]
  %s10 = inlined_call_operand.hbm [shape: bf16[256,128], index: 10, kind: input, shape index: {}]
  %s11 = inlined_call_operand.vmem [shape: f32[1,128], index: 11, kind: input, shape index: {}]
  %s12 = inlined_call_operand.vmem [shape: f32[1,128], index: 12, kind: input, shape index: {}]
  %s13 = inlined_call_operand.vmem [shape: f32[1,128], index: 13, kind: input, shape index: {}]
  %s14 = inlined_call_operand.hbm [shape: f32[4,16,128], index: 14, kind: output, shape index: {}]
  %s15 = sld [smem:[#allocation0]]
  $region113: #{tpu_custom_call.1} parent=0
    _
  %s17 = ssub.s32 1, %s15
  %s18 = scalar_select 0, %s17, %s15
  $region1: #{tpu_custom_call.1} parent=0
    #allocation2 [shape = 'u8[16384]{0}', space=vmem, size = 0x4000, scoped, tag = 'input window, operand 0']
    #allocation3 [shape = 's32[2]{0}', space=sflag, size = 0x8, scoped, tag = 'scoped memory for tpu_custom_call.1']
    #allocation4 [shape = 's32[2]{0}', space=sflag, size = 0x8, scoped, tag = 'scoped memory for tpu_custom_call.1']
    #allocation5 [shape = 'u8[1024]{0}', space=vmem, size = 0x400, scoped, tag = 'input window, operand 1']
    #allocation6 [shape = 's32[2]{0}', space=sflag, size = 0x8, scoped, tag = 'scoped memory for tpu_custom_call.1']
    #allocation7 [shape = 'u8[98304]{0}', space=vmem, size = 0x18000, scoped, tag = 'input window, operand 2, single buffered']
    #allocation8 [shape = 'u8[32768]{0}', space=vmem, size = 0x8000, scoped, tag = 'input window, operand 4, single buffered']
    #allocation9 [shape = 's32[1]{0}', space=sflag, size = 0x4, scoped, tag = 'scoped memory for tpu_custom_call.1']
    #allocation10 [shape = 'u8[65536]{0}', space=vmem, size = 0x10000, scoped, tag = 'input window, operand 8, single buffered']
    #allocation11 [shape = 'u8[65536]{0}', space=vmem, size = 0x10000, scoped, tag = 'input window, operand 10, single buffered']
    #allocation12 [shape = 's32[1]{0}', space=sflag, size = 0x4, scoped, tag = 'scoped memory for tpu_custom_call.1']
    #allocation13 [shape = 'u8[16384]{0}', space=vmem, size = 0x4000, scoped, tag = 'output window, operand 0']
    %19 = vsyncpa [#allocation3], 0
    %s20 = scalar_lea.sflag [#allocation3], 1
    %21 = vsyncpa %s20, 0
    %22 = vsyncpa [#allocation6], 0
    %s23 = scalar_lea.sflag [#allocation6], 1
    %24 = vsyncpa %s23, 0
    %25 = vsyncpa [#allocation9], 0
    %26 = vsyncpa [#allocation12], 0
    %27 = vsyncpa [#allocation4], 0
    %s28 = scalar_lea.sflag [#allocation4], 1
    %29 = vsyncpa %s28, 0
    loop: start=0, step=1, limit=6
    $region2: #{tpu_custom_call.1} parent=1 // loop_pre_header
      _
    $region3: #{tpu_custom_call.1} parent=1 // loop_header
      %s31 = sphi 0, %s35
      %p32 = scmp.ge.s32.totalorder %s31, 6
      %s41 = sphi 0, %s43
      %s44 = sphi 0, %s41
      %s45 = sphi 0, %s44
      %s61 = sphi 0, %s45
      %s67 = sphi 0, %s69
      %s70 = sphi 0, %s67
      %s71 = sphi 0, %s70
      %s87 = sphi 0, %s71
      %s91 = sphi 0, %s91
      %s93 = sphi 0, %s91
      %s94 = sphi 0, %s93
      %s108 = sphi 0, %s94
      %s112 = sphi 0, %s112
      %s114 = sphi 0, %s112
      %s115 = sphi 0, %s114
      %s129 = sphi 0, %s115
      %s133 = sphi 0, %s133
      %s135 = sphi 0, %s133
      %s136 = sphi 0, %s135
      %s150 = sphi 0, %s136
      %s154 = sphi 0, %s154
      %s156 = sphi 0, %s154
      %s157 = sphi 0, %s156
      %s171 = sphi 0, %s157
      %s175 = sphi 0, %s175
      %s177 = sphi 0, %s175
      %s178 = sphi 0, %s177
      %s192 = sphi 0, %s178
      %s196 = sphi 0, %s196
      %s198 = sphi 0, %s196
      %s199 = sphi 0, %s198
      %s213 = sphi 0, %s199
      %s217 = sphi 0, %s217
      %s219 = sphi 0, %s217
      %s220 = sphi 0, %s219
      %s234 = sphi 0, %s220
      %s238 = sphi 0, %s238
      %s240 = sphi 0, %s238
      %s241 = sphi 0, %s240
      %s255 = sphi 0, %s241
      %s259 = sphi 0, %s259
      %s261 = sphi 0, %s259
      %s262 = sphi 0, %s261
      %s276 = sphi 0, %s262
      %s280 = sphi 0, %s280
      %s282 = sphi 0, %s280
      %s283 = sphi 0, %s282
      %s297 = sphi 0, %s283
      %s301 = sphi 0, %s301
      %s303 = sphi 0, %s301
      %s304 = sphi 0, %s303
      %s318 = sphi 0, %s304
      %s322 = sphi 0, %s322
      %s324 = sphi 0, %s322
      %s325 = sphi 0, %s324
      %s339 = sphi 0, %s325
      %s345 = sphi 0, %s347
      %s348 = sphi 0, %s345
      %s349 = sphi 0, %s348
      %s365 = sphi 0, %s349
    $region4: #{tpu_custom_call.1} parent=1 // loop_header_branch
      %34 = sbr.rel (%p32) target = $region8
    $region5: #{tpu_custom_call.1} parent=1 // loop_body
      %s36 = ssub.s32 %s31, 1
      %s37 = ssub.s32 %s31, 2
      %s38 = sadd.s32 %s31, 1
      %s39 = ssub.s32 %s31, %s38
      %p40 = scmp.eq.s32.totalorder %s39, 0
      %s42 = sadd.s32 %s41, 1
      %s43 = scalar_select %p40, %s41, %s42
      %p46 = pneg %p40
      %p47 = scmp.eq.s32.totalorder %s31, 3
      %p48 = por %p46, %p47
      %p49 = scmp.ne.s32.totalorder %s41, %s44
      %p50 = scmp.eq.s32.totalorder %s31, 0
      %p51 = por %p49, %p50
      %p52 = scmp.ne.s32.totalorder %s41, %s44
      %p53 = scmp.eq.s32.totalorder %s36, 3
      %p54 = por %p52, %p53
      %p55 = scmp.ne.s32.totalorder %s44, %s45
      %p56 = scmp.eq.s32.totalorder %s36, 0
      %p57 = por %p55, %p56
      %p58 = scmp.ne.s32.totalorder %s44, %s45
      %p59 = scmp.eq.s32.totalorder %s37, 3
      %p60 = por %p58, %p59
      %p62 = scmp.ne.s32.totalorder %s45, %s61
      %p63 = scmp.eq.s32.totalorder %s37, 0
      %p64 = por %p62, %p63
      %s65 = ssub.s32 %s31, %s38
      %p66 = scmp.eq.s32.totalorder %s65, 0
      %s68 = sadd.s32 %s67, 1
      %s69 = scalar_select %p66, %s67, %s68
      %p72 = pneg %p66
      %p73 = scmp.eq.s32.totalorder %s31, 3
      %p74 = por %p72, %p73
      %p75 = scmp.ne.s32.totalorder %s67, %s70
      %p76 = scmp.eq.s32.totalorder %s31, 0
      %p77 = por %p75, %p76
      %p78 = scmp.ne.s32.totalorder %s67, %s70
      %p79 = scmp.eq.s32.totalorder %s36, 3
      %p80 = por %p78, %p79
      %p81 = scmp.ne.s32.totalorder %s70, %s71
      %p82 = scmp.eq.s32.totalorder %s36, 0
      %p83 = por %p81, %p82
      %p84 = scmp.ne.s32.totalorder %s70, %s71
      %p85 = scmp.eq.s32.totalorder %s37, 3
      %p86 = por %p84, %p85
      %p88 = scmp.ne.s32.totalorder %s71, %s87
      %p89 = scmp.eq.s32.totalorder %s37, 0
      %p90 = por %p88, %p89
      %s92 = sadd.s32 %s91, 1
      %p95 = scmp.eq.s32.totalorder %s31, 3
      %p96 = scmp.ne.s32.totalorder %s91, %s93
      %p97 = scmp.eq.s32.totalorder %s31, 0
      %p98 = por %p96, %p97
      %p99 = scmp.ne.s32.totalorder %s91, %s93
      %p100 = scmp.eq.s32.totalorder %s36, 3
      %p101 = por %p99, %p100
      %p102 = scmp.ne.s32.totalorder %s93, %s94
      %p103 = scmp.eq.s32.totalorder %s36, 0
      %p104 = por %p102, %p103
      %p105 = scmp.ne.s32.totalorder %s93, %s94
      %p106 = scmp.eq.s32.totalorder %s37, 3
      %p107 = por %p105, %p106
      %p109 = scmp.ne.s32.totalorder %s94, %s108
      %p110 = scmp.eq.s32.totalorder %s37, 0
      %p111 = por %p109, %p110
      %s113 = sadd.s32 %s112, 1
      %p116 = scmp.eq.s32.totalorder %s31, 3
      %p117 = scmp.ne.s32.totalorder %s112, %s114
      %p118 = scmp.eq.s32.totalorder %s31, 0
      %p119 = por %p117, %p118
      %p120 = scmp.ne.s32.totalorder %s112, %s114
      %p121 = scmp.eq.s32.totalorder %s36, 3
      %p122 = por %p120, %p121
      %p123 = scmp.ne.s32.totalorder %s114, %s115
      %p124 = scmp.eq.s32.totalorder %s36, 0
      %p125 = por %p123, %p124
      %p126 = scmp.ne.s32.totalorder %s114, %s115
      %p127 = scmp.eq.s32.totalorder %s37, 3
      %p128 = por %p126, %p127
      %p130 = scmp.ne.s32.totalorder %s115, %s129
      %p131 = scmp.eq.s32.totalorder %s37, 0
      %p132 = por %p130, %p131
      %s134 = sadd.s32 %s133, 1
      %p137 = scmp.eq.s32.totalorder %s31, 3
      %p138 = scmp.ne.s32.totalorder %s133, %s135
      %p139 = scmp.eq.s32.totalorder %s31, 0
      %p140 = por %p138, %p139
      %p141 = scmp.ne.s32.totalorder %s133, %s135
      %p142 = scmp.eq.s32.totalorder %s36, 3
      %p143 = por %p141, %p142
      %p144 = scmp.ne.s32.totalorder %s135, %s136
      %p145 = scmp.eq.s32.totalorder %s36, 0
      %p146 = por %p144, %p145
      %p147 = scmp.ne.s32.totalorder %s135, %s136
      %p148 = scmp.eq.s32.totalorder %s37, 3
      %p149 = por %p147, %p148
      %p151 = scmp.ne.s32.totalorder %s136, %s150
      %p152 = scmp.eq.s32.totalorder %s37, 0
      %p153 = por %p151, %p152
      %s155 = sadd.s32 %s154, 1
      %p158 = scmp.eq.s32.totalorder %s31, 3
      %p159 = scmp.ne.s32.totalorder %s154, %s156
      %p160 = scmp.eq.s32.totalorder %s31, 0
      %p161 = por %p159, %p160
      %p162 = scmp.ne.s32.totalorder %s154, %s156
      %p163 = scmp.eq.s32.totalorder %s36, 3
      %p164 = por %p162, %p163
      %p165 = scmp.ne.s32.totalorder %s156, %s157
      %p166 = scmp.eq.s32.totalorder %s36, 0
      %p167 = por %p165, %p166
      %p168 = scmp.ne.s32.totalorder %s156, %s157
      %p169 = scmp.eq.s32.totalorder %s37, 3
      %p170 = por %p168, %p169
      %p172 = scmp.ne.s32.totalorder %s157, %s171
      %p173 = scmp.eq.s32.totalorder %s37, 0
      %p174 = por %p172, %p173
      %s176 = sadd.s32 %s175, 1
      %p179 = scmp.eq.s32.totalorder %s31, 3
      %p180 = scmp.ne.s32.totalorder %s175, %s177
      %p181 = scmp.eq.s32.totalorder %s31, 0
      %p182 = por %p180, %p181
      %p183 = scmp.ne.s32.totalorder %s175, %s177
      %p184 = scmp.eq.s32.totalorder %s36, 3
      %p185 = por %p183, %p184
      %p186 = scmp.ne.s32.totalorder %s177, %s178
      %p187 = scmp.eq.s32.totalorder %s36, 0
      %p188 = por %p186, %p187
      %p189 = scmp.ne.s32.totalorder %s177, %s178
      %p190 = scmp.eq.s32.totalorder %s37, 3
      %p191 = por %p189, %p190
      %p193 = scmp.ne.s32.totalorder %s178, %s192
      %p194 = scmp.eq.s32.totalorder %s37, 0
      %p195 = por %p193, %p194
      %s197 = sadd.s32 %s196, 1
      %p200 = scmp.eq.s32.totalorder %s31, 3
      %p201 = scmp.ne.s32.totalorder %s196, %s198
      %p202 = scmp.eq.s32.totalorder %s31, 0
      %p203 = por %p201, %p202
      %p204 = scmp.ne.s32.totalorder %s196, %s198
      %p205 = scmp.eq.s32.totalorder %s36, 3
      %p206 = por %p204, %p205
      %p207 = scmp.ne.s32.totalorder %s198, %s199
      %p208 = scmp.eq.s32.totalorder %s36, 0
      %p209 = por %p207, %p208
      %p210 = scmp.ne.s32.totalorder %s198, %s199
      %p211 = scmp.eq.s32.totalorder %s37, 3
      %p212 = por %p210, %p211
      %p214 = scmp.ne.s32.totalorder %s199, %s213
      %p215 = scmp.eq.s32.totalorder %s37, 0
      %p216 = por %p214, %p215
      %s218 = sadd.s32 %s217, 1
      %p221 = scmp.eq.s32.totalorder %s31, 3
      %p222 = scmp.ne.s32.totalorder %s217, %s219
      %p223 = scmp.eq.s32.totalorder %s31, 0
      %p224 = por %p222, %p223
      %p225 = scmp.ne.s32.totalorder %s217, %s219
      %p226 = scmp.eq.s32.totalorder %s36, 3
      %p227 = por %p225, %p226
      %p228 = scmp.ne.s32.totalorder %s219, %s220
      %p229 = scmp.eq.s32.totalorder %s36, 0
      %p230 = por %p228, %p229
      %p231 = scmp.ne.s32.totalorder %s219, %s220
      %p232 = scmp.eq.s32.totalorder %s37, 3
      %p233 = por %p231, %p232
      %p235 = scmp.ne.s32.totalorder %s220, %s234
      %p236 = scmp.eq.s32.totalorder %s37, 0
      %p237 = por %p235, %p236
      %s239 = sadd.s32 %s238, 1
      %p242 = scmp.eq.s32.totalorder %s31, 3
      %p243 = scmp.ne.s32.totalorder %s238, %s240
      %p244 = scmp.eq.s32.totalorder %s31, 0
      %p245 = por %p243, %p244
      %p246 = scmp.ne.s32.totalorder %s238, %s240
      %p247 = scmp.eq.s32.totalorder %s36, 3
      %p248 = por %p246, %p247
      %p249 = scmp.ne.s32.totalorder %s240, %s241
      %p250 = scmp.eq.s32.totalorder %s36, 0
      %p251 = por %p249, %p250
      %p252 = scmp.ne.s32.totalorder %s240, %s241
      %p253 = scmp.eq.s32.totalorder %s37, 3
      %p254 = por %p252, %p253
      %p256 = scmp.ne.s32.totalorder %s241, %s255
      %p257 = scmp.eq.s32.totalorder %s37, 0
      %p258 = por %p256, %p257
      %s260 = sadd.s32 %s259, 1
      %p263 = scmp.eq.s32.totalorder %s31, 3
      %p264 = scmp.ne.s32.totalorder %s259, %s261
      %p265 = scmp.eq.s32.totalorder %s31, 0
      %p266 = por %p264, %p265
      %p267 = scmp.ne.s32.totalorder %s259, %s261
      %p268 = scmp.eq.s32.totalorder %s36, 3
      %p269 = por %p267, %p268
      %p270 = scmp.ne.s32.totalorder %s261, %s262
      %p271 = scmp.eq.s32.totalorder %s36, 0
      %p272 = por %p270, %p271
      %p273 = scmp.ne.s32.totalorder %s261, %s262
      %p274 = scmp.eq.s32.totalorder %s37, 3
      %p275 = por %p273, %p274
      %p277 = scmp.ne.s32.totalorder %s262, %s276
      %p278 = scmp.eq.s32.totalorder %s37, 0
      %p279 = por %p277, %p278
      %s281 = sadd.s32 %s280, 1
      %p284 = scmp.eq.s32.totalorder %s31, 3
      %p285 = scmp.ne.s32.totalorder %s280, %s282
      %p286 = scmp.eq.s32.totalorder %s31, 0
      %p287 = por %p285, %p286
      %p288 = scmp.ne.s32.totalorder %s280, %s282
      %p289 = scmp.eq.s32.totalorder %s36, 3
      %p290 = por %p288, %p289
      %p291 = scmp.ne.s32.totalorder %s282, %s283
      %p292 = scmp.eq.s32.totalorder %s36, 0
      %p293 = por %p291, %p292
      %p294 = scmp.ne.s32.totalorder %s282, %s283
      %p295 = scmp.eq.s32.totalorder %s37, 3
      %p296 = por %p294, %p295
      %p298 = scmp.ne.s32.totalorder %s283, %s297
      %p299 = scmp.eq.s32.totalorder %s37, 0
      %p300 = por %p298, %p299
      %s302 = sadd.s32 %s301, 1
      %p305 = scmp.eq.s32.totalorder %s31, 3
      %p306 = scmp.ne.s32.totalorder %s301, %s303
      %p307 = scmp.eq.s32.totalorder %s31, 0
      %p308 = por %p306, %p307
      %p309 = scmp.ne.s32.totalorder %s301, %s303
      %p310 = scmp.eq.s32.totalorder %s36, 3
      %p311 = por %p309, %p310
      %p312 = scmp.ne.s32.totalorder %s303, %s304
      %p313 = scmp.eq.s32.totalorder %s36, 0
      %p314 = por %p312, %p313
      %p315 = scmp.ne.s32.totalorder %s303, %s304
      %p316 = scmp.eq.s32.totalorder %s37, 3
      %p317 = por %p315, %p316
      %p319 = scmp.ne.s32.totalorder %s304, %s318
      %p320 = scmp.eq.s32.totalorder %s37, 0
      %p321 = por %p319, %p320
      %s323 = sadd.s32 %s322, 1
      %p326 = scmp.eq.s32.totalorder %s31, 3
      %p327 = scmp.ne.s32.totalorder %s322, %s324
      %p328 = scmp.eq.s32.totalorder %s31, 0
      %p329 = por %p327, %p328
      %p330 = scmp.ne.s32.totalorder %s322, %s324
      %p331 = scmp.eq.s32.totalorder %s36, 3
      %p332 = por %p330, %p331
      %p333 = scmp.ne.s32.totalorder %s324, %s325
      %p334 = scmp.eq.s32.totalorder %s36, 0
      %p335 = por %p333, %p334
      %p336 = scmp.ne.s32.totalorder %s324, %s325
      %p337 = scmp.eq.s32.totalorder %s37, 3
      %p338 = por %p336, %p337
      %p340 = scmp.ne.s32.totalorder %s325, %s339
      %p341 = scmp.eq.s32.totalorder %s37, 0
      %p342 = por %p340, %p341
      %s343 = ssub.s32 %s31, %s38
      %p344 = scmp.eq.s32.totalorder %s343, 0
      %s346 = sadd.s32 %s345, 1
      %s347 = scalar_select %p344, %s345, %s346
      %p350 = pneg %p344
      %p351 = scmp.eq.s32.totalorder %s31, 3
      %p352 = por %p350, %p351
      %p353 = scmp.ne.s32.totalorder %s345, %s348
      %p354 = scmp.eq.s32.totalorder %s31, 0
      %p355 = por %p353, %p354
      %p356 = scmp.ne.s32.totalorder %s345, %s348
      %p357 = scmp.eq.s32.totalorder %s36, 3
      %p358 = por %p356, %p357
      %p359 = scmp.ne.s32.totalorder %s348, %s349
      %p360 = scmp.eq.s32.totalorder %s36, 0
      %p361 = por %p359, %p360
      %p362 = scmp.ne.s32.totalorder %s348, %s349
      %p363 = scmp.eq.s32.totalorder %s37, 3
      %p364 = por %p362, %p363
      %p366 = scmp.ne.s32.totalorder %s349, %s365
      %p367 = scmp.eq.s32.totalorder %s37, 0
      %p368 = por %p366, %p367
      %p369 = scmp.le.s32.totalorder 1, %s31
      %p370 = scmp.lt.s32.totalorder %s31, 5
      %p371 = pnand %p369, %p370
      %p372 = pneg %p371
      // Predicated region
      $region9: #{tpu_custom_call.1} parent=5 // pred_check
        _
      $region10: #{tpu_custom_call.1} parent=5 // pred_check_branch
        %374 = sbr.rel (%p371) target = $region12
      $region11: #{tpu_custom_call.1} parent=5 // pred_region
        %s375 = ssub.s32 %s31, 1
        // Predicated region
        $region13: #{tpu_custom_call.1} parent=11 // pred_check
          %p376 = pneg %p104
        $region14: #{tpu_custom_call.1} parent=11 // pred_check_branch
          %378 = sbr.rel (%p376) target = $region16
        $region15: #{tpu_custom_call.1} parent=11 // pred_region
          %s380 = ssub.s32 3072, 3072
          %381 = vsyncadd [#allocation6], %s380
          %s382 = sshll.u32 [#allocation7], 4
          %s383 = int_to_ptr.vmem [resolvable:$true] %s382
          %388 = dma.hbm_to_vmem [thread:$0]  %s2, 3072, %s383, [#allocation6], 192, 192, 12
        $region16: #{tpu_custom_call.1} parent=11 // pred_fallthru
          _
        // Predicated region
        $region17: #{tpu_custom_call.1} parent=11 // pred_check
          %p389 = pneg %p125
        $region18: #{tpu_custom_call.1} parent=11 // pred_check_branch
          %391 = sbr.rel (%p389) target = $region20
        $region19: #{tpu_custom_call.1} parent=11 // pred_region
          _
        $region20: #{tpu_custom_call.1} parent=11 // pred_fallthru
          _
        // Predicated region
        $region21: #{tpu_custom_call.1} parent=11 // pred_check
          %p392 = pneg %p146
        $region22: #{tpu_custom_call.1} parent=11 // pred_check_branch
          %394 = sbr.rel (%p392) target = $region24
        $region23: #{tpu_custom_call.1} parent=11 // pred_region
          %s396 = ssub.s32 1024, 1024
          %397 = vsyncadd [#allocation9], %s396
          %s398 = sshll.u32 [#allocation8], 4
          %s399 = int_to_ptr.vmem [resolvable:$true] %s398
          %404 = dma.hbm_to_vmem [thread:$0]  %s4, 1024, %s399, [#allocation9], 64, 64, 4
        $region24: #{tpu_custom_call.1} parent=11 // pred_fallthru
          _
        // Predicated region
        $region25: #{tpu_custom_call.1} parent=11 // pred_check
          %p405 = pneg %p167
        $region26: #{tpu_custom_call.1} parent=11 // pred_check_branch
          %407 = sbr.rel (%p405) target = $region28
        $region27: #{tpu_custom_call.1} parent=11 // pred_region
          _
        $region28: #{tpu_custom_call.1} parent=11 // pred_fallthru
          _
        // Predicated region
        $region29: #{tpu_custom_call.1} parent=11 // pred_check
          %p408 = pneg %p188
        $region30: #{tpu_custom_call.1} parent=11 // pred_check_branch
          %410 = sbr.rel (%p408) target = $region32
        $region31: #{tpu_custom_call.1} parent=11 // pred_region
          _
        $region32: #{tpu_custom_call.1} parent=11 // pred_fallthru
          _
        // Predicated region
        $region33: #{tpu_custom_call.1} parent=11 // pred_check
          %p411 = pneg %p209
        $region34: #{tpu_custom_call.1} parent=11 // pred_check_branch
          %413 = sbr.rel (%p411) target = $region36
        $region35: #{tpu_custom_call.1} parent=11 // pred_region
          _
        $region36: #{tpu_custom_call.1} parent=11 // pred_fallthru
          _
        // Predicated region
        $region37: #{tpu_custom_call.1} parent=11 // pred_check
          %p414 = pneg %p230
        $region38: #{tpu_custom_call.1} parent=11 // pred_check_branch
          %416 = sbr.rel (%p414) target = $region40
        $region39: #{tpu_custom_call.1} parent=11 // pred_region
          %s418 = ssub.s32 2048, 2048
          %419 = vsyncadd [#allocation9], %s418
          %s420 = sshll.u32 [#allocation10], 4
          %s421 = int_to_ptr.vmem [resolvable:$true] %s420
          %426 = dma.hbm_to_vmem [thread:$0]  %s8, 2048, %s421, [#allocation9], 128, 128, 8
        $region40: #{tpu_custom_call.1} parent=11 // pred_fallthru
          _
        // Predicated region
        $region41: #{tpu_custom_call.1} parent=11 // pred_check
          %p427 = pneg %p251
        $region42: #{tpu_custom_call.1} parent=11 // pred_check_branch
          %429 = sbr.rel (%p427) target = $region44
        $region43: #{tpu_custom_call.1} parent=11 // pred_region
          _
        $region44: #{tpu_custom_call.1} parent=11 // pred_fallthru
          _
        // Predicated region
        $region45: #{tpu_custom_call.1} parent=11 // pred_check
          %p430 = pneg %p272
        $region46: #{tpu_custom_call.1} parent=11 // pred_check_branch
          %432 = sbr.rel (%p430) target = $region48
        $region47: #{tpu_custom_call.1} parent=11 // pred_region
          %s434 = ssub.s32 2048, 2048
          %435 = vsyncadd [#allocation12], %s434
          %s436 = sshll.u32 [#allocation11], 4
          %s437 = int_to_ptr.vmem [resolvable:$true] %s436
          %442 = dma.hbm_to_vmem [thread:$0]  %s10, 2048, %s437, [#allocation12], 64, 64, 4
        $region48: #{tpu_custom_call.1} parent=11 // pred_fallthru
          _
        // Predicated region
        $region49: #{tpu_custom_call.1} parent=11 // pred_check
          %p443 = pneg %p293
        $region50: #{tpu_custom_call.1} parent=11 // pred_check_branch
          %445 = sbr.rel (%p443) target = $region52
        $region51: #{tpu_custom_call.1} parent=11 // pred_region
          _
        $region52: #{tpu_custom_call.1} parent=11 // pred_fallthru
          _
        // Predicated region
        $region53: #{tpu_custom_call.1} parent=11 // pred_check
          %p446 = pneg %p314
        $region54: #{tpu_custom_call.1} parent=11 // pred_check_branch
          %448 = sbr.rel (%p446) target = $region56
        $region55: #{tpu_custom_call.1} parent=11 // pred_region
          _
        $region56: #{tpu_custom_call.1} parent=11 // pred_fallthru
          _
        // Predicated region
        $region57: #{tpu_custom_call.1} parent=11 // pred_check
          %p449 = pneg %p335
        $region58: #{tpu_custom_call.1} parent=11 // pred_check_branch
          %451 = sbr.rel (%p449) target = $region60
        $region59: #{tpu_custom_call.1} parent=11 // pred_region
          _
        $region60: #{tpu_custom_call.1} parent=11 // pred_fallthru
          _
      $region12: #{tpu_custom_call.1} parent=5 // pred_fallthru
        _
      %p452 = scmp.lt.s32.totalorder %s31, 4
      // Predicated region
      $region61: #{tpu_custom_call.1} parent=5 // pred_check
        %p453 = pneg %p452
      $region62: #{tpu_custom_call.1} parent=5 // pred_check_branch
        %455 = sbr.rel (%p453) target = $region64
      $region63: #{tpu_custom_call.1} parent=5 // pred_region
        // Predicated region
        $region65: #{tpu_custom_call.1} parent=63 // pred_check
          %p456 = pneg %p51
        $region66: #{tpu_custom_call.1} parent=63 // pred_check_branch
          %458 = sbr.rel (%p456) target = $region68
        $region67: #{tpu_custom_call.1} parent=63 // pred_region
          %s459 = sand.u32 %s41, 1
          %s460 = scalar_lea.sflag [#allocation3], %s459
          %s461 = sand.u32 %s41, 1
          %s462 = smul.addr %s461, 16
          %s463 = scalar_lea.vmem [#allocation2], %s462
          %s465 = ssub.s32 256, 256
          %466 = vsyncadd %s460, %s465
          %s467 = smul.addr %s31, 2
          %s468 = smul.addr %s467, 128
          %s469 = scalar_lea.hbm %s0, %s468
          %s470 = sshll.u32 %s463, 4
          %s471 = int_to_ptr.vmem [resolvable:$true] %s470
          %476 = dma.hbm_to_vmem [thread:$0]  %s469, 256, %s471, %s460, 128, 128, 8
        $region68: #{tpu_custom_call.1} parent=63 // pred_fallthru
          _
        // Predicated region
        $region69: #{tpu_custom_call.1} parent=63 // pred_check
          %p477 = pneg %p77
        $region70: #{tpu_custom_call.1} parent=63 // pred_check_branch
          %479 = sbr.rel (%p477) target = $region72
        $region71: #{tpu_custom_call.1} parent=63 // pred_region
          %s480 = sand.u32 %s31, 1
          %s481 = scalar_lea.sflag [#allocation6], %s480
          %s482 = sand.u32 %s67, 1
          %s483 = scalar_lea.vmem [#allocation5], %s482
          %s485 = ssub.s32 16, 16
          %486 = vsyncadd %s481, %s485
          %s487 = smul.addr %s31, 16
          %s488 = scalar_lea.hbm %s1, %s487
          %s490 = sshll.u32 %s483, 4
          %s491 = int_to_ptr.vmem [resolvable:$true] %s490
          %493 = dma.hbm_to_vmem [thread:$0]  %s488, 16, %s491, %s481
        $region72: #{tpu_custom_call.1} parent=63 // pred_fallthru
          _
      $region64: #{tpu_custom_call.1} parent=5 // pred_fallthru
        _
      %p494 = scmp.le.s32.totalorder 1, %s31
      %p495 = scmp.lt.s32.totalorder %s31, 5
      %p496 = pnand %p494, %p495
      %p497 = pneg %p496
      // Predicated region
      $region73: #{tpu_custom_call.1} parent=5 // pred_check
        _
      $region74: #{tpu_custom_call.1} parent=5 // pred_check_branch
        %499 = sbr.rel (%p496) target = $region76
      $region75: #{tpu_custom_call.1} parent=5 // pred_region
        %s500 = ssub.s32 %s31, 1
        %s501 = sand.u32 %s44, 1
        %s502 = scalar_lea.sflag [#allocation3], %s501
        %s503 = sand.u32 %s44, 1
        %s504 = smul.addr %s503, 16
        %s505 = scalar_lea.vmem [#allocation2], %s504
        // Predicated region
        $region77: #{tpu_custom_call.1} parent=75 // pred_check
          %p506 = pneg %p57
        $region78: #{tpu_custom_call.1} parent=75 // pred_check_branch
          %508 = sbr.rel (%p506) target = $region80
        $region79: #{tpu_custom_call.1} parent=75 // pred_region
          %509 = dma.done %s502, 256
        $region80: #{tpu_custom_call.1} parent=75 // pred_fallthru
          _
        %s510 = sand.u32 %s36, 1
        %s511 = scalar_lea.sflag [#allocation6], %s510
        %s512 = sand.u32 %s70, 1
        %s513 = scalar_lea.vmem [#allocation5], %s512
        // Predicated region
        $region81: #{tpu_custom_call.1} parent=75 // pred_check
          %p514 = pneg %p83
        $region82: #{tpu_custom_call.1} parent=75 // pred_check_branch
          %516 = sbr.rel (%p514) target = $region84
        $region83: #{tpu_custom_call.1} parent=75 // pred_region
          %517 = dma.done %s511, 16
        $region84: #{tpu_custom_call.1} parent=75 // pred_fallthru
          _
        // Predicated region
        $region85: #{tpu_custom_call.1} parent=75 // pred_check
          %p518 = pneg %p104
        $region86: #{tpu_custom_call.1} parent=75 // pred_check_branch
          %520 = sbr.rel (%p518) target = $region88
        $region87: #{tpu_custom_call.1} parent=75 // pred_region
          %521 = dma.done [#allocation6], 3072
        $region88: #{tpu_custom_call.1} parent=75 // pred_fallthru
          _
        // Predicated region
        $region89: #{tpu_custom_call.1} parent=75 // pred_check
          %p522 = pneg %p146
        $region90: #{tpu_custom_call.1} parent=75 // pred_check_branch
          %524 = sbr.rel (%p522) target = $region92
        $region91: #{tpu_custom_call.1} parent=75 // pred_region
          %525 = dma.done [#allocation9], 1024
        $region92: #{tpu_custom_call.1} parent=75 // pred_fallthru
          _
        // Predicated region
        $region93: #{tpu_custom_call.1} parent=75 // pred_check
          %p526 = pneg %p230
        $region94: #{tpu_custom_call.1} parent=75 // pred_check_branch
          %528 = sbr.rel (%p526) target = $region96
        $region95: #{tpu_custom_call.1} parent=75 // pred_region
          %529 = dma.done [#allocation9], 2048
        $region96: #{tpu_custom_call.1} parent=75 // pred_fallthru
          _
        // Predicated region
        $region97: #{tpu_custom_call.1} parent=75 // pred_check
          %p530 = pneg %p272
        $region98: #{tpu_custom_call.1} parent=75 // pred_check_branch
          %532 = sbr.rel (%p530) target = $region100
        $region99: #{tpu_custom_call.1} parent=75 // pred_region
          %533 = dma.done [#allocation12], 2048
        $region100: #{tpu_custom_call.1} parent=75 // pred_fallthru
          _
        %s534 = sand.u32 %s44, 1
        %s535 = scalar_lea.sflag [#allocation3], %s534
        %s536 = sand.u32 %s44, 1
        %s537 = smul.addr %s536, 16
        %s538 = scalar_lea.vmem [#allocation2], %s537
        %p539 = pneg %p57
        %p540 = pneg %p54
        %s541 = sand.u32 %s36, 1
        %s542 = scalar_lea.sflag [#allocation6], %s541
        %s543 = sand.u32 %s70, 1
        %s544 = scalar_lea.vmem [#allocation5], %s543
        %p545 = pneg %p83
        %p546 = pneg %p80
        %p547 = pneg %p104
        %p548 = pneg %p101
        %p549 = pneg %p125
        %p550 = pneg %p122
        %p551 = pneg %p146
        %p552 = pneg %p143
        %p553 = pneg %p167
        %p554 = pneg %p164
        %p555 = pneg %p188
        %p556 = pneg %p185
        %p557 = pneg %p209
        %p558 = pneg %p206
        %p559 = pneg %p230
        %p560 = pneg %p227
        %p561 = pneg %p251
        %p562 = pneg %p248
        %p563 = pneg %p272
        %p564 = pneg %p269
        %p565 = pneg %p293
        %p566 = pneg %p290
        %p567 = pneg %p314
        %p568 = pneg %p311
        %p569 = pneg %p335
        %p570 = pneg %p332
        %p571 = pneg %p361
        %p572 = pneg %p358
        %s573 = sand.u32 %s348, 1
        %s574 = scalar_lea.sflag [#allocation4], %s573
        %s575 = sand.u32 %s348, 1
        %s576 = smul.addr %s575, 16
        %s577 = scalar_lea.vmem [#allocation13], %s576
        %v579 = vld [vmem:[%s505] sm:$0xff]
        %v580 = vld [vmem:[%s505 + $0x8] sm:$0xff]
        %v581 = vld [vmem:[%s513] sm:$0x1]
        %v582 = vpack.c.bf16 %v580, %v579
        %v583 = vld [vmem:[#allocation7] sm:$0xff]
        %v584 = vld [vmem:[#allocation7 + $0x8] sm:$0xf]
        %v585 = vld [vmem:[#allocation7 + $0xc] sm:$0xff]
        %v586 = vld [vmem:[#allocation7 + $0x14] sm:$0xf]
        %v587 = vld [vmem:[#allocation7 + $0x18] sm:$0xff]
        %v588 = vld [vmem:[#allocation7 + $0x20] sm:$0xf]
        %v589 = vld [vmem:[#allocation7 + $0x24] sm:$0xff]
        %v590 = vld [vmem:[#allocation7 + $0x2c] sm:$0xf]
        %v591 = vld [vmem:[#allocation7 + $0x30] sm:$0xff]
        %v592 = vld [vmem:[#allocation7 + $0x38] sm:$0xf]
        %v593 = vld [vmem:[#allocation7 + $0x3c] sm:$0xff]
        %v594 = vld [vmem:[#allocation7 + $0x44] sm:$0xf]
        %v595 = vld [vmem:[#allocation7 + $0x48] sm:$0xff]
        %v596 = vld [vmem:[#allocation7 + $0x50] sm:$0xf]
        %v597 = vld [vmem:[#allocation7 + $0x54] sm:$0xff]
        %v598 = vld [vmem:[#allocation7 + $0x5c] sm:$0xf]
        %v599 = vld [vmem:[#allocation7 + $0x60] sm:$0xff]
        %v600 = vld [vmem:[#allocation7 + $0x68] sm:$0xf]
        %v601 = vld [vmem:[#allocation7 + $0x6c] sm:$0xff]
        %v602 = vld [vmem:[#allocation7 + $0x74] sm:$0xf]
        %v603 = vld [vmem:[#allocation7 + $0x78] sm:$0xff]
        %v604 = vld [vmem:[#allocation7 + $0x80] sm:$0xf]
        %v605 = vld [vmem:[#allocation7 + $0x84] sm:$0xff]
        %v606 = vld [vmem:[#allocation7 + $0x8c] sm:$0xf]
        %v607 = vld [vmem:[#allocation7 + $0x90] sm:$0xff]
        %v608 = vld [vmem:[#allocation7 + $0x98] sm:$0xf]
        %v609 = vld [vmem:[#allocation7 + $0x9c] sm:$0xff]
        %v610 = vld [vmem:[#allocation7 + $0xa4] sm:$0xf]
        %v611 = vld [vmem:[#allocation7 + $0xa8] sm:$0xff]
        %v612 = vld [vmem:[#allocation7 + $0xb0] sm:$0xf]
        %v613 = vld [vmem:[#allocation7 + $0xb4] sm:$0xff]
        %v614 = vld [vmem:[#allocation7 + $0xbc] sm:$0xf]
        %v615 = vld [vmem:[%s3] sm:$0x7]
        %v617 = vlaneseq
        %v618 = vshrl.u32 %v617, 7
        %v619 = vsub.s32 0, %v618
        %v620 = vrot.slane %v615, %v619
        %v621 = vlaneseq
        %v622 = vshrl.u32 %v621, 7
        %v623 = vsub.s32 1, %v622
        %v624 = vrot.slane %v615, %v623
        %v625 = vlaneseq
        %v626 = vshrl.u32 %v625, 7
        %v627 = vsub.s32 2, %v626
        %v628 = vrot.slane %v615, %v627
        %v664 = vunpack.c.l.b16 %v583
        %v665 = vunpack.c.h.b16 %v583
        %v666 = vunpack.c.l.b16 %v584
        %v667 = vunpack.c.l.b16 %v585
        %v668 = vunpack.c.h.b16 %v585
        %v669 = vunpack.c.l.b16 %v586
        %v670 = vunpack.c.l.b16 %v587
        %v671 = vunpack.c.h.b16 %v587
        %v672 = vunpack.c.l.b16 %v588
        %v673 = vunpack.c.l.b16 %v589
        %v674 = vunpack.c.h.b16 %v589
        %v675 = vunpack.c.l.b16 %v590
        %v676 = vunpack.c.l.b16 %v591
        %v677 = vunpack.c.h.b16 %v591
        %v678 = vunpack.c.l.b16 %v592
        %v679 = vunpack.c.l.b16 %v593
        %v680 = vunpack.c.h.b16 %v593
        %v681 = vunpack.c.l.b16 %v594
        %v682 = vunpack.c.l.b16 %v595
        %v683 = vunpack.c.h.b16 %v595
        %v684 = vunpack.c.l.b16 %v596
        %v685 = vunpack.c.l.b16 %v597
        %v686 = vunpack.c.h.b16 %v597
        %v687 = vunpack.c.l.b16 %v598
        %v688 = vunpack.c.l.b16 %v599
        %v689 = vunpack.c.h.b16 %v599
        %v690 = vunpack.c.l.b16 %v600
        %v691 = vunpack.c.l.b16 %v601
        %v692 = vunpack.c.h.b16 %v601
        %v693 = vunpack.c.l.b16 %v602
        %v694 = vunpack.c.l.b16 %v603
        %v695 = vunpack.c.h.b16 %v603
        %v696 = vunpack.c.l.b16 %v604
        %v697 = vunpack.c.l.b16 %v605
        %v698 = vunpack.c.h.b16 %v605
        %v699 = vunpack.c.l.b16 %v606
        %v700 = vunpack.c.l.b16 %v607
        %v701 = vunpack.c.h.b16 %v607
        %v702 = vunpack.c.l.b16 %v608
        %v703 = vunpack.c.l.b16 %v609
        %v704 = vunpack.c.h.b16 %v609
        %v705 = vunpack.c.l.b16 %v610
        %v706 = vunpack.c.l.b16 %v611
        %v707 = vunpack.c.h.b16 %v611
        %v708 = vunpack.c.l.b16 %v612
        %v709 = vunpack.c.l.b16 %v613
        %v710 = vunpack.c.h.b16 %v613
        %v711 = vunpack.c.l.b16 %v614
        %v712 = vpack.c.b16 %v667, %v664
        %v713 = vpack.c.b16 %v668, %v665
        %v714 = vpack.c.b16 %v669, %v666
        %v715 = vpack.c.b16 %v673, %v670
        %v716 = vpack.c.b16 %v674, %v671
        %v717 = vpack.c.b16 %v675, %v672
        %v718 = vpack.c.b16 %v679, %v676
        %v719 = vpack.c.b16 %v680, %v677
        %v720 = vpack.c.b16 %v681, %v678
        %v721 = vpack.c.b16 %v685, %v682
        %v722 = vpack.c.b16 %v686, %v683
        %v723 = vpack.c.b16 %v687, %v684
        %v724 = vpack.c.b16 %v691, %v688
        %v725 = vpack.c.b16 %v692, %v689
        %v726 = vpack.c.b16 %v693, %v690
        %v727 = vpack.c.b16 %v697, %v694
        %v728 = vpack.c.b16 %v698, %v695
        %v729 = vpack.c.b16 %v699, %v696
        %v730 = vpack.c.b16 %v703, %v700
        %v731 = vpack.c.b16 %v704, %v701
        %v732 = vpack.c.b16 %v705, %v702
        %v733 = vpack.c.b16 %v709, %v706
        %v734 = vpack.c.b16 %v710, %v707
        %v735 = vpack.c.b16 %v711, %v708
        %760 = vmatprep.subr.bf16.mxu0 %v734
        %761 = vmatpush1.bf16.msra.mxu0 %v733
        %762 = vmatprep.subr.bf16.mxu0 %v731
        %763 = vmatpush1.bf16.msra.mxu0 %v730
        %764 = vmatprep.subr.bf16.mxu0 %v728
        %765 = vmatpush1.bf16.msra.mxu0 %v727
        %766 = vmatprep.subr.bf16.mxu0 %v725
        %767 = vmatpush1.bf16.msra.mxu0 %v724
        %768 = vmatprep.subr.bf16.mxu0 %v722
        %769 = vmatpush1.bf16.msra.mxu0 %v721
        %770 = vmatprep.subr.bf16.mxu0 %v719
        %771 = vmatpush1.bf16.msra.mxu0 %v718
        %772 = vmatprep.subr.bf16.mxu0 %v716
        %773 = vmatpush1.bf16.msra.mxu0 %v715
        %774 = vmatprep.subr.bf16.mxu0 %v713
        %775 = vmatpush1.bf16.msra.mxu0 %v712
        %776 = vmatprep.subr.bf16.mxu0 0
        %777 = vmatpush2.bf16.msra.mxu0 0
        %778 = vmatprep.subr.bf16.mxu0 0
        %779 = vmatpush2.bf16.msra.mxu0 0
        %780 = vmatprep.subr.bf16.mxu0 0
        %781 = vmatpush2.bf16.msra.mxu0 0
        %782 = vmatprep.subr.bf16.mxu0 0
        %783 = vmatpush2.bf16.msra.mxu0 0
        %784 = vmatprep.subr.bf16.mxu0 0
        %785 = vmatpush2.bf16.msra.mxu0 0
        %786 = vmatprep.subr.bf16.mxu0 0
        %787 = vmatpush2.bf16.msra.mxu0 0
        %788 = vmatprep.subr.bf16.mxu0 0
        %789 = vmatpush2.bf16.msra.mxu0 0
        %790 = vmatprep.subr.bf16.mxu0 0
        %791 = vmatpush2.bf16.msra.mxu0 0
        %792 = vmatprep.mubr.bf16.mxu0 0
        %793 = vmatmul.mubr.bf16.gmra.mxu0 %v582
        %v794 = vpop.f32.mrf.mxu0
        %v795 = vadd.f32 %v620, %v794
        %v796 = vpop.f32.mrf.mxu0
        %v797 = vadd.f32 %v624, %v796
        %v798 = vpop.f32.mrf.mxu0
        %v799 = vadd.f32 %v620, %v798
        %v800 = vpop.f32.mrf.mxu0
        %v801 = vadd.f32 %v624, %v800
        %802 = vdwg.mxu0
        %803 = vmatprep.subr.bf16.mxu0 0
        %804 = vmatpush1.bf16.msra.mxu0 %v735
        %805 = vmatprep.subr.bf16.mxu0 0
        %806 = vmatpush1.bf16.msra.mxu0 %v732
        %807 = vmatprep.subr.bf16.mxu0 0
        %808 = vmatpush1.bf16.msra.mxu0 %v729
        %809 = vmatprep.subr.bf16.mxu0 0
        %810 = vmatpush1.bf16.msra.mxu0 %v726
        %811 = vmatprep.subr.bf16.mxu0 0
        %812 = vmatpush1.bf16.msra.mxu0 %v723
        %813 = vmatprep.subr.bf16.mxu0 0
        %814 = vmatpush1.bf16.msra.mxu0 %v720
        %815 = vmatprep.subr.bf16.mxu0 0
        %816 = vmatpush1.bf16.msra.mxu0 %v717
        %817 = vmatprep.subr.bf16.mxu0 0
        %818 = vmatpush1.bf16.msra.mxu0 %v714
        %819 = vmatprep.subr.bf16.mxu0 0
        %820 = vmatpush2.bf16.msra.mxu0 0
        %821 = vmatprep.subr.bf16.mxu0 0
        %822 = vmatpush2.bf16.msra.mxu0 0
        %823 = vmatprep.subr.bf16.mxu0 0
        %824 = vmatpush2.bf16.msra.mxu0 0
        %825 = vmatprep.subr.bf16.mxu0 0
        %826 = vmatpush2.bf16.msra.mxu0 0
        %827 = vmatprep.subr.bf16.mxu0 0
        %828 = vmatpush2.bf16.msra.mxu0 0
        %829 = vmatprep.subr.bf16.mxu0 0
        %830 = vmatpush2.bf16.msra.mxu0 0
        %831 = vmatprep.subr.bf16.mxu0 0
        %832 = vmatpush2.bf16.msra.mxu0 0
        %833 = vmatprep.subr.bf16.mxu0 0
        %834 = vmatpush2.bf16.msra.mxu0 0
        %835 = vmatprep.mubr.bf16.mxu0 0
        %836 = vmatmul.mubr.bf16.gmra.mxu0 %v582
        %v837 = vpop.f32.mrf.mxu0
        %v838 = vadd.f32 %v628, %v837
        %v839 = vpop.f32.mrf.mxu0
        %v840 = vpop.f32.mrf.mxu0
        %v841 = vadd.f32 %v628, %v840
        %v842 = vpop.f32.mrf.mxu0
        %843 = vdwg.mxu0
        %846 = vrot.lane.b32.xlu0 %v795, 96
        %v847 = vpop.permute.xlu0 %846
        %848 = vrot.lane.b32.xlu0 %v799, 96
        %v849 = vpop.permute.xlu0 %848
        %852 = vrot.lane.b32.xlu0 %v795, 64
        %v853 = vpop.permute.xlu0 %852
        %854 = vrot.lane.b32.xlu0 %v799, 64
        %v855 = vpop.permute.xlu0 %854
        %858 = vrot.lane.b32.xlu0 %v795, 32
        %v859 = vpop.permute.xlu0 %858
        %860 = vrot.lane.b32.xlu0 %v799, 32
        %v861 = vpop.permute.xlu0 %860
        %v864 = vcombine.low %v795, %v853
        %v865 = vcombine.high %v795, %v853
        %v867 = vunpack.c.l.s4 1983009808
        %v868 = vunpack.c.0.s8 %v867
        %v869 = vlaneseq
        %v870 = vshrl.u32 %v869, 7
        %v871 = vsub.s32 %v868, %v870
        %v872 = vrot.slane %v864, %v871
        %v874 = vunpack.c.l.s4 1983009808
        %v875 = vunpack.c.0.s8 %v874
        %v876 = vlaneseq
        %v877 = vshrl.u32 %v876, 7
        %v878 = vsub.s32 %v875, %v877
        %v879 = vrot.slane %v865, %v878
        %v880 = vcombine.low %v847, %v859
        %v881 = vcombine.high %v847, %v859
        %v883 = vunpack.c.l.s4 1983009808
        %v884 = vunpack.c.0.s8 %v883
        %v885 = vlaneseq
        %v886 = vshrl.u32 %v885, 7
        %v887 = vsub.s32 %v884, %v886
        %v888 = vrot.slane %v880, %v887
        %v890 = vunpack.c.l.s4 1983009808
        %v891 = vunpack.c.0.s8 %v890
        %v892 = vlaneseq
        %v893 = vshrl.u32 %v892, 7
        %v894 = vsub.s32 %v891, %v893
        %v895 = vrot.slane %v881, %v894
        %v896 = vcombine.low %v872, %v888
        %v897 = vcombine.high %v872, %v888
        %v899 = vunpack.c.l.s4 1934713408
        %v900 = vunpack.c.0.s8 %v899
        %v901 = vlaneseq
        %v902 = vshrl.u32 %v901, 7
        %v903 = vsub.s32 %v900, %v902
        %v904 = vrot.slane %v896, %v903
        %v906 = vunpack.c.l.s4 1934713408
        %v907 = vunpack.c.0.s8 %v906
        %v908 = vlaneseq
        %v909 = vshrl.u32 %v908, 7
        %v910 = vsub.s32 %v907, %v909
        %v911 = vrot.slane %v897, %v910
        %v912 = vcombine.low %v879, %v895
        %v913 = vcombine.high %v879, %v895
        %v915 = vunpack.c.l.s4 1934713408
        %v916 = vunpack.c.0.s8 %v915
        %v917 = vlaneseq
        %v918 = vshrl.u32 %v917, 7
        %v919 = vsub.s32 %v916, %v918
        %v920 = vrot.slane %v912, %v919
        %v922 = vunpack.c.l.s4 1934713408
        %v923 = vunpack.c.0.s8 %v922
        %v924 = vlaneseq
        %v925 = vshrl.u32 %v924, 7
        %v926 = vsub.s32 %v923, %v925
        %v927 = vrot.slane %v913, %v926
        %v928 = vcombine.high %v904, 0.0
        %v929 = vcombine.high %v911, 0.0
        %v930 = vcombine.high %v920, 0.0
        %v931 = vcombine.high %v927, 0.0
        %v932 = vcombine.low %v799, %v855
        %v933 = vcombine.high %v799, %v855
        %v935 = vunpack.c.l.s4 1983009808
        %v936 = vunpack.c.0.s8 %v935
        %v937 = vlaneseq
        %v938 = vshrl.u32 %v937, 7
        %v939 = vsub.s32 %v936, %v938
        %v940 = vrot.slane %v932, %v939
        %v942 = vunpack.c.l.s4 1983009808
        %v943 = vunpack.c.0.s8 %v942
        %v944 = vlaneseq
        %v945 = vshrl.u32 %v944, 7
        %v946 = vsub.s32 %v943, %v945
        %v947 = vrot.slane %v933, %v946
        %v948 = vcombine.low %v849, %v861
        %v949 = vcombine.high %v849, %v861
        %v951 = vunpack.c.l.s4 1983009808
        %v952 = vunpack.c.0.s8 %v951
        %v953 = vlaneseq
        %v954 = vshrl.u32 %v953, 7
        %v955 = vsub.s32 %v952, %v954
        %v956 = vrot.slane %v948, %v955
        %v958 = vunpack.c.l.s4 1983009808
        %v959 = vunpack.c.0.s8 %v958
        %v960 = vlaneseq
        %v961 = vshrl.u32 %v960, 7
        %v962 = vsub.s32 %v959, %v961
        %v963 = vrot.slane %v949, %v962
        %v964 = vcombine.low %v940, %v956
        %v965 = vcombine.high %v940, %v956
        %v967 = vunpack.c.l.s4 1934713408
        %v968 = vunpack.c.0.s8 %v967
        %v969 = vlaneseq
        %v970 = vshrl.u32 %v969, 7
        %v971 = vsub.s32 %v968, %v970
        %v972 = vrot.slane %v964, %v971
        %v974 = vunpack.c.l.s4 1934713408
        %v975 = vunpack.c.0.s8 %v974
        %v976 = vlaneseq
        %v977 = vshrl.u32 %v976, 7
        %v978 = vsub.s32 %v975, %v977
        %v979 = vrot.slane %v965, %v978
        %v980 = vcombine.low %v947, %v963
        %v981 = vcombine.high %v947, %v963
        %v983 = vunpack.c.l.s4 1934713408
        %v984 = vunpack.c.0.s8 %v983
        %v985 = vlaneseq
        %v986 = vshrl.u32 %v985, 7
        %v987 = vsub.s32 %v984, %v986
        %v988 = vrot.slane %v980, %v987
        %v990 = vunpack.c.l.s4 1934713408
        %v991 = vunpack.c.0.s8 %v990
        %v992 = vlaneseq
        %v993 = vshrl.u32 %v992, 7
        %v994 = vsub.s32 %v991, %v993
        %v995 = vrot.slane %v981, %v994
        %v996 = vcombine.high %v972, 0.0
        %v997 = vcombine.high %v979, 0.0
        %v998 = vcombine.high %v988, 0.0
        %v999 = vcombine.high %v995, 0.0
        %v1000 = vcombine.low %v904, %v911
        %v1002 = vunpack.c.l.s4 1983009808
        %v1003 = vunpack.c.0.s8 %v1002
        %v1004 = vlaneseq
        %v1005 = vshrl.u32 %v1004, 7
        %v1006 = vsub.s32 %v1003, %v1005
        %v1007 = vrot.slane %v1000, %v1006
        %v1008 = vcombine.low %v928, %v929
        %v1010 = vunpack.c.l.s4 1983009808
        %v1011 = vunpack.c.0.s8 %v1010
        %v1012 = vlaneseq
        %v1013 = vshrl.u32 %v1012, 7
        %v1014 = vsub.s32 %v1011, %v1013
        %v1015 = vrot.slane %v1008, %v1014
        %v1016 = vcombine.low %v920, %v927
        %v1018 = vunpack.c.l.s4 1983009808
        %v1019 = vunpack.c.0.s8 %v1018
        %v1020 = vlaneseq
        %v1021 = vshrl.u32 %v1020, 7
        %v1022 = vsub.s32 %v1019, %v1021
        %v1023 = vrot.slane %v1016, %v1022
        %v1024 = vcombine.low %v930, %v931
        %v1026 = vunpack.c.l.s4 1983009808
        %v1027 = vunpack.c.0.s8 %v1026
        %v1028 = vlaneseq
        %v1029 = vshrl.u32 %v1028, 7
        %v1030 = vsub.s32 %v1027, %v1029
        %v1031 = vrot.slane %v1024, %v1030
        %v1032 = vcombine.low %v1007, %v1015
        %v1033 = vcombine.high %v1007, %v1015
        %v1035 = vunpack.c.l.s4 1934713408
        %v1036 = vunpack.c.0.s8 %v1035
        %v1037 = vlaneseq
        %v1038 = vshrl.u32 %v1037, 7
        %v1039 = vsub.s32 %v1036, %v1038
        %v1040 = vrot.slane %v1032, %v1039
        %v1042 = vunpack.c.l.s4 1934713408
        %v1043 = vunpack.c.0.s8 %v1042
        %v1044 = vlaneseq
        %v1045 = vshrl.u32 %v1044, 7
        %v1046 = vsub.s32 %v1043, %v1045
        %v1047 = vrot.slane %v1033, %v1046
        %v1048 = vcombine.low %v1023, %v1031
        %v1049 = vcombine.high %v1023, %v1031
        %v1051 = vunpack.c.l.s4 1934713408
        %v1052 = vunpack.c.0.s8 %v1051
        %v1053 = vlaneseq
        %v1054 = vshrl.u32 %v1053, 7
        %v1055 = vsub.s32 %v1052, %v1054
        %v1056 = vrot.slane %v1048, %v1055
        %v1058 = vunpack.c.l.s4 1934713408
        %v1059 = vunpack.c.0.s8 %v1058
        %v1060 = vlaneseq
        %v1061 = vshrl.u32 %v1060, 7
        %v1062 = vsub.s32 %v1059, %v1061
        %v1063 = vrot.slane %v1049, %v1062
        %v1064 = vcombine.low %v1040, %v1056
        %v1065 = vcombine.high %v1040, %v1056
        %v1066 = vcombine.low %v1047, %v1063
        %v1067 = vcombine.high %v1047, %v1063
        %v1068 = vcombine.low %v972, %v979
        %v1070 = vunpack.c.l.s4 1983009808
        %v1071 = vunpack.c.0.s8 %v1070
        %v1072 = vlaneseq
        %v1073 = vshrl.u32 %v1072, 7
        %v1074 = vsub.s32 %v1071, %v1073
        %v1075 = vrot.slane %v1068, %v1074
        %v1076 = vcombine.low %v996, %v997
        %v1078 = vunpack.c.l.s4 1983009808
        %v1079 = vunpack.c.0.s8 %v1078
        %v1080 = vlaneseq
        %v1081 = vshrl.u32 %v1080, 7
        %v1082 = vsub.s32 %v1079, %v1081
        %v1083 = vrot.slane %v1076, %v1082
        %v1084 = vcombine.low %v988, %v995
        %v1086 = vunpack.c.l.s4 1983009808
        %v1087 = vunpack.c.0.s8 %v1086
        %v1088 = vlaneseq
        %v1089 = vshrl.u32 %v1088, 7
        %v1090 = vsub.s32 %v1087, %v1089
        %v1091 = vrot.slane %v1084, %v1090
        %v1092 = vcombine.low %v998, %v999
        %v1094 = vunpack.c.l.s4 1983009808
        %v1095 = vunpack.c.0.s8 %v1094
        %v1096 = vlaneseq
        %v1097 = vshrl.u32 %v1096, 7
        %v1098 = vsub.s32 %v1095, %v1097
        %v1099 = vrot.slane %v1092, %v1098
        %v1100 = vcombine.low %v1075, %v1083
        %v1101 = vcombine.high %v1075, %v1083
        %v1103 = vunpack.c.l.s4 1934713408
        %v1104 = vunpack.c.0.s8 %v1103
        %v1105 = vlaneseq
        %v1106 = vshrl.u32 %v1105, 7
        %v1107 = vsub.s32 %v1104, %v1106
        %v1108 = vrot.slane %v1100, %v1107
        %v1110 = vunpack.c.l.s4 1934713408
        %v1111 = vunpack.c.0.s8 %v1110
        %v1112 = vlaneseq
        %v1113 = vshrl.u32 %v1112, 7
        %v1114 = vsub.s32 %v1111, %v1113
        %v1115 = vrot.slane %v1101, %v1114
        %v1116 = vcombine.low %v1091, %v1099
        %v1117 = vcombine.high %v1091, %v1099
        %v1119 = vunpack.c.l.s4 1934713408
        %v1120 = vunpack.c.0.s8 %v1119
        %v1121 = vlaneseq
        %v1122 = vshrl.u32 %v1121, 7
        %v1123 = vsub.s32 %v1120, %v1122
        %v1124 = vrot.slane %v1116, %v1123
        %v1126 = vunpack.c.l.s4 1934713408
        %v1127 = vunpack.c.0.s8 %v1126
        %v1128 = vlaneseq
        %v1129 = vshrl.u32 %v1128, 7
        %v1130 = vsub.s32 %v1127, %v1129
        %v1131 = vrot.slane %v1117, %v1130
        %v1132 = vcombine.low %v1108, %v1124
        %v1133 = vcombine.high %v1108, %v1124
        %v1134 = vcombine.low %v1115, %v1131
        %v1135 = vcombine.high %v1115, %v1131
        %v1136 = vpack.c.bf16 %v1132, %v1064
        %v1137 = vpack.c.bf16 %v1133, %v1065
        %v1138 = vpack.c.bf16 %v1134, %v1066
        %v1139 = vpack.c.bf16 %v1135, %v1067
        %1142 = vrot.lane.b32.xlu0 %v797, 96
        %v1143 = vpop.permute.xlu0 %1142
        %1144 = vrot.lane.b32.xlu0 %v801, 96
        %v1145 = vpop.permute.xlu0 %1144
        %1148 = vrot.lane.b32.xlu0 %v797, 64
        %v1149 = vpop.permute.xlu0 %1148
        %1150 = vrot.lane.b32.xlu0 %v801, 64
        %v1151 = vpop.permute.xlu0 %1150
        %1154 = vrot.lane.b32.xlu0 %v797, 32
        %v1155 = vpop.permute.xlu0 %1154
        %1156 = vrot.lane.b32.xlu0 %v801, 32
        %v1157 = vpop.permute.xlu0 %1156
        %v1160 = vcombine.low %v797, %v1149
        %v1161 = vcombine.high %v797, %v1149
        %v1163 = vunpack.c.l.s4 1983009808
        %v1164 = vunpack.c.0.s8 %v1163
        %v1165 = vlaneseq
        %v1166 = vshrl.u32 %v1165, 7
        %v1167 = vsub.s32 %v1164, %v1166
        %v1168 = vrot.slane %v1160, %v1167
        %v1170 = vunpack.c.l.s4 1983009808
        %v1171 = vunpack.c.0.s8 %v1170
        %v1172 = vlaneseq
        %v1173 = vshrl.u32 %v1172, 7
        %v1174 = vsub.s32 %v1171, %v1173
        %v1175 = vrot.slane %v1161, %v1174
        %v1176 = vcombine.low %v1143, %v1155
        %v1177 = vcombine.high %v1143, %v1155
        %v1179 = vunpack.c.l.s4 1983009808
        %v1180 = vunpack.c.0.s8 %v1179
        %v1181 = vlaneseq
        %v1182 = vshrl.u32 %v1181, 7
        %v1183 = vsub.s32 %v1180, %v1182
        %v1184 = vrot.slane %v1176, %v1183
        %v1186 = vunpack.c.l.s4 1983009808
        %v1187 = vunpack.c.0.s8 %v1186
        %v1188 = vlaneseq
        %v1189 = vshrl.u32 %v1188, 7
        %v1190 = vsub.s32 %v1187, %v1189
        %v1191 = vrot.slane %v1177, %v1190
        %v1192 = vcombine.low %v1168, %v1184
        %v1193 = vcombine.high %v1168, %v1184
        %v1195 = vunpack.c.l.s4 1934713408
        %v1196 = vunpack.c.0.s8 %v1195
        %v1197 = vlaneseq
        %v1198 = vshrl.u32 %v1197, 7
        %v1199 = vsub.s32 %v1196, %v1198
        %v1200 = vrot.slane %v1192, %v1199
        %v1202 = vunpack.c.l.s4 1934713408
        %v1203 = vunpack.c.0.s8 %v1202
        %v1204 = vlaneseq
        %v1205 = vshrl.u32 %v1204, 7
        %v1206 = vsub.s32 %v1203, %v1205
        %v1207 = vrot.slane %v1193, %v1206
        %v1208 = vcombine.low %v1175, %v1191
        %v1209 = vcombine.high %v1175, %v1191
        %v1211 = vunpack.c.l.s4 1934713408
        %v1212 = vunpack.c.0.s8 %v1211
        %v1213 = vlaneseq
        %v1214 = vshrl.u32 %v1213, 7
        %v1215 = vsub.s32 %v1212, %v1214
        %v1216 = vrot.slane %v1208, %v1215
        %v1218 = vunpack.c.l.s4 1934713408
        %v1219 = vunpack.c.0.s8 %v1218
        %v1220 = vlaneseq
        %v1221 = vshrl.u32 %v1220, 7
        %v1222 = vsub.s32 %v1219, %v1221
        %v1223 = vrot.slane %v1209, %v1222
        %v1224 = vcombine.high %v1200, 0.0
        %v1225 = vcombine.high %v1207, 0.0
        %v1226 = vcombine.high %v1216, 0.0
        %v1227 = vcombine.high %v1223, 0.0
        %v1228 = vcombine.low %v801, %v1151
        %v1229 = vcombine.high %v801, %v1151
        %v1231 = vunpack.c.l.s4 1983009808
        %v1232 = vunpack.c.0.s8 %v1231
        %v1233 = vlaneseq
        %v1234 = vshrl.u32 %v1233, 7
        %v1235 = vsub.s32 %v1232, %v1234
        %v1236 = vrot.slane %v1228, %v1235
        %v1238 = vunpack.c.l.s4 1983009808
        %v1239 = vunpack.c.0.s8 %v1238
        %v1240 = vlaneseq
        %v1241 = vshrl.u32 %v1240, 7
        %v1242 = vsub.s32 %v1239, %v1241
        %v1243 = vrot.slane %v1229, %v1242
        %v1244 = vcombine.low %v1145, %v1157
        %v1245 = vcombine.high %v1145, %v1157
        %v1247 = vunpack.c.l.s4 1983009808
        %v1248 = vunpack.c.0.s8 %v1247
        %v1249 = vlaneseq
        %v1250 = vshrl.u32 %v1249, 7
        %v1251 = vsub.s32 %v1248, %v1250
        %v1252 = vrot.slane %v1244, %v1251
        %v1254 = vunpack.c.l.s4 1983009808
        %v1255 = vunpack.c.0.s8 %v1254
        %v1256 = vlaneseq
        %v1257 = vshrl.u32 %v1256, 7
        %v1258 = vsub.s32 %v1255, %v1257
        %v1259 = vrot.slane %v1245, %v1258
        %v1260 = vcombine.low %v1236, %v1252
        %v1261 = vcombine.high %v1236, %v1252
        %v1263 = vunpack.c.l.s4 1934713408
        %v1264 = vunpack.c.0.s8 %v1263
        %v1265 = vlaneseq
        %v1266 = vshrl.u32 %v1265, 7
        %v1267 = vsub.s32 %v1264, %v1266
        %v1268 = vrot.slane %v1260, %v1267
        %v1270 = vunpack.c.l.s4 1934713408
        %v1271 = vunpack.c.0.s8 %v1270
        %v1272 = vlaneseq
        %v1273 = vshrl.u32 %v1272, 7
        %v1274 = vsub.s32 %v1271, %v1273
        %v1275 = vrot.slane %v1261, %v1274
        %v1276 = vcombine.low %v1243, %v1259
        %v1277 = vcombine.high %v1243, %v1259
        %v1279 = vunpack.c.l.s4 1934713408
        %v1280 = vunpack.c.0.s8 %v1279
        %v1281 = vlaneseq
        %v1282 = vshrl.u32 %v1281, 7
        %v1283 = vsub.s32 %v1280, %v1282
        %v1284 = vrot.slane %v1276, %v1283
        %v1286 = vunpack.c.l.s4 1934713408
        %v1287 = vunpack.c.0.s8 %v1286
        %v1288 = vlaneseq
        %v1289 = vshrl.u32 %v1288, 7
        %v1290 = vsub.s32 %v1287, %v1289
        %v1291 = vrot.slane %v1277, %v1290
        %v1292 = vcombine.high %v1268, 0.0
        %v1293 = vcombine.high %v1275, 0.0
        %v1294 = vcombine.high %v1284, 0.0
        %v1295 = vcombine.high %v1291, 0.0
        %v1296 = vcombine.low %v1200, %v1207
        %v1298 = vunpack.c.l.s4 1983009808
        %v1299 = vunpack.c.0.s8 %v1298
        %v1300 = vlaneseq
        %v1301 = vshrl.u32 %v1300, 7
        %v1302 = vsub.s32 %v1299, %v1301
        %v1303 = vrot.slane %v1296, %v1302
        %v1304 = vcombine.low %v1224, %v1225
        %v1306 = vunpack.c.l.s4 1983009808
        %v1307 = vunpack.c.0.s8 %v1306
        %v1308 = vlaneseq
        %v1309 = vshrl.u32 %v1308, 7
        %v1310 = vsub.s32 %v1307, %v1309
        %v1311 = vrot.slane %v1304, %v1310
        %v1312 = vcombine.low %v1216, %v1223
        %v1314 = vunpack.c.l.s4 1983009808
        %v1315 = vunpack.c.0.s8 %v1314
        %v1316 = vlaneseq
        %v1317 = vshrl.u32 %v1316, 7
        %v1318 = vsub.s32 %v1315, %v1317
        %v1319 = vrot.slane %v1312, %v1318
        %v1320 = vcombine.low %v1226, %v1227
        %v1322 = vunpack.c.l.s4 1983009808
        %v1323 = vunpack.c.0.s8 %v1322
        %v1324 = vlaneseq
        %v1325 = vshrl.u32 %v1324, 7
        %v1326 = vsub.s32 %v1323, %v1325
        %v1327 = vrot.slane %v1320, %v1326
        %v1328 = vcombine.low %v1303, %v1311
        %v1329 = vcombine.high %v1303, %v1311
        %v1331 = vunpack.c.l.s4 1934713408
        %v1332 = vunpack.c.0.s8 %v1331
        %v1333 = vlaneseq
        %v1334 = vshrl.u32 %v1333, 7
        %v1335 = vsub.s32 %v1332, %v1334
        %v1336 = vrot.slane %v1328, %v1335
        %v1338 = vunpack.c.l.s4 1934713408
        %v1339 = vunpack.c.0.s8 %v1338
        %v1340 = vlaneseq
        %v1341 = vshrl.u32 %v1340, 7
        %v1342 = vsub.s32 %v1339, %v1341
        %v1343 = vrot.slane %v1329, %v1342
        %v1344 = vcombine.low %v1319, %v1327
        %v1345 = vcombine.high %v1319, %v1327
        %v1347 = vunpack.c.l.s4 1934713408
        %v1348 = vunpack.c.0.s8 %v1347
        %v1349 = vlaneseq
        %v1350 = vshrl.u32 %v1349, 7
        %v1351 = vsub.s32 %v1348, %v1350
        %v1352 = vrot.slane %v1344, %v1351
        %v1354 = vunpack.c.l.s4 1934713408
        %v1355 = vunpack.c.0.s8 %v1354
        %v1356 = vlaneseq
        %v1357 = vshrl.u32 %v1356, 7
        %v1358 = vsub.s32 %v1355, %v1357
        %v1359 = vrot.slane %v1345, %v1358
        %v1360 = vcombine.low %v1336, %v1352
        %v1361 = vcombine.high %v1336, %v1352
        %v1362 = vcombine.low %v1343, %v1359
        %v1363 = vcombine.high %v1343, %v1359
        %v1364 = vcombine.low %v1268, %v1275
        %v1366 = vunpack.c.l.s4 1983009808
        %v1367 = vunpack.c.0.s8 %v1366
        %v1368 = vlaneseq
        %v1369 = vshrl.u32 %v1368, 7
        %v1370 = vsub.s32 %v1367, %v1369
        %v1371 = vrot.slane %v1364, %v1370
        %v1372 = vcombine.low %v1292, %v1293
        %v1374 = vunpack.c.l.s4 1983009808
        %v1375 = vunpack.c.0.s8 %v1374
        %v1376 = vlaneseq
        %v1377 = vshrl.u32 %v1376, 7
        %v1378 = vsub.s32 %v1375, %v1377
        %v1379 = vrot.slane %v1372, %v1378
        %v1380 = vcombine.low %v1284, %v1291
        %v1382 = vunpack.c.l.s4 1983009808
        %v1383 = vunpack.c.0.s8 %v1382
        %v1384 = vlaneseq
        %v1385 = vshrl.u32 %v1384, 7
        %v1386 = vsub.s32 %v1383, %v1385
        %v1387 = vrot.slane %v1380, %v1386
        %v1388 = vcombine.low %v1294, %v1295
        %v1390 = vunpack.c.l.s4 1983009808
        %v1391 = vunpack.c.0.s8 %v1390
        %v1392 = vlaneseq
        %v1393 = vshrl.u32 %v1392, 7
        %v1394 = vsub.s32 %v1391, %v1393
        %v1395 = vrot.slane %v1388, %v1394
        %v1396 = vcombine.low %v1371, %v1379
        %v1397 = vcombine.high %v1371, %v1379
        %v1399 = vunpack.c.l.s4 1934713408
        %v1400 = vunpack.c.0.s8 %v1399
        %v1401 = vlaneseq
        %v1402 = vshrl.u32 %v1401, 7
        %v1403 = vsub.s32 %v1400, %v1402
        %v1404 = vrot.slane %v1396, %v1403
        %v1406 = vunpack.c.l.s4 1934713408
        %v1407 = vunpack.c.0.s8 %v1406
        %v1408 = vlaneseq
        %v1409 = vshrl.u32 %v1408, 7
        %v1410 = vsub.s32 %v1407, %v1409
        %v1411 = vrot.slane %v1397, %v1410
        %v1412 = vcombine.low %v1387, %v1395
        %v1413 = vcombine.high %v1387, %v1395
        %v1415 = vunpack.c.l.s4 1934713408
        %v1416 = vunpack.c.0.s8 %v1415
        %v1417 = vlaneseq
        %v1418 = vshrl.u32 %v1417, 7
        %v1419 = vsub.s32 %v1416, %v1418
        %v1420 = vrot.slane %v1412, %v1419
        %v1422 = vunpack.c.l.s4 1934713408
        %v1423 = vunpack.c.0.s8 %v1422
        %v1424 = vlaneseq
        %v1425 = vshrl.u32 %v1424, 7
        %v1426 = vsub.s32 %v1423, %v1425
        %v1427 = vrot.slane %v1413, %v1426
        %v1428 = vcombine.low %v1404, %v1420
        %v1429 = vcombine.high %v1404, %v1420
        %v1430 = vcombine.low %v1411, %v1427
        %v1431 = vcombine.high %v1411, %v1427
        %v1432 = vpack.c.bf16 %v1428, %v1360
        %v1433 = vpack.c.bf16 %v1429, %v1361
        %v1434 = vpack.c.bf16 %v1430, %v1362
        %v1435 = vpack.c.bf16 %v1431, %v1363
        %1438 = vrot.lane.b32.xlu0 %v838, 96
        %v1439 = vpop.permute.xlu0 %1438
        %1440 = vrot.lane.b32.xlu0 %v841, 96
        %v1441 = vpop.permute.xlu0 %1440
        %1444 = vrot.lane.b32.xlu0 %v838, 64
        %v1445 = vpop.permute.xlu0 %1444
        %1446 = vrot.lane.b32.xlu0 %v841, 64
        %v1447 = vpop.permute.xlu0 %1446
        %1450 = vrot.lane.b32.xlu0 %v838, 32
        %v1451 = vpop.permute.xlu0 %1450
        %1452 = vrot.lane.b32.xlu0 %v841, 32
        %v1453 = vpop.permute.xlu0 %1452
        %v1456 = vcombine.low %v838, %v1445
        %v1457 = vcombine.high %v838, %v1445
        %v1459 = vunpack.c.l.s4 1983009808
        %v1460 = vunpack.c.0.s8 %v1459
        %v1461 = vlaneseq
        %v1462 = vshrl.u32 %v1461, 7
        %v1463 = vsub.s32 %v1460, %v1462
        %v1464 = vrot.slane %v1456, %v1463
        %v1466 = vunpack.c.l.s4 1983009808
        %v1467 = vunpack.c.0.s8 %v1466
        %v1468 = vlaneseq
        %v1469 = vshrl.u32 %v1468, 7
        %v1470 = vsub.s32 %v1467, %v1469
        %v1471 = vrot.slane %v1457, %v1470
        %v1472 = vcombine.low %v1439, %v1451
        %v1473 = vcombine.high %v1439, %v1451
        %v1475 = vunpack.c.l.s4 1983009808
        %v1476 = vunpack.c.0.s8 %v1475
        %v1477 = vlaneseq
        %v1478 = vshrl.u32 %v1477, 7
        %v1479 = vsub.s32 %v1476, %v1478
        %v1480 = vrot.slane %v1472, %v1479
        %v1482 = vunpack.c.l.s4 1983009808
        %v1483 = vunpack.c.0.s8 %v1482
        %v1484 = vlaneseq
        %v1485 = vshrl.u32 %v1484, 7
        %v1486 = vsub.s32 %v1483, %v1485
        %v1487 = vrot.slane %v1473, %v1486
        %v1488 = vcombine.low %v1464, %v1480
        %v1489 = vcombine.high %v1464, %v1480
        %v1491 = vunpack.c.l.s4 1934713408
        %v1492 = vunpack.c.0.s8 %v1491
        %v1493 = vlaneseq
        %v1494 = vshrl.u32 %v1493, 7
        %v1495 = vsub.s32 %v1492, %v1494
        %v1496 = vrot.slane %v1488, %v1495
        %v1498 = vunpack.c.l.s4 1934713408
        %v1499 = vunpack.c.0.s8 %v1498
        %v1500 = vlaneseq
        %v1501 = vshrl.u32 %v1500, 7
        %v1502 = vsub.s32 %v1499, %v1501
        %v1503 = vrot.slane %v1489, %v1502
        %v1504 = vcombine.low %v1471, %v1487
        %v1505 = vcombine.high %v1471, %v1487
        %v1507 = vunpack.c.l.s4 1934713408
        %v1508 = vunpack.c.0.s8 %v1507
        %v1509 = vlaneseq
        %v1510 = vshrl.u32 %v1509, 7
        %v1511 = vsub.s32 %v1508, %v1510
        %v1512 = vrot.slane %v1504, %v1511
        %v1514 = vunpack.c.l.s4 1934713408
        %v1515 = vunpack.c.0.s8 %v1514
        %v1516 = vlaneseq
        %v1517 = vshrl.u32 %v1516, 7
        %v1518 = vsub.s32 %v1515, %v1517
        %v1519 = vrot.slane %v1505, %v1518
        %v1520 = vcombine.high %v1496, 0.0
        %v1521 = vcombine.high %v1503, 0.0
        %v1522 = vcombine.high %v1512, 0.0
        %v1523 = vcombine.high %v1519, 0.0
        %v1524 = vcombine.low %v841, %v1447
        %v1525 = vcombine.high %v841, %v1447
        %v1527 = vunpack.c.l.s4 1983009808
        %v1528 = vunpack.c.0.s8 %v1527
        %v1529 = vlaneseq
        %v1530 = vshrl.u32 %v1529, 7
        %v1531 = vsub.s32 %v1528, %v1530
        %v1532 = vrot.slane %v1524, %v1531
        %v1534 = vunpack.c.l.s4 1983009808
        %v1535 = vunpack.c.0.s8 %v1534
        %v1536 = vlaneseq
        %v1537 = vshrl.u32 %v1536, 7
        %v1538 = vsub.s32 %v1535, %v1537
        %v1539 = vrot.slane %v1525, %v1538
        %v1540 = vcombine.low %v1441, %v1453
        %v1541 = vcombine.high %v1441, %v1453
        %v1543 = vunpack.c.l.s4 1983009808
        %v1544 = vunpack.c.0.s8 %v1543
        %v1545 = vlaneseq
        %v1546 = vshrl.u32 %v1545, 7
        %v1547 = vsub.s32 %v1544, %v1546
        %v1548 = vrot.slane %v1540, %v1547
        %v1550 = vunpack.c.l.s4 1983009808
        %v1551 = vunpack.c.0.s8 %v1550
        %v1552 = vlaneseq
        %v1553 = vshrl.u32 %v1552, 7
        %v1554 = vsub.s32 %v1551, %v1553
        %v1555 = vrot.slane %v1541, %v1554
        %v1556 = vcombine.low %v1532, %v1548
        %v1557 = vcombine.high %v1532, %v1548
        %v1559 = vunpack.c.l.s4 1934713408
        %v1560 = vunpack.c.0.s8 %v1559
        %v1561 = vlaneseq
        %v1562 = vshrl.u32 %v1561, 7
        %v1563 = vsub.s32 %v1560, %v1562
        %v1564 = vrot.slane %v1556, %v1563
        %v1566 = vunpack.c.l.s4 1934713408
        %v1567 = vunpack.c.0.s8 %v1566
        %v1568 = vlaneseq
        %v1569 = vshrl.u32 %v1568, 7
        %v1570 = vsub.s32 %v1567, %v1569
        %v1571 = vrot.slane %v1557, %v1570
        %v1572 = vcombine.low %v1539, %v1555
        %v1573 = vcombine.high %v1539, %v1555
        %v1575 = vunpack.c.l.s4 1934713408
        %v1576 = vunpack.c.0.s8 %v1575
        %v1577 = vlaneseq
        %v1578 = vshrl.u32 %v1577, 7
        %v1579 = vsub.s32 %v1576, %v1578
        %v1580 = vrot.slane %v1572, %v1579
        %v1582 = vunpack.c.l.s4 1934713408
        %v1583 = vunpack.c.0.s8 %v1582
        %v1584 = vlaneseq
        %v1585 = vshrl.u32 %v1584, 7
        %v1586 = vsub.s32 %v1583, %v1585
        %v1587 = vrot.slane %v1573, %v1586
        %v1588 = vcombine.high %v1564, 0.0
        %v1589 = vcombine.high %v1571, 0.0
        %v1590 = vcombine.high %v1580, 0.0
        %v1591 = vcombine.high %v1587, 0.0
        %v1592 = vcombine.low %v1496, %v1503
        %v1594 = vunpack.c.l.s4 1983009808
        %v1595 = vunpack.c.0.s8 %v1594
        %v1596 = vlaneseq
        %v1597 = vshrl.u32 %v1596, 7
        %v1598 = vsub.s32 %v1595, %v1597
        %v1599 = vrot.slane %v1592, %v1598
        %v1600 = vcombine.low %v1520, %v1521
        %v1602 = vunpack.c.l.s4 1983009808
        %v1603 = vunpack.c.0.s8 %v1602
        %v1604 = vlaneseq
        %v1605 = vshrl.u32 %v1604, 7
        %v1606 = vsub.s32 %v1603, %v1605
        %v1607 = vrot.slane %v1600, %v1606
        %v1608 = vcombine.low %v1512, %v1519
        %v1610 = vunpack.c.l.s4 1983009808
        %v1611 = vunpack.c.0.s8 %v1610
        %v1612 = vlaneseq
        %v1613 = vshrl.u32 %v1612, 7
        %v1614 = vsub.s32 %v1611, %v1613
        %v1615 = vrot.slane %v1608, %v1614
        %v1616 = vcombine.low %v1522, %v1523
        %v1618 = vunpack.c.l.s4 1983009808
        %v1619 = vunpack.c.0.s8 %v1618
        %v1620 = vlaneseq
        %v1621 = vshrl.u32 %v1620, 7
        %v1622 = vsub.s32 %v1619, %v1621
        %v1623 = vrot.slane %v1616, %v1622
        %v1624 = vcombine.low %v1599, %v1607
        %v1625 = vcombine.high %v1599, %v1607
        %v1627 = vunpack.c.l.s4 1934713408
        %v1628 = vunpack.c.0.s8 %v1627
        %v1629 = vlaneseq
        %v1630 = vshrl.u32 %v1629, 7
        %v1631 = vsub.s32 %v1628, %v1630
        %v1632 = vrot.slane %v1624, %v1631
        %v1634 = vunpack.c.l.s4 1934713408
        %v1635 = vunpack.c.0.s8 %v1634
        %v1636 = vlaneseq
        %v1637 = vshrl.u32 %v1636, 7
        %v1638 = vsub.s32 %v1635, %v1637
        %v1639 = vrot.slane %v1625, %v1638
        %v1640 = vcombine.low %v1615, %v1623
        %v1641 = vcombine.high %v1615, %v1623
        %v1643 = vunpack.c.l.s4 1934713408
        %v1644 = vunpack.c.0.s8 %v1643
        %v1645 = vlaneseq
        %v1646 = vshrl.u32 %v1645, 7
        %v1647 = vsub.s32 %v1644, %v1646
        %v1648 = vrot.slane %v1640, %v1647
        %v1650 = vunpack.c.l.s4 1934713408
        %v1651 = vunpack.c.0.s8 %v1650
        %v1652 = vlaneseq
        %v1653 = vshrl.u32 %v1652, 7
        %v1654 = vsub.s32 %v1651, %v1653
        %v1655 = vrot.slane %v1641, %v1654
        %v1656 = vcombine.low %v1632, %v1648
        %v1657 = vcombine.high %v1632, %v1648
        %v1658 = vcombine.low %v1639, %v1655
        %v1659 = vcombine.high %v1639, %v1655
        %v1660 = vcombine.low %v1564, %v1571
        %v1662 = vunpack.c.l.s4 1983009808
        %v1663 = vunpack.c.0.s8 %v1662
        %v1664 = vlaneseq
        %v1665 = vshrl.u32 %v1664, 7
        %v1666 = vsub.s32 %v1663, %v1665
        %v1667 = vrot.slane %v1660, %v1666
        %v1668 = vcombine.low %v1588, %v1589
        %v1670 = vunpack.c.l.s4 1983009808
        %v1671 = vunpack.c.0.s8 %v1670
        %v1672 = vlaneseq
        %v1673 = vshrl.u32 %v1672, 7
        %v1674 = vsub.s32 %v1671, %v1673
        %v1675 = vrot.slane %v1668, %v1674
        %v1676 = vcombine.low %v1580, %v1587
        %v1678 = vunpack.c.l.s4 1983009808
        %v1679 = vunpack.c.0.s8 %v1678
        %v1680 = vlaneseq
        %v1681 = vshrl.u32 %v1680, 7
        %v1682 = vsub.s32 %v1679, %v1681
        %v1683 = vrot.slane %v1676, %v1682
        %v1684 = vcombine.low %v1590, %v1591
        %v1686 = vunpack.c.l.s4 1983009808
        %v1687 = vunpack.c.0.s8 %v1686
        %v1688 = vlaneseq
        %v1689 = vshrl.u32 %v1688, 7
        %v1690 = vsub.s32 %v1687, %v1689
        %v1691 = vrot.slane %v1684, %v1690
        %v1692 = vcombine.low %v1667, %v1675
        %v1693 = vcombine.high %v1667, %v1675
        %v1695 = vunpack.c.l.s4 1934713408
        %v1696 = vunpack.c.0.s8 %v1695
        %v1697 = vlaneseq
        %v1698 = vshrl.u32 %v1697, 7
        %v1699 = vsub.s32 %v1696, %v1698
        %v1700 = vrot.slane %v1692, %v1699
        %v1702 = vunpack.c.l.s4 1934713408
        %v1703 = vunpack.c.0.s8 %v1702
        %v1704 = vlaneseq
        %v1705 = vshrl.u32 %v1704, 7
        %v1706 = vsub.s32 %v1703, %v1705
        %v1707 = vrot.slane %v1693, %v1706
        %v1708 = vcombine.low %v1683, %v1691
        %v1709 = vcombine.high %v1683, %v1691
        %v1711 = vunpack.c.l.s4 1934713408
        %v1712 = vunpack.c.0.s8 %v1711
        %v1713 = vlaneseq
        %v1714 = vshrl.u32 %v1713, 7
        %v1715 = vsub.s32 %v1712, %v1714
        %v1716 = vrot.slane %v1708, %v1715
        %v1718 = vunpack.c.l.s4 1934713408
        %v1719 = vunpack.c.0.s8 %v1718
        %v1720 = vlaneseq
        %v1721 = vshrl.u32 %v1720, 7
        %v1722 = vsub.s32 %v1719, %v1721
        %v1723 = vrot.slane %v1709, %v1722
        %v1724 = vcombine.low %v1700, %v1716
        %v1725 = vcombine.high %v1700, %v1716
        %v1726 = vcombine.low %v1707, %v1723
        %v1727 = vcombine.high %v1707, %v1723
        %v1728 = vpack.c.bf16 %v1724, %v1656
        %v1729 = vpack.c.bf16 %v1725, %v1657
        %v1730 = vpack.c.bf16 %v1726, %v1658
        %v1731 = vpack.c.bf16 %v1727, %v1659
        %vm1732 = vcmask 261120
        %v1734 = vsel %vm1732, %v1136, 0
        %v1737 = vsel %vm1732, %v1432, 0
        %1739 = vmatprep.subr.bf16.mxu0 0
        %1740 = vmatpush1.bf16.xpose.msra.mxu0 0
        %1741 = vmatprep.subr.bf16.mxu0 0
        %1742 = vmatpush1.bf16.xpose.msra.mxu0 0
        %1743 = vmatprep.subr.bf16.mxu0 0
        %1744 = vmatpush1.bf16.xpose.msra.mxu0 0
        %1745 = vmatprep.subr.bf16.mxu0 0
        %1746 = vmatpush1.bf16.xpose.msra.mxu0 0
        %1747 = vmatprep.subr.bf16.mxu0 0
        %1748 = vmatpush1.bf16.xpose.msra.mxu0 0
        %1749 = vmatprep.subr.bf16.mxu0 0
        %1750 = vmatpush1.bf16.xpose.msra.mxu0 0
        %1751 = vmatprep.subr.bf16.mxu0 0
        %1752 = vmatpush1.bf16.xpose.msra.mxu0 0
        %1753 = vmatprep.subr.bf16.mxu0 0
        %1754 = vmatpush1.bf16.xpose.msra.mxu0 %v1737
        %1755 = vmatprep.subr.bf16.mxu0 0
        %1756 = vmatpush2.bf16.xpose.msra.mxu0 0
        %1757 = vmatprep.subr.bf16.mxu0 0
        %1758 = vmatpush2.bf16.xpose.msra.mxu0 0
        %1759 = vmatprep.subr.bf16.mxu0 0
        %1760 = vmatpush2.bf16.xpose.msra.mxu0 0
        %1761 = vmatprep.subr.bf16.mxu0 0
        %1762 = vmatpush2.bf16.xpose.msra.mxu0 0
        %1763 = vmatprep.subr.bf16.mxu0 0
        %1764 = vmatpush2.bf16.xpose.msra.mxu0 0
        %1765 = vmatprep.subr.bf16.mxu0 0
        %1766 = vmatpush2.bf16.xpose.msra.mxu0 0
        %1767 = vmatprep.subr.bf16.mxu0 0
        %1768 = vmatpush2.bf16.xpose.msra.mxu0 0
        %1769 = vmatprep.subr.bf16.mxu0 0
        %1770 = vmatpush2.bf16.xpose.msra.mxu0 0
        %1771 = vmatprep.mubr.bf16.mxu0 0
        %1772 = vmatmul.mubr.bf16.gmra.mxu0 %v1734
        %v1773 = vpop.f32.mrf.mxu0
        %v1774 = vadd.f32 0.0, %v1773
        %v1775 = vpop.f32.mrf.mxu0
        %v1776 = vpop.f32.mrf.mxu0
        %v1777 = vadd.f32 0.0, %v1776
        %v1778 = vpop.f32.mrf.mxu0
        %1779 = vdwg.mxu0
        %v1781 = vsel %vm1732, %v1137, 0
        %v1784 = vsel %vm1732, %v1433, 0
        %1786 = vmatprep.subr.bf16.mxu0 0
        %1787 = vmatpush1.bf16.xpose.msra.mxu0 0
        %1788 = vmatprep.subr.bf16.mxu0 0
        %1789 = vmatpush1.bf16.xpose.msra.mxu0 0
        %1790 = vmatprep.subr.bf16.mxu0 0
        %1791 = vmatpush1.bf16.xpose.msra.mxu0 0
        %1792 = vmatprep.subr.bf16.mxu0 0
        %1793 = vmatpush1.bf16.xpose.msra.mxu0 0
        %1794 = vmatprep.subr.bf16.mxu0 0
        %1795 = vmatpush1.bf16.xpose.msra.mxu0 0
        %1796 = vmatprep.subr.bf16.mxu0 0
        %1797 = vmatpush1.bf16.xpose.msra.mxu0 0
        %1798 = vmatprep.subr.bf16.mxu0 0
        %1799 = vmatpush1.bf16.xpose.msra.mxu0 0
        %1800 = vmatprep.subr.bf16.mxu0 0
        %1801 = vmatpush1.bf16.xpose.msra.mxu0 %v1784
        %1802 = vmatprep.subr.bf16.mxu0 0
        %1803 = vmatpush2.bf16.xpose.msra.mxu0 0
        %1804 = vmatprep.subr.bf16.mxu0 0
        %1805 = vmatpush2.bf16.xpose.msra.mxu0 0
        %1806 = vmatprep.subr.bf16.mxu0 0
        %1807 = vmatpush2.bf16.xpose.msra.mxu0 0
        %1808 = vmatprep.subr.bf16.mxu0 0
        %1809 = vmatpush2.bf16.xpose.msra.mxu0 0
        %1810 = vmatprep.subr.bf16.mxu0 0
        %1811 = vmatpush2.bf16.xpose.msra.mxu0 0
        %1812 = vmatprep.subr.bf16.mxu0 0
        %1813 = vmatpush2.bf16.xpose.msra.mxu0 0
        %1814 = vmatprep.subr.bf16.mxu0 0
        %1815 = vmatpush2.bf16.xpose.msra.mxu0 0
        %1816 = vmatprep.subr.bf16.mxu0 0
        %1817 = vmatpush2.bf16.xpose.msra.mxu0 0
        %1818 = vmatprep.mubr.bf16.mxu0 0
        %1819 = vmatmul.mubr.bf16.gmra.mxu0 %v1781
        %v1820 = vpop.f32.mrf.mxu0
        %v1821 = vadd.f32 0.0, %v1820
        %v1822 = vpop.f32.mrf.mxu0
        %v1823 = vpop.f32.mrf.mxu0
        %v1824 = vadd.f32 0.0, %v1823
        %v1825 = vpop.f32.mrf.mxu0
        %1826 = vdwg.mxu0
        %v1828 = vsel %vm1732, %v1138, 0
        %v1831 = vsel %vm1732, %v1434, 0
        %1833 = vmatprep.subr.bf16.mxu0 0
        %1834 = vmatpush1.bf16.xpose.msra.mxu0 0
        %1835 = vmatprep.subr.bf16.mxu0 0
        %1836 = vmatpush1.bf16.xpose.msra.mxu0 0
        %1837 = vmatprep.subr.bf16.mxu0 0
        %1838 = vmatpush1.bf16.xpose.msra.mxu0 0
        %1839 = vmatprep.subr.bf16.mxu0 0
        %1840 = vmatpush1.bf16.xpose.msra.mxu0 0
        %1841 = vmatprep.subr.bf16.mxu0 0
        %1842 = vmatpush1.bf16.xpose.msra.mxu0 0
        %1843 = vmatprep.subr.bf16.mxu0 0
        %1844 = vmatpush1.bf16.xpose.msra.mxu0 0
        %1845 = vmatprep.subr.bf16.mxu0 0
        %1846 = vmatpush1.bf16.xpose.msra.mxu0 0
        %1847 = vmatprep.subr.bf16.mxu0 0
        %1848 = vmatpush1.bf16.xpose.msra.mxu0 %v1831
        %1849 = vmatprep.subr.bf16.mxu0 0
        %1850 = vmatpush2.bf16.xpose.msra.mxu0 0
        %1851 = vmatprep.subr.bf16.mxu0 0
        %1852 = vmatpush2.bf16.xpose.msra.mxu0 0
        %1853 = vmatprep.subr.bf16.mxu0 0
        %1854 = vmatpush2.bf16.xpose.msra.mxu0 0
        %1855 = vmatprep.subr.bf16.mxu0 0
        %1856 = vmatpush2.bf16.xpose.msra.mxu0 0
        %1857 = vmatprep.subr.bf16.mxu0 0
        %1858 = vmatpush2.bf16.xpose.msra.mxu0 0
        %1859 = vmatprep.subr.bf16.mxu0 0
        %1860 = vmatpush2.bf16.xpose.msra.mxu0 0
        %1861 = vmatprep.subr.bf16.mxu0 0
        %1862 = vmatpush2.bf16.xpose.msra.mxu0 0
        %1863 = vmatprep.subr.bf16.mxu0 0
        %1864 = vmatpush2.bf16.xpose.msra.mxu0 0
        %1865 = vmatprep.mubr.bf16.mxu0 0
        %1866 = vmatmul.mubr.bf16.gmra.mxu0 %v1828
        %v1867 = vpop.f32.mrf.mxu0
        %v1868 = vadd.f32 0.0, %v1867
        %v1869 = vpop.f32.mrf.mxu0
        %v1870 = vpop.f32.mrf.mxu0
        %v1871 = vadd.f32 0.0, %v1870
        %v1872 = vpop.f32.mrf.mxu0
        %1873 = vdwg.mxu0
        %v1875 = vsel %vm1732, %v1139, 0
        %v1878 = vsel %vm1732, %v1435, 0
        %1880 = vmatprep.subr.bf16.mxu0 0
        %1881 = vmatpush1.bf16.xpose.msra.mxu0 0
        %1882 = vmatprep.subr.bf16.mxu0 0
        %1883 = vmatpush1.bf16.xpose.msra.mxu0 0
        %1884 = vmatprep.subr.bf16.mxu0 0
        %1885 = vmatpush1.bf16.xpose.msra.mxu0 0
        %1886 = vmatprep.subr.bf16.mxu0 0
        %1887 = vmatpush1.bf16.xpose.msra.mxu0 0
        %1888 = vmatprep.subr.bf16.mxu0 0
        %1889 = vmatpush1.bf16.xpose.msra.mxu0 0
        %1890 = vmatprep.subr.bf16.mxu0 0
        %1891 = vmatpush1.bf16.xpose.msra.mxu0 0
        %1892 = vmatprep.subr.bf16.mxu0 0
        %1893 = vmatpush1.bf16.xpose.msra.mxu0 0
        %1894 = vmatprep.subr.bf16.mxu0 0
        %1895 = vmatpush1.bf16.xpose.msra.mxu0 %v1878
        %1896 = vmatprep.subr.bf16.mxu0 0
        %1897 = vmatpush2.bf16.xpose.msra.mxu0 0
        %1898 = vmatprep.subr.bf16.mxu0 0
        %1899 = vmatpush2.bf16.xpose.msra.mxu0 0
        %1900 = vmatprep.subr.bf16.mxu0 0
        %1901 = vmatpush2.bf16.xpose.msra.mxu0 0
        %1902 = vmatprep.subr.bf16.mxu0 0
        %1903 = vmatpush2.bf16.xpose.msra.mxu0 0
        %1904 = vmatprep.subr.bf16.mxu0 0
        %1905 = vmatpush2.bf16.xpose.msra.mxu0 0
        %1906 = vmatprep.subr.bf16.mxu0 0
        %1907 = vmatpush2.bf16.xpose.msra.mxu0 0
        %1908 = vmatprep.subr.bf16.mxu0 0
        %1909 = vmatpush2.bf16.xpose.msra.mxu0 0
        %1910 = vmatprep.subr.bf16.mxu0 0
        %1911 = vmatpush2.bf16.xpose.msra.mxu0 0
        %1912 = vmatprep.mubr.bf16.mxu0 0
        %1913 = vmatmul.mubr.bf16.gmra.mxu0 %v1875
        %v1914 = vpop.f32.mrf.mxu0
        %v1915 = vadd.f32 0.0, %v1914
        %v1916 = vpop.f32.mrf.mxu0
        %v1917 = vpop.f32.mrf.mxu0
        %v1918 = vadd.f32 0.0, %v1917
        %v1919 = vpop.f32.mrf.mxu0
        %1920 = vdwg.mxu0
        %v1921 = vmul.f32 %v1774, 0.17677669
        %v1922 = vmul.f32 %v1777, 0.17677669
        %v1923 = vmul.f32 %v1821, 0.17677669
        %v1924 = vmul.f32 %v1824, 0.17677669
        %v1925 = vmul.f32 %v1868, 0.17677669
        %v1926 = vmul.f32 %v1871, 0.17677669
        %v1927 = vmul.f32 %v1915, 0.17677669
        %v1928 = vmul.f32 %v1918, 0.17677669
        %v1930 = vlaneseq
        %v1931 = vshrl.u32 %v1930, 7
        %v1932 = vsub.s32 0, %v1931
        %v1933 = vrot.slane %v581, %v1932
        %v1935 = vadd.f32 %v1921, %v1933
        %v1936 = vadd.f32 %v1922, %v1933
        %v1937 = vadd.f32 %v1923, %v1933
        %v1938 = vadd.f32 %v1924, %v1933
        %v1939 = vadd.f32 %v1925, %v1933
        %v1940 = vadd.f32 %v1926, %v1933
        %v1941 = vadd.f32 %v1927, %v1933
        %v1942 = vadd.f32 %v1928, %v1933
        %vm1943 = vcmask 130048
        %v1944 = vsel %vm1943, %v1935, -inf
        %1945 = vmax.xlane.f32.xlu0 %v1944
        %v1946 = vpop.xlane.xlu0 %1945
        %v1947 = vsel %vm1943, %v1936, -inf
        %1948 = vmax.xlane.f32.xlu0 %v1947
        %v1949 = vpop.xlane.xlu0 %1948
        %v1950 = vsel %vm1943, %v1937, -inf
        %1951 = vmax.xlane.f32.xlu0 %v1950
        %v1952 = vpop.xlane.xlu0 %1951
        %v1953 = vsel %vm1943, %v1938, -inf
        %1954 = vmax.xlane.f32.xlu0 %v1953
        %v1955 = vpop.xlane.xlu0 %1954
        %v1956 = vsel %vm1943, %v1939, -inf
        %1957 = vmax.xlane.f32.xlu0 %v1956
        %v1958 = vpop.xlane.xlu0 %1957
        %v1959 = vsel %vm1943, %v1940, -inf
        %1960 = vmax.xlane.f32.xlu0 %v1959
        %v1961 = vpop.xlane.xlu0 %1960
        %v1962 = vsel %vm1943, %v1941, -inf
        %1963 = vmax.xlane.f32.xlu0 %v1962
        %v1964 = vpop.xlane.xlu0 %1963
        %v1965 = vsel %vm1943, %v1942, -inf
        %1966 = vmax.xlane.f32.xlu0 %v1965
        %v1967 = vpop.xlane.xlu0 %1966
        %v1968 = vsub.f32 %v1935, %v1946
        %v1969 = vsub.f32 %v1936, %v1949
        %v1970 = vsub.f32 %v1937, %v1952
        %v1971 = vsub.f32 %v1938, %v1955
        %v1972 = vsub.f32 %v1939, %v1958
        %v1973 = vsub.f32 %v1940, %v1961
        %v1974 = vsub.f32 %v1941, %v1964
        %v1975 = vsub.f32 %v1942, %v1967
        %v1976 = vmul.f32 %v1968, 1.442695
        %v1977 = vpow.pop %v1976
        %v1978 = vmul.f32 %v1969, 1.442695
        %v1979 = vpow.pop %v1978
        %v1980 = vmul.f32 %v1970, 1.442695
        %v1981 = vpow.pop %v1980
        %v1982 = vmul.f32 %v1971, 1.442695
        %v1983 = vpow.pop %v1982
        %v1984 = vmul.f32 %v1972, 1.442695
        %v1985 = vpow.pop %v1984
        %v1986 = vmul.f32 %v1973, 1.442695
        %v1987 = vpow.pop %v1986
        %v1988 = vmul.f32 %v1974, 1.442695
        %v1989 = vpow.pop %v1988
        %v1990 = vmul.f32 %v1975, 1.442695
        %v1991 = vpow.pop %v1990
        %v1992 = vsel %vm1943, %v1977, 0.0
        %1993 = vadd.xlane.f32.xlu0 %v1992
        %v1994 = vpop.xlane.xlu0 %1993
        %v1995 = vsel %vm1943, %v1979, 0.0
        %1996 = vadd.xlane.f32.xlu0 %v1995
        %v1997 = vpop.xlane.xlu0 %1996
        %v1998 = vsel %vm1943, %v1981, 0.0
        %1999 = vadd.xlane.f32.xlu0 %v1998
        %v2000 = vpop.xlane.xlu0 %1999
        %v2001 = vsel %vm1943, %v1983, 0.0
        %2002 = vadd.xlane.f32.xlu0 %v2001
        %v2003 = vpop.xlane.xlu0 %2002
        %v2004 = vsel %vm1943, %v1985, 0.0
        %2005 = vadd.xlane.f32.xlu0 %v2004
        %v2006 = vpop.xlane.xlu0 %2005
        %v2007 = vsel %vm1943, %v1987, 0.0
        %2008 = vadd.xlane.f32.xlu0 %v2007
        %v2009 = vpop.xlane.xlu0 %2008
        %v2010 = vsel %vm1943, %v1989, 0.0
        %2011 = vadd.xlane.f32.xlu0 %v2010
        %v2012 = vpop.xlane.xlu0 %2011
        %v2013 = vsel %vm1943, %v1991, 0.0
        %2014 = vadd.xlane.f32.xlu0 %v2013
        %v2015 = vpop.xlane.xlu0 %2014
        %v2016 = vrcp.pop %v1994
        %v2017 = vrcp.pop %v1997
        %v2018 = vrcp.pop %v2000
        %v2019 = vrcp.pop %v2003
        %v2020 = vrcp.pop %v2006
        %v2021 = vrcp.pop %v2009
        %v2022 = vrcp.pop %v2012
        %v2023 = vrcp.pop %v2015
        %v2024 = vmul.f32 %v1977, %v2016
        %v2025 = vmul.f32 %v1979, %v2017
        %v2026 = vmul.f32 %v1981, %v2018
        %v2027 = vmul.f32 %v1983, %v2019
        %v2028 = vmul.f32 %v1985, %v2020
        %v2029 = vmul.f32 %v1987, %v2021
        %v2030 = vmul.f32 %v1989, %v2022
        %v2031 = vmul.f32 %v1991, %v2023
        %v2032 = vpack.c.bf16 %v2025, %v2024
        %v2033 = vpack.c.bf16 %v2027, %v2026
        %v2034 = vpack.c.bf16 %v2029, %v2028
        %v2035 = vpack.c.bf16 %v2031, %v2030
        %v2037 = vsel %vm1943, %v2032, 0
        %2039 = vmatprep.subr.bf16.mxu0 0
        %2040 = vmatpush1.bf16.msra.mxu0 0
        %2041 = vmatprep.subr.bf16.mxu0 0
        %2042 = vmatpush1.bf16.msra.mxu0 0
        %2043 = vmatprep.subr.bf16.mxu0 0
        %2044 = vmatpush1.bf16.msra.mxu0 0
        %2045 = vmatprep.subr.bf16.mxu0 0
        %2046 = vmatpush1.bf16.msra.mxu0 0
        %2047 = vmatprep.subr.bf16.mxu0 0
        %2048 = vmatpush1.bf16.msra.mxu0 0
        %2049 = vmatprep.subr.bf16.mxu0 0
        %2050 = vmatpush1.bf16.msra.mxu0 0
        %2051 = vmatprep.subr.bf16.mxu0 0
        %2052 = vmatpush1.bf16.msra.mxu0 0
        %2053 = vmatprep.subr.bf16.mxu0 0
        %2054 = vmatpush1.bf16.msra.mxu0 %v1728
        %2055 = vmatprep.subr.bf16.mxu0 0
        %2056 = vmatpush2.bf16.msra.mxu0 0
        %2057 = vmatprep.subr.bf16.mxu0 0
        %2058 = vmatpush2.bf16.msra.mxu0 0
        %2059 = vmatprep.subr.bf16.mxu0 0
        %2060 = vmatpush2.bf16.msra.mxu0 0
        %2061 = vmatprep.subr.bf16.mxu0 0
        %2062 = vmatpush2.bf16.msra.mxu0 0
        %2063 = vmatprep.subr.bf16.mxu0 0
        %2064 = vmatpush2.bf16.msra.mxu0 0
        %2065 = vmatprep.subr.bf16.mxu0 0
        %2066 = vmatpush2.bf16.msra.mxu0 0
        %2067 = vmatprep.subr.bf16.mxu0 0
        %2068 = vmatpush2.bf16.msra.mxu0 0
        %2069 = vmatprep.subr.bf16.mxu0 0
        %2070 = vmatpush2.bf16.msra.mxu0 0
        %2071 = vmatprep.mubr.bf16.mxu0 0
        %2072 = vmatmul.mubr.bf16.gmra.mxu0 %v2037
        %v2073 = vpop.f32.mrf.mxu0
        %v2074 = vadd.f32 0.0, %v2073
        %v2075 = vpop.f32.mrf.mxu0
        %v2076 = vpop.f32.mrf.mxu0
        %v2077 = vadd.f32 0.0, %v2076
        %v2078 = vpop.f32.mrf.mxu0
        %2079 = vdwg.mxu0
        %v2081 = vsel %vm1943, %v2033, 0
        %2083 = vmatprep.subr.bf16.mxu0 0
        %2084 = vmatpush1.bf16.msra.mxu0 0
        %2085 = vmatprep.subr.bf16.mxu0 0
        %2086 = vmatpush1.bf16.msra.mxu0 0
        %2087 = vmatprep.subr.bf16.mxu0 0
        %2088 = vmatpush1.bf16.msra.mxu0 0
        %2089 = vmatprep.subr.bf16.mxu0 0
        %2090 = vmatpush1.bf16.msra.mxu0 0
        %2091 = vmatprep.subr.bf16.mxu0 0
        %2092 = vmatpush1.bf16.msra.mxu0 0
        %2093 = vmatprep.subr.bf16.mxu0 0
        %2094 = vmatpush1.bf16.msra.mxu0 0
        %2095 = vmatprep.subr.bf16.mxu0 0
        %2096 = vmatpush1.bf16.msra.mxu0 0
        %2097 = vmatprep.subr.bf16.mxu0 0
        %2098 = vmatpush1.bf16.msra.mxu0 %v1729
        %2099 = vmatprep.subr.bf16.mxu0 0
        %2100 = vmatpush2.bf16.msra.mxu0 0
        %2101 = vmatprep.subr.bf16.mxu0 0
        %2102 = vmatpush2.bf16.msra.mxu0 0
        %2103 = vmatprep.subr.bf16.mxu0 0
        %2104 = vmatpush2.bf16.msra.mxu0 0
        %2105 = vmatprep.subr.bf16.mxu0 0
        %2106 = vmatpush2.bf16.msra.mxu0 0
        %2107 = vmatprep.subr.bf16.mxu0 0
        %2108 = vmatpush2.bf16.msra.mxu0 0
        %2109 = vmatprep.subr.bf16.mxu0 0
        %2110 = vmatpush2.bf16.msra.mxu0 0
        %2111 = vmatprep.subr.bf16.mxu0 0
        %2112 = vmatpush2.bf16.msra.mxu0 0
        %2113 = vmatprep.subr.bf16.mxu0 0
        %2114 = vmatpush2.bf16.msra.mxu0 0
        %2115 = vmatprep.mubr.bf16.mxu0 0
        %2116 = vmatmul.mubr.bf16.gmra.mxu0 %v2081
        %v2117 = vpop.f32.mrf.mxu0
        %v2118 = vadd.f32 0.0, %v2117
        %v2119 = vpop.f32.mrf.mxu0
        %v2120 = vpop.f32.mrf.mxu0
        %v2121 = vadd.f32 0.0, %v2120
        %v2122 = vpop.f32.mrf.mxu0
        %2123 = vdwg.mxu0
        %v2125 = vsel %vm1943, %v2034, 0
        %2127 = vmatprep.subr.bf16.mxu0 0
        %2128 = vmatpush1.bf16.msra.mxu0 0
        %2129 = vmatprep.subr.bf16.mxu0 0
        %2130 = vmatpush1.bf16.msra.mxu0 0
        %2131 = vmatprep.subr.bf16.mxu0 0
        %2132 = vmatpush1.bf16.msra.mxu0 0
        %2133 = vmatprep.subr.bf16.mxu0 0
        %2134 = vmatpush1.bf16.msra.mxu0 0
        %2135 = vmatprep.subr.bf16.mxu0 0
        %2136 = vmatpush1.bf16.msra.mxu0 0
        %2137 = vmatprep.subr.bf16.mxu0 0
        %2138 = vmatpush1.bf16.msra.mxu0 0
        %2139 = vmatprep.subr.bf16.mxu0 0
        %2140 = vmatpush1.bf16.msra.mxu0 0
        %2141 = vmatprep.subr.bf16.mxu0 0
        %2142 = vmatpush1.bf16.msra.mxu0 %v1730
        %2143 = vmatprep.subr.bf16.mxu0 0
        %2144 = vmatpush2.bf16.msra.mxu0 0
        %2145 = vmatprep.subr.bf16.mxu0 0
        %2146 = vmatpush2.bf16.msra.mxu0 0
        %2147 = vmatprep.subr.bf16.mxu0 0
        %2148 = vmatpush2.bf16.msra.mxu0 0
        %2149 = vmatprep.subr.bf16.mxu0 0
        %2150 = vmatpush2.bf16.msra.mxu0 0
        %2151 = vmatprep.subr.bf16.mxu0 0
        %2152 = vmatpush2.bf16.msra.mxu0 0
        %2153 = vmatprep.subr.bf16.mxu0 0
        %2154 = vmatpush2.bf16.msra.mxu0 0
        %2155 = vmatprep.subr.bf16.mxu0 0
        %2156 = vmatpush2.bf16.msra.mxu0 0
        %2157 = vmatprep.subr.bf16.mxu0 0
        %2158 = vmatpush2.bf16.msra.mxu0 0
        %2159 = vmatprep.mubr.bf16.mxu0 0
        %2160 = vmatmul.mubr.bf16.gmra.mxu0 %v2125
        %v2161 = vpop.f32.mrf.mxu0
        %v2162 = vadd.f32 0.0, %v2161
        %v2163 = vpop.f32.mrf.mxu0
        %v2164 = vpop.f32.mrf.mxu0
        %v2165 = vadd.f32 0.0, %v2164
        %v2166 = vpop.f32.mrf.mxu0
        %2167 = vdwg.mxu0
        %v2169 = vsel %vm1943, %v2035, 0
        %2171 = vmatprep.subr.bf16.mxu0 0
        %2172 = vmatpush1.bf16.msra.mxu0 0
        %2173 = vmatprep.subr.bf16.mxu0 0
        %2174 = vmatpush1.bf16.msra.mxu0 0
        %2175 = vmatprep.subr.bf16.mxu0 0
        %2176 = vmatpush1.bf16.msra.mxu0 0
        %2177 = vmatprep.subr.bf16.mxu0 0
        %2178 = vmatpush1.bf16.msra.mxu0 0
        %2179 = vmatprep.subr.bf16.mxu0 0
        %2180 = vmatpush1.bf16.msra.mxu0 0
        %2181 = vmatprep.subr.bf16.mxu0 0
        %2182 = vmatpush1.bf16.msra.mxu0 0
        %2183 = vmatprep.subr.bf16.mxu0 0
        %2184 = vmatpush1.bf16.msra.mxu0 0
        %2185 = vmatprep.subr.bf16.mxu0 0
        %2186 = vmatpush1.bf16.msra.mxu0 %v1731
        %2187 = vmatprep.subr.bf16.mxu0 0
        %2188 = vmatpush2.bf16.msra.mxu0 0
        %2189 = vmatprep.subr.bf16.mxu0 0
        %2190 = vmatpush2.bf16.msra.mxu0 0
        %2191 = vmatprep.subr.bf16.mxu0 0
        %2192 = vmatpush2.bf16.msra.mxu0 0
        %2193 = vmatprep.subr.bf16.mxu0 0
        %2194 = vmatpush2.bf16.msra.mxu0 0
        %2195 = vmatprep.subr.bf16.mxu0 0
        %2196 = vmatpush2.bf16.msra.mxu0 0
        %2197 = vmatprep.subr.bf16.mxu0 0
        %2198 = vmatpush2.bf16.msra.mxu0 0
        %2199 = vmatprep.subr.bf16.mxu0 0
        %2200 = vmatpush2.bf16.msra.mxu0 0
        %2201 = vmatprep.subr.bf16.mxu0 0
        %2202 = vmatpush2.bf16.msra.mxu0 0
        %2203 = vmatprep.mubr.bf16.mxu0 0
        %2204 = vmatmul.mubr.bf16.gmra.mxu0 %v2169
        %v2205 = vpop.f32.mrf.mxu0
        %v2206 = vadd.f32 0.0, %v2205
        %v2207 = vpop.f32.mrf.mxu0
        %v2208 = vpop.f32.mrf.mxu0
        %v2209 = vadd.f32 0.0, %v2208
        %v2210 = vpop.f32.mrf.mxu0
        %2211 = vdwg.mxu0
        %v2212 = vcombine.low %v2074, %v2162
        %v2213 = vcombine.high %v2074, %v2162
        %v2215 = vunpack.c.l.s4 1983009808
        %v2216 = vunpack.c.0.s8 %v2215
        %v2217 = vlaneseq
        %v2218 = vshrl.u32 %v2217, 7
        %v2219 = vsub.s32 %v2216, %v2218
        %v2220 = vrot.slane %v2212, %v2219
        %v2222 = vunpack.c.l.s4 1983009808
        %v2223 = vunpack.c.0.s8 %v2222
        %v2224 = vlaneseq
        %v2225 = vshrl.u32 %v2224, 7
        %v2226 = vsub.s32 %v2223, %v2225
        %v2227 = vrot.slane %v2213, %v2226
        %v2228 = vcombine.low %v2118, %v2206
        %v2229 = vcombine.high %v2118, %v2206
        %v2231 = vunpack.c.l.s4 1983009808
        %v2232 = vunpack.c.0.s8 %v2231
        %v2233 = vlaneseq
        %v2234 = vshrl.u32 %v2233, 7
        %v2235 = vsub.s32 %v2232, %v2234
        %v2236 = vrot.slane %v2228, %v2235
        %v2238 = vunpack.c.l.s4 1983009808
        %v2239 = vunpack.c.0.s8 %v2238
        %v2240 = vlaneseq
        %v2241 = vshrl.u32 %v2240, 7
        %v2242 = vsub.s32 %v2239, %v2241
        %v2243 = vrot.slane %v2229, %v2242
        %v2244 = vcombine.low %v2220, %v2236
        %v2245 = vcombine.high %v2220, %v2236
        %v2247 = vunpack.c.l.s4 1934713408
        %v2248 = vunpack.c.0.s8 %v2247
        %v2249 = vlaneseq
        %v2250 = vshrl.u32 %v2249, 7
        %v2251 = vsub.s32 %v2248, %v2250
        %v2252 = vrot.slane %v2244, %v2251
        %v2254 = vunpack.c.l.s4 1934713408
        %v2255 = vunpack.c.0.s8 %v2254
        %v2256 = vlaneseq
        %v2257 = vshrl.u32 %v2256, 7
        %v2258 = vsub.s32 %v2255, %v2257
        %v2259 = vrot.slane %v2245, %v2258
        %v2260 = vcombine.low %v2227, %v2243
        %v2261 = vcombine.high %v2227, %v2243
        %v2263 = vunpack.c.l.s4 1934713408
        %v2264 = vunpack.c.0.s8 %v2263
        %v2265 = vlaneseq
        %v2266 = vshrl.u32 %v2265, 7
        %v2267 = vsub.s32 %v2264, %v2266
        %v2268 = vrot.slane %v2260, %v2267
        %v2270 = vunpack.c.l.s4 1934713408
        %v2271 = vunpack.c.0.s8 %v2270
        %v2272 = vlaneseq
        %v2273 = vshrl.u32 %v2272, 7
        %v2274 = vsub.s32 %v2271, %v2273
        %v2275 = vrot.slane %v2261, %v2274
        %v2276 = vcombine.high %v2252, 0.0
        %v2277 = vcombine.high %v2259, 0.0
        %v2278 = vcombine.high %v2268, 0.0
        %v2279 = vcombine.high %v2275, 0.0
        %v2280 = vcombine.low %v2077, %v2165
        %v2281 = vcombine.high %v2077, %v2165
        %v2283 = vunpack.c.l.s4 1983009808
        %v2284 = vunpack.c.0.s8 %v2283
        %v2285 = vlaneseq
        %v2286 = vshrl.u32 %v2285, 7
        %v2287 = vsub.s32 %v2284, %v2286
        %v2288 = vrot.slane %v2280, %v2287
        %v2290 = vunpack.c.l.s4 1983009808
        %v2291 = vunpack.c.0.s8 %v2290
        %v2292 = vlaneseq
        %v2293 = vshrl.u32 %v2292, 7
        %v2294 = vsub.s32 %v2291, %v2293
        %v2295 = vrot.slane %v2281, %v2294
        %v2296 = vcombine.low %v2121, %v2209
        %v2297 = vcombine.high %v2121, %v2209
        %v2299 = vunpack.c.l.s4 1983009808
        %v2300 = vunpack.c.0.s8 %v2299
        %v2301 = vlaneseq
        %v2302 = vshrl.u32 %v2301, 7
        %v2303 = vsub.s32 %v2300, %v2302
        %v2304 = vrot.slane %v2296, %v2303
        %v2306 = vunpack.c.l.s4 1983009808
        %v2307 = vunpack.c.0.s8 %v2306
        %v2308 = vlaneseq
        %v2309 = vshrl.u32 %v2308, 7
        %v2310 = vsub.s32 %v2307, %v2309
        %v2311 = vrot.slane %v2297, %v2310
        %v2312 = vcombine.low %v2288, %v2304
        %v2313 = vcombine.high %v2288, %v2304
        %v2315 = vunpack.c.l.s4 1934713408
        %v2316 = vunpack.c.0.s8 %v2315
        %v2317 = vlaneseq
        %v2318 = vshrl.u32 %v2317, 7
        %v2319 = vsub.s32 %v2316, %v2318
        %v2320 = vrot.slane %v2312, %v2319
        %v2322 = vunpack.c.l.s4 1934713408
        %v2323 = vunpack.c.0.s8 %v2322
        %v2324 = vlaneseq
        %v2325 = vshrl.u32 %v2324, 7
        %v2326 = vsub.s32 %v2323, %v2325
        %v2327 = vrot.slane %v2313, %v2326
        %v2328 = vcombine.low %v2295, %v2311
        %v2329 = vcombine.high %v2295, %v2311
        %v2331 = vunpack.c.l.s4 1934713408
        %v2332 = vunpack.c.0.s8 %v2331
        %v2333 = vlaneseq
        %v2334 = vshrl.u32 %v2333, 7
        %v2335 = vsub.s32 %v2332, %v2334
        %v2336 = vrot.slane %v2328, %v2335
        %v2338 = vunpack.c.l.s4 1934713408
        %v2339 = vunpack.c.0.s8 %v2338
        %v2340 = vlaneseq
        %v2341 = vshrl.u32 %v2340, 7
        %v2342 = vsub.s32 %v2339, %v2341
        %v2343 = vrot.slane %v2329, %v2342
        %v2344 = vcombine.high %v2320, 0.0
        %v2345 = vcombine.high %v2327, 0.0
        %v2346 = vcombine.high %v2336, 0.0
        %v2347 = vcombine.high %v2343, 0.0
        %v2348 = vcombine.low %v2252, %v2259
        %v2350 = vunpack.c.l.s4 1983009808
        %v2351 = vunpack.c.0.s8 %v2350
        %v2352 = vlaneseq
        %v2353 = vshrl.u32 %v2352, 7
        %v2354 = vsub.s32 %v2351, %v2353
        %v2355 = vrot.slane %v2348, %v2354
        %v2356 = vcombine.low %v2276, %v2277
        %v2358 = vunpack.c.l.s4 1983009808
        %v2359 = vunpack.c.0.s8 %v2358
        %v2360 = vlaneseq
        %v2361 = vshrl.u32 %v2360, 7
        %v2362 = vsub.s32 %v2359, %v2361
        %v2363 = vrot.slane %v2356, %v2362
        %v2364 = vcombine.low %v2268, %v2275
        %v2366 = vunpack.c.l.s4 1983009808
        %v2367 = vunpack.c.0.s8 %v2366
        %v2368 = vlaneseq
        %v2369 = vshrl.u32 %v2368, 7
        %v2370 = vsub.s32 %v2367, %v2369
        %v2371 = vrot.slane %v2364, %v2370
        %v2372 = vcombine.low %v2278, %v2279
        %v2374 = vunpack.c.l.s4 1983009808
        %v2375 = vunpack.c.0.s8 %v2374
        %v2376 = vlaneseq
        %v2377 = vshrl.u32 %v2376, 7
        %v2378 = vsub.s32 %v2375, %v2377
        %v2379 = vrot.slane %v2372, %v2378
        %v2380 = vcombine.low %v2355, %v2363
        %v2381 = vcombine.high %v2355, %v2363
        %v2383 = vunpack.c.l.s4 1934713408
        %v2384 = vunpack.c.0.s8 %v2383
        %v2385 = vlaneseq
        %v2386 = vshrl.u32 %v2385, 7
        %v2387 = vsub.s32 %v2384, %v2386
        %v2388 = vrot.slane %v2380, %v2387
        %v2390 = vunpack.c.l.s4 1934713408
        %v2391 = vunpack.c.0.s8 %v2390
        %v2392 = vlaneseq
        %v2393 = vshrl.u32 %v2392, 7
        %v2394 = vsub.s32 %v2391, %v2393
        %v2395 = vrot.slane %v2381, %v2394
        %v2396 = vcombine.low %v2371, %v2379
        %v2397 = vcombine.high %v2371, %v2379
        %v2399 = vunpack.c.l.s4 1934713408
        %v2400 = vunpack.c.0.s8 %v2399
        %v2401 = vlaneseq
        %v2402 = vshrl.u32 %v2401, 7
        %v2403 = vsub.s32 %v2400, %v2402
        %v2404 = vrot.slane %v2396, %v2403
        %v2406 = vunpack.c.l.s4 1934713408
        %v2407 = vunpack.c.0.s8 %v2406
        %v2408 = vlaneseq
        %v2409 = vshrl.u32 %v2408, 7
        %v2410 = vsub.s32 %v2407, %v2409
        %v2411 = vrot.slane %v2397, %v2410
        %v2412 = vcombine.low %v2388, %v2404
        %v2413 = vcombine.high %v2388, %v2404
        %v2414 = vcombine.low %v2395, %v2411
        %v2415 = vcombine.high %v2395, %v2411
        %v2416 = vcombine.low %v2320, %v2327
        %v2418 = vunpack.c.l.s4 1983009808
        %v2419 = vunpack.c.0.s8 %v2418
        %v2420 = vlaneseq
        %v2421 = vshrl.u32 %v2420, 7
        %v2422 = vsub.s32 %v2419, %v2421
        %v2423 = vrot.slane %v2416, %v2422
        %v2424 = vcombine.low %v2344, %v2345
        %v2426 = vunpack.c.l.s4 1983009808
        %v2427 = vunpack.c.0.s8 %v2426
        %v2428 = vlaneseq
        %v2429 = vshrl.u32 %v2428, 7
        %v2430 = vsub.s32 %v2427, %v2429
        %v2431 = vrot.slane %v2424, %v2430
        %v2432 = vcombine.low %v2336, %v2343
        %v2434 = vunpack.c.l.s4 1983009808
        %v2435 = vunpack.c.0.s8 %v2434
        %v2436 = vlaneseq
        %v2437 = vshrl.u32 %v2436, 7
        %v2438 = vsub.s32 %v2435, %v2437
        %v2439 = vrot.slane %v2432, %v2438
        %v2440 = vcombine.low %v2346, %v2347
        %v2442 = vunpack.c.l.s4 1983009808
        %v2443 = vunpack.c.0.s8 %v2442
        %v2444 = vlaneseq
        %v2445 = vshrl.u32 %v2444, 7
        %v2446 = vsub.s32 %v2443, %v2445
        %v2447 = vrot.slane %v2440, %v2446
        %v2448 = vcombine.low %v2423, %v2431
        %v2449 = vcombine.high %v2423, %v2431
        %v2451 = vunpack.c.l.s4 1934713408
        %v2452 = vunpack.c.0.s8 %v2451
        %v2453 = vlaneseq
        %v2454 = vshrl.u32 %v2453, 7
        %v2455 = vsub.s32 %v2452, %v2454
        %v2456 = vrot.slane %v2448, %v2455
        %v2458 = vunpack.c.l.s4 1934713408
        %v2459 = vunpack.c.0.s8 %v2458
        %v2460 = vlaneseq
        %v2461 = vshrl.u32 %v2460, 7
        %v2462 = vsub.s32 %v2459, %v2461
        %v2463 = vrot.slane %v2449, %v2462
        %v2464 = vcombine.low %v2439, %v2447
        %v2465 = vcombine.high %v2439, %v2447
        %v2467 = vunpack.c.l.s4 1934713408
        %v2468 = vunpack.c.0.s8 %v2467
        %v2469 = vlaneseq
        %v2470 = vshrl.u32 %v2469, 7
        %v2471 = vsub.s32 %v2468, %v2470
        %v2472 = vrot.slane %v2464, %v2471
        %v2474 = vunpack.c.l.s4 1934713408
        %v2475 = vunpack.c.0.s8 %v2474
        %v2476 = vlaneseq
        %v2477 = vshrl.u32 %v2476, 7
        %v2478 = vsub.s32 %v2475, %v2477
        %v2479 = vrot.slane %v2465, %v2478
        %v2480 = vcombine.low %v2456, %v2472
        %v2481 = vcombine.high %v2456, %v2472
        %v2482 = vcombine.low %v2463, %v2479
        %v2483 = vcombine.high %v2463, %v2479
        %2486 = vrot.lane.b32.xlu0 %v2413, 32
        %v2487 = vpop.permute.xlu0 %2486
        %2488 = vrot.lane.b32.xlu0 %v2481, 32
        %v2489 = vpop.permute.xlu0 %2488
        %2494 = vrot.lane.b32.xlu0 %v2414, 64
        %v2495 = vpop.permute.xlu0 %2494
        %2496 = vrot.lane.b32.xlu0 %v2482, 64
        %v2497 = vpop.permute.xlu0 %2496
        %2502 = vrot.lane.b32.xlu0 %v2415, 96
        %v2503 = vpop.permute.xlu0 %2502
        %2504 = vrot.lane.b32.xlu0 %v2483, 96
        %v2505 = vpop.permute.xlu0 %2504
        %v2508 = vsel %vm1732, %v2412, %v2487
        %v2509 = vsel %vm1732, %v2480, %v2489
        %vm2510 = vcmask 523264
        %v2511 = vsel %vm2510, %v2508, %v2495
        %v2512 = vsel %vm2510, %v2509, %v2497
        %vm2513 = vcmask 785408
        %v2514 = vsel %vm2513, %v2511, %v2503
        %v2515 = vsel %vm2513, %v2512, %v2505
        %v2516 = vpack.c.bf16 %v2515, %v2514
        %v2517 = vld [vmem:[#allocation8] sm:$0xf]
        %v2518 = vld [vmem:[#allocation8 + $0x4] sm:$0xf]
        %v2519 = vld [vmem:[#allocation8 + $0x8] sm:$0xf]
        %v2520 = vld [vmem:[#allocation8 + $0xc] sm:$0xf]
        %v2521 = vld [vmem:[#allocation8 + $0x10] sm:$0xf]
        %v2522 = vld [vmem:[#allocation8 + $0x14] sm:$0xf]
        %v2523 = vld [vmem:[#allocation8 + $0x18] sm:$0xf]
        %v2524 = vld [vmem:[#allocation8 + $0x1c] sm:$0xf]
        %v2525 = vld [vmem:[#allocation8 + $0x20] sm:$0xf]
        %v2526 = vld [vmem:[#allocation8 + $0x24] sm:$0xf]
        %v2527 = vld [vmem:[#allocation8 + $0x28] sm:$0xf]
        %v2528 = vld [vmem:[#allocation8 + $0x2c] sm:$0xf]
        %v2529 = vld [vmem:[#allocation8 + $0x30] sm:$0xf]
        %v2530 = vld [vmem:[#allocation8 + $0x34] sm:$0xf]
        %v2531 = vld [vmem:[#allocation8 + $0x38] sm:$0xf]
        %v2532 = vld [vmem:[#allocation8 + $0x3c] sm:$0xf]
        %v2533 = vld [vmem:[%s5] sm:$0x1]
        %v2535 = vlaneseq
        %v2536 = vshrl.u32 %v2535, 7
        %v2537 = vsub.s32 0, %v2536
        %v2538 = vrot.slane %v2533, %v2537
        %v2556 = vunpack.c.l.b16 %v2517
        %v2557 = vunpack.c.l.b16 %v2518
        %v2558 = vunpack.c.l.b16 %v2519
        %v2559 = vunpack.c.l.b16 %v2520
        %v2560 = vunpack.c.l.b16 %v2521
        %v2561 = vunpack.c.l.b16 %v2522
        %v2562 = vunpack.c.l.b16 %v2523
        %v2563 = vunpack.c.l.b16 %v2524
        %v2564 = vunpack.c.l.b16 %v2525
        %v2565 = vunpack.c.l.b16 %v2526
        %v2566 = vunpack.c.l.b16 %v2527
        %v2567 = vunpack.c.l.b16 %v2528
        %v2568 = vunpack.c.l.b16 %v2529
        %v2569 = vunpack.c.l.b16 %v2530
        %v2570 = vunpack.c.l.b16 %v2531
        %v2571 = vunpack.c.l.b16 %v2532
        %v2572 = vpack.c.b16 %v2557, %v2556
        %v2573 = vpack.c.b16 %v2559, %v2558
        %v2574 = vpack.c.b16 %v2561, %v2560
        %v2575 = vpack.c.b16 %v2563, %v2562
        %v2576 = vpack.c.b16 %v2565, %v2564
        %v2577 = vpack.c.b16 %v2567, %v2566
        %v2578 = vpack.c.b16 %v2569, %v2568
        %v2579 = vpack.c.b16 %v2571, %v2570
        %2588 = vmatprep.subr.bf16.mxu0 0
        %2589 = vmatpush1.bf16.msra.mxu0 %v2579
        %2590 = vmatprep.subr.bf16.mxu0 0
        %2591 = vmatpush1.bf16.msra.mxu0 %v2578
        %2592 = vmatprep.subr.bf16.mxu0 0
        %2593 = vmatpush1.bf16.msra.mxu0 %v2577
        %2594 = vmatprep.subr.bf16.mxu0 0
        %2595 = vmatpush1.bf16.msra.mxu0 %v2576
        %2596 = vmatprep.subr.bf16.mxu0 0
        %2597 = vmatpush1.bf16.msra.mxu0 %v2575
        %2598 = vmatprep.subr.bf16.mxu0 0
        %2599 = vmatpush1.bf16.msra.mxu0 %v2574
        %2600 = vmatprep.subr.bf16.mxu0 0
        %2601 = vmatpush1.bf16.msra.mxu0 %v2573
        %2602 = vmatprep.subr.bf16.mxu0 0
        %2603 = vmatpush1.bf16.msra.mxu0 %v2572
        %2604 = vmatprep.subr.bf16.mxu0 0
        %2605 = vmatpush2.bf16.msra.mxu0 0
        %2606 = vmatprep.subr.bf16.mxu0 0
        %2607 = vmatpush2.bf16.msra.mxu0 0
        %2608 = vmatprep.subr.bf16.mxu0 0
        %2609 = vmatpush2.bf16.msra.mxu0 0
        %2610 = vmatprep.subr.bf16.mxu0 0
        %2611 = vmatpush2.bf16.msra.mxu0 0
        %2612 = vmatprep.subr.bf16.mxu0 0
        %2613 = vmatpush2.bf16.msra.mxu0 0
        %2614 = vmatprep.subr.bf16.mxu0 0
        %2615 = vmatpush2.bf16.msra.mxu0 0
        %2616 = vmatprep.subr.bf16.mxu0 0
        %2617 = vmatpush2.bf16.msra.mxu0 0
        %2618 = vmatprep.subr.bf16.mxu0 0
        %2619 = vmatpush2.bf16.msra.mxu0 0
        %2620 = vmatprep.mubr.bf16.mxu0 0
        %2621 = vmatmul.mubr.bf16.gmra.mxu0 %v2516
        %v2622 = vpop.f32.mrf.mxu0
        %v2623 = vadd.f32 %v2538, %v2622
        %v2624 = vpop.f32.mrf.mxu0
        %v2625 = vpop.f32.mrf.mxu0
        %v2626 = vadd.f32 %v2538, %v2625
        %v2627 = vpop.f32.mrf.mxu0
        %2628 = vdwg.mxu0
        %v2629 = vadd.f32 %v2623, %v579
        %v2630 = vadd.f32 %v2626, %v580
        %v2631 = vld [vmem:[%s6] sm:$0x1]
        %v2632 = vld [vmem:[%s7] sm:$0x1]
        %2633 = vadd.xlane.f32.xlu0 %v2629
        %v2634 = vpop.xlane.xlu0 %2633
        %2635 = vadd.xlane.f32.xlu0 %v2630
        %v2636 = vpop.xlane.xlu0 %2635
        %v2637 = vrcp.pop 128.0
        %v2638 = vmul.f32 %v2634, %v2637
        %v2639 = vmul.f32 %v2636, %v2637
        %v2640 = vsub.f32 %v2629, %v2638
        %v2641 = vsub.f32 %v2630, %v2639
        %v2642 = vmul.f32 %v2640, %v2640
        %v2643 = vmul.f32 %v2641, %v2641
        %2644 = vadd.xlane.f32.xlu0 %v2642
        %v2645 = vpop.xlane.xlu0 %2644
        %2646 = vadd.xlane.f32.xlu0 %v2643
        %v2647 = vpop.xlane.xlu0 %2646
        %v2648 = vmul.f32 %v2645, %v2637
        %v2649 = vmul.f32 %v2647, %v2637
        %v2650 = vadd.f32 %v2648, 1e-12
        %v2651 = vadd.f32 %v2649, 1e-12
        %v2652 = vrsqrt.pop %v2650
        %v2653 = vrsqrt.pop %v2651
        %v2654 = vmul.f32 %v2640, %v2652
        %v2655 = vmul.f32 %v2641, %v2653
        %v2657 = vlaneseq
        %v2658 = vshrl.u32 %v2657, 7
        %v2659 = vsub.s32 0, %v2658
        %v2660 = vrot.slane %v2631, %v2659
        %v2662 = vmul.f32 %v2654, %v2660
        %v2663 = vmul.f32 %v2655, %v2660
        %v2665 = vlaneseq
        %v2666 = vshrl.u32 %v2665, 7
        %v2667 = vsub.s32 0, %v2666
        %v2668 = vrot.slane %v2632, %v2667
        %v2670 = vadd.f32 %v2662, %v2668
        %v2671 = vadd.f32 %v2663, %v2668
        %v2672 = vpack.c.bf16 %v2671, %v2670
        %v2673 = vld [vmem:[#allocation10] sm:$0xff]
        %v2674 = vld [vmem:[#allocation10 + $0x8] sm:$0xff]
        %v2675 = vld [vmem:[#allocation10 + $0x10] sm:$0xff]
        %v2676 = vld [vmem:[#allocation10 + $0x18] sm:$0xff]
        %v2677 = vld [vmem:[#allocation10 + $0x20] sm:$0xff]
        %v2678 = vld [vmem:[#allocation10 + $0x28] sm:$0xff]
        %v2679 = vld [vmem:[#allocation10 + $0x30] sm:$0xff]
        %v2680 = vld [vmem:[#allocation10 + $0x38] sm:$0xff]
        %v2681 = vld [vmem:[#allocation10 + $0x40] sm:$0xff]
        %v2682 = vld [vmem:[#allocation10 + $0x48] sm:$0xff]
        %v2683 = vld [vmem:[#allocation10 + $0x50] sm:$0xff]
        %v2684 = vld [vmem:[#allocation10 + $0x58] sm:$0xff]
        %v2685 = vld [vmem:[#allocation10 + $0x60] sm:$0xff]
        %v2686 = vld [vmem:[#allocation10 + $0x68] sm:$0xff]
        %v2687 = vld [vmem:[#allocation10 + $0x70] sm:$0xff]
        %v2688 = vld [vmem:[#allocation10 + $0x78] sm:$0xff]
        %v2689 = vld [vmem:[%s9] sm:$0x3]
        %v2691 = vlaneseq
        %v2692 = vshrl.u32 %v2691, 7
        %v2693 = vsub.s32 0, %v2692
        %v2694 = vrot.slane %v2689, %v2693
        %v2695 = vlaneseq
        %v2696 = vshrl.u32 %v2695, 7
        %v2697 = vsub.s32 1, %v2696
        %v2698 = vrot.slane %v2689, %v2697
        %v2717 = vunpack.c.l.b16 %v2673
        %v2718 = vunpack.c.h.b16 %v2673
        %v2719 = vunpack.c.l.b16 %v2674
        %v2720 = vunpack.c.h.b16 %v2674
        %v2721 = vunpack.c.l.b16 %v2675
        %v2722 = vunpack.c.h.b16 %v2675
        %v2723 = vunpack.c.l.b16 %v2676
        %v2724 = vunpack.c.h.b16 %v2676
        %v2725 = vunpack.c.l.b16 %v2677
        %v2726 = vunpack.c.h.b16 %v2677
        %v2727 = vunpack.c.l.b16 %v2678
        %v2728 = vunpack.c.h.b16 %v2678
        %v2729 = vunpack.c.l.b16 %v2679
        %v2730 = vunpack.c.h.b16 %v2679
        %v2731 = vunpack.c.l.b16 %v2680
        %v2732 = vunpack.c.h.b16 %v2680
        %v2733 = vunpack.c.l.b16 %v2681
        %v2734 = vunpack.c.h.b16 %v2681
        %v2735 = vunpack.c.l.b16 %v2682
        %v2736 = vunpack.c.h.b16 %v2682
        %v2737 = vunpack.c.l.b16 %v2683
        %v2738 = vunpack.c.h.b16 %v2683
        %v2739 = vunpack.c.l.b16 %v2684
        %v2740 = vunpack.c.h.b16 %v2684
        %v2741 = vunpack.c.l.b16 %v2685
        %v2742 = vunpack.c.h.b16 %v2685
        %v2743 = vunpack.c.l.b16 %v2686
        %v2744 = vunpack.c.h.b16 %v2686
        %v2745 = vunpack.c.l.b16 %v2687
        %v2746 = vunpack.c.h.b16 %v2687
        %v2747 = vunpack.c.l.b16 %v2688
        %v2748 = vunpack.c.h.b16 %v2688
        %v2749 = vpack.c.b16 %v2719, %v2717
        %v2750 = vpack.c.b16 %v2720, %v2718
        %v2751 = vpack.c.b16 %v2723, %v2721
        %v2752 = vpack.c.b16 %v2724, %v2722
        %v2753 = vpack.c.b16 %v2727, %v2725
        %v2754 = vpack.c.b16 %v2728, %v2726
        %v2755 = vpack.c.b16 %v2731, %v2729
        %v2756 = vpack.c.b16 %v2732, %v2730
        %v2757 = vpack.c.b16 %v2735, %v2733
        %v2758 = vpack.c.b16 %v2736, %v2734
        %v2759 = vpack.c.b16 %v2739, %v2737
        %v2760 = vpack.c.b16 %v2740, %v2738
        %v2761 = vpack.c.b16 %v2743, %v2741
        %v2762 = vpack.c.b16 %v2744, %v2742
        %v2763 = vpack.c.b16 %v2747, %v2745
        %v2764 = vpack.c.b16 %v2748, %v2746
        %2781 = vmatprep.subr.bf16.mxu0 %v2764
        %2782 = vmatpush1.bf16.msra.mxu0 %v2763
        %2783 = vmatprep.subr.bf16.mxu0 %v2762
        %2784 = vmatpush1.bf16.msra.mxu0 %v2761
        %2785 = vmatprep.subr.bf16.mxu0 %v2760
        %2786 = vmatpush1.bf16.msra.mxu0 %v2759
        %2787 = vmatprep.subr.bf16.mxu0 %v2758
        %2788 = vmatpush1.bf16.msra.mxu0 %v2757
        %2789 = vmatprep.subr.bf16.mxu0 %v2756
        %2790 = vmatpush1.bf16.msra.mxu0 %v2755
        %2791 = vmatprep.subr.bf16.mxu0 %v2754
        %2792 = vmatpush1.bf16.msra.mxu0 %v2753
        %2793 = vmatprep.subr.bf16.mxu0 %v2752
        %2794 = vmatpush1.bf16.msra.mxu0 %v2751
        %2795 = vmatprep.subr.bf16.mxu0 %v2750
        %2796 = vmatpush1.bf16.msra.mxu0 %v2749
        %2797 = vmatprep.subr.bf16.mxu0 0
        %2798 = vmatpush2.bf16.msra.mxu0 0
        %2799 = vmatprep.subr.bf16.mxu0 0
        %2800 = vmatpush2.bf16.msra.mxu0 0
        %2801 = vmatprep.subr.bf16.mxu0 0
        %2802 = vmatpush2.bf16.msra.mxu0 0
        %2803 = vmatprep.subr.bf16.mxu0 0
        %2804 = vmatpush2.bf16.msra.mxu0 0
        %2805 = vmatprep.subr.bf16.mxu0 0
        %2806 = vmatpush2.bf16.msra.mxu0 0
        %2807 = vmatprep.subr.bf16.mxu0 0
        %2808 = vmatpush2.bf16.msra.mxu0 0
        %2809 = vmatprep.subr.bf16.mxu0 0
        %2810 = vmatpush2.bf16.msra.mxu0 0
        %2811 = vmatprep.subr.bf16.mxu0 0
        %2812 = vmatpush2.bf16.msra.mxu0 0
        %2813 = vmatprep.mubr.bf16.mxu0 0
        %2814 = vmatmul.mubr.bf16.gmra.mxu0 %v2672
        %v2815 = vpop.f32.mrf.mxu0
        %v2816 = vadd.f32 %v2694, %v2815
        %v2817 = vpop.f32.mrf.mxu0
        %v2818 = vadd.f32 %v2698, %v2817
        %v2819 = vpop.f32.mrf.mxu0
        %v2820 = vadd.f32 %v2694, %v2819
        %v2821 = vpop.f32.mrf.mxu0
        %v2822 = vadd.f32 %v2698, %v2821
        %2823 = vdwg.mxu0
        %v2824 = vmul.f32 %v2816, 0.5
        %v2825 = vmul.f32 %v2818, 0.5
        %v2826 = vmul.f32 %v2820, 0.5
        %v2827 = vmul.f32 %v2822, 0.5
        %v2828 = vmul.f32 %v2816, 0.70710677
        %v2829 = vmul.f32 %v2818, 0.70710677
        %v2830 = vmul.f32 %v2820, 0.70710677
        %v2831 = vmul.f32 %v2822, 0.70710677
        %v2832 = verf.f32.pop %v2828
        %v2833 = verf.f32.pop %v2829
        %v2834 = verf.f32.pop %v2830
        %v2835 = verf.f32.pop %v2831
        %v2836 = vadd.f32 %v2832, 1.0
        %v2837 = vadd.f32 %v2833, 1.0
        %v2838 = vadd.f32 %v2834, 1.0
        %v2839 = vadd.f32 %v2835, 1.0
        %v2840 = vmul.f32 %v2824, %v2836
        %v2841 = vmul.f32 %v2825, %v2837
        %v2842 = vmul.f32 %v2826, %v2838
        %v2843 = vmul.f32 %v2827, %v2839
        %v2844 = vpack.c.bf16 %v2842, %v2840
        %v2845 = vpack.c.bf16 %v2843, %v2841
        %v2846 = vld [vmem:[#allocation11] sm:$0xf]
        %v2847 = vld [vmem:[#allocation11 + $0x4] sm:$0xf]
        %v2848 = vld [vmem:[#allocation11 + $0x8] sm:$0xf]
        %v2849 = vld [vmem:[#allocation11 + $0xc] sm:$0xf]
        %v2850 = vld [vmem:[#allocation11 + $0x10] sm:$0xf]
        %v2851 = vld [vmem:[#allocation11 + $0x14] sm:$0xf]
        %v2852 = vld [vmem:[#allocation11 + $0x18] sm:$0xf]
        %v2853 = vld [vmem:[#allocation11 + $0x1c] sm:$0xf]
        %v2854 = vld [vmem:[#allocation11 + $0x20] sm:$0xf]
        %v2855 = vld [vmem:[#allocation11 + $0x24] sm:$0xf]
        %v2856 = vld [vmem:[#allocation11 + $0x28] sm:$0xf]
        %v2857 = vld [vmem:[#allocation11 + $0x2c] sm:$0xf]
        %v2858 = vld [vmem:[#allocation11 + $0x30] sm:$0xf]
        %v2859 = vld [vmem:[#allocation11 + $0x34] sm:$0xf]
        %v2860 = vld [vmem:[#allocation11 + $0x38] sm:$0xf]
        %v2861 = vld [vmem:[#allocation11 + $0x3c] sm:$0xf]
        %v2862 = vld [vmem:[#allocation11 + $0x40] sm:$0xf]
        %v2863 = vld [vmem:[#allocation11 + $0x44] sm:$0xf]
        %v2864 = vld [vmem:[#allocation11 + $0x48] sm:$0xf]
        %v2865 = vld [vmem:[#allocation11 + $0x4c] sm:$0xf]
        %v2866 = vld [vmem:[#allocation11 + $0x50] sm:$0xf]
        %v2867 = vld [vmem:[#allocation11 + $0x54] sm:$0xf]
        %v2868 = vld [vmem:[#allocation11 + $0x58] sm:$0xf]
        %v2869 = vld [vmem:[#allocation11 + $0x5c] sm:$0xf]
        %v2870 = vld [vmem:[#allocation11 + $0x60] sm:$0xf]
        %v2871 = vld [vmem:[#allocation11 + $0x64] sm:$0xf]
        %v2872 = vld [vmem:[#allocation11 + $0x68] sm:$0xf]
        %v2873 = vld [vmem:[#allocation11 + $0x6c] sm:$0xf]
        %v2874 = vld [vmem:[#allocation11 + $0x70] sm:$0xf]
        %v2875 = vld [vmem:[#allocation11 + $0x74] sm:$0xf]
        %v2876 = vld [vmem:[#allocation11 + $0x78] sm:$0xf]
        %v2877 = vld [vmem:[#allocation11 + $0x7c] sm:$0xf]
        %v2878 = vld [vmem:[%s11] sm:$0x1]
        %v2880 = vlaneseq
        %v2881 = vshrl.u32 %v2880, 7
        %v2882 = vsub.s32 0, %v2881
        %v2883 = vrot.slane %v2878, %v2882
        %v2917 = vunpack.c.l.b16 %v2846
        %v2918 = vunpack.c.l.b16 %v2847
        %v2919 = vunpack.c.l.b16 %v2848
        %v2920 = vunpack.c.l.b16 %v2849
        %v2921 = vunpack.c.l.b16 %v2850
        %v2922 = vunpack.c.l.b16 %v2851
        %v2923 = vunpack.c.l.b16 %v2852
        %v2924 = vunpack.c.l.b16 %v2853
        %v2925 = vunpack.c.l.b16 %v2854
        %v2926 = vunpack.c.l.b16 %v2855
        %v2927 = vunpack.c.l.b16 %v2856
        %v2928 = vunpack.c.l.b16 %v2857
        %v2929 = vunpack.c.l.b16 %v2858
        %v2930 = vunpack.c.l.b16 %v2859
        %v2931 = vunpack.c.l.b16 %v2860
        %v2932 = vunpack.c.l.b16 %v2861
        %v2933 = vunpack.c.l.b16 %v2862
        %v2934 = vunpack.c.l.b16 %v2863
        %v2935 = vunpack.c.l.b16 %v2864
        %v2936 = vunpack.c.l.b16 %v2865
        %v2937 = vunpack.c.l.b16 %v2866
        %v2938 = vunpack.c.l.b16 %v2867
        %v2939 = vunpack.c.l.b16 %v2868
        %v2940 = vunpack.c.l.b16 %v2869
        %v2941 = vunpack.c.l.b16 %v2870
        %v2942 = vunpack.c.l.b16 %v2871
        %v2943 = vunpack.c.l.b16 %v2872
        %v2944 = vunpack.c.l.b16 %v2873
        %v2945 = vunpack.c.l.b16 %v2874
        %v2946 = vunpack.c.l.b16 %v2875
        %v2947 = vunpack.c.l.b16 %v2876
        %v2948 = vunpack.c.l.b16 %v2877
        %v2949 = vpack.c.b16 %v2918, %v2917
        %v2950 = vpack.c.b16 %v2920, %v2919
        %v2951 = vpack.c.b16 %v2922, %v2921
        %v2952 = vpack.c.b16 %v2924, %v2923
        %v2953 = vpack.c.b16 %v2926, %v2925
        %v2954 = vpack.c.b16 %v2928, %v2927
        %v2955 = vpack.c.b16 %v2930, %v2929
        %v2956 = vpack.c.b16 %v2932, %v2931
        %v2957 = vpack.c.b16 %v2934, %v2933
        %v2958 = vpack.c.b16 %v2936, %v2935
        %v2959 = vpack.c.b16 %v2938, %v2937
        %v2960 = vpack.c.b16 %v2940, %v2939
        %v2961 = vpack.c.b16 %v2942, %v2941
        %v2962 = vpack.c.b16 %v2944, %v2943
        %v2963 = vpack.c.b16 %v2946, %v2945
        %v2964 = vpack.c.b16 %v2948, %v2947
        %2981 = vmatprep.subr.bf16.mxu0 0
        %2982 = vmatpush1.bf16.msra.mxu0 %v2956
        %2983 = vmatprep.subr.bf16.mxu0 0
        %2984 = vmatpush1.bf16.msra.mxu0 %v2955
        %2985 = vmatprep.subr.bf16.mxu0 0
        %2986 = vmatpush1.bf16.msra.mxu0 %v2954
        %2987 = vmatprep.subr.bf16.mxu0 0
        %2988 = vmatpush1.bf16.msra.mxu0 %v2953
        %2989 = vmatprep.subr.bf16.mxu0 0
        %2990 = vmatpush1.bf16.msra.mxu0 %v2952
        %2991 = vmatprep.subr.bf16.mxu0 0
        %2992 = vmatpush1.bf16.msra.mxu0 %v2951
        %2993 = vmatprep.subr.bf16.mxu0 0
        %2994 = vmatpush1.bf16.msra.mxu0 %v2950
        %2995 = vmatprep.subr.bf16.mxu0 0
        %2996 = vmatpush1.bf16.msra.mxu0 %v2949
        %2997 = vmatprep.subr.bf16.mxu0 0
        %2998 = vmatpush2.bf16.msra.mxu0 %v2964
        %2999 = vmatprep.subr.bf16.mxu0 0
        %3000 = vmatpush2.bf16.msra.mxu0 %v2963
        %3001 = vmatprep.subr.bf16.mxu0 0
        %3002 = vmatpush2.bf16.msra.mxu0 %v2962
        %3003 = vmatprep.subr.bf16.mxu0 0
        %3004 = vmatpush2.bf16.msra.mxu0 %v2961
        %3005 = vmatprep.subr.bf16.mxu0 0
        %3006 = vmatpush2.bf16.msra.mxu0 %v2960
        %3007 = vmatprep.subr.bf16.mxu0 0
        %3008 = vmatpush2.bf16.msra.mxu0 %v2959
        %3009 = vmatprep.subr.bf16.mxu0 0
        %3010 = vmatpush2.bf16.msra.mxu0 %v2958
        %3011 = vmatprep.subr.bf16.mxu0 0
        %3012 = vmatpush2.bf16.msra.mxu0 %v2957
        %3013 = vmatprep.mubr.bf16.mxu0 %v2845
        %3014 = vmatmul.mubr.bf16.gmra.mxu0 %v2844
        %v3015 = vpop.f32.mrf.mxu0
        %v3016 = vadd.f32 %v2883, %v3015
        %v3017 = vpop.f32.mrf.mxu0
        %v3018 = vpop.f32.mrf.mxu0
        %v3019 = vadd.f32 %v2883, %v3018
        %v3020 = vpop.f32.mrf.mxu0
        %3021 = vdwg.mxu0
        %v3022 = vadd.f32 %v3016, %v2670
        %v3023 = vadd.f32 %v3019, %v2671
        %v3024 = vld [vmem:[%s12] sm:$0x1]
        %v3025 = vld [vmem:[%s13] sm:$0x1]
        %3026 = vadd.xlane.f32.xlu0 %v3022
        %v3027 = vpop.xlane.xlu0 %3026
        %3028 = vadd.xlane.f32.xlu0 %v3023
        %v3029 = vpop.xlane.xlu0 %3028
        %v3030 = vmul.f32 %v3027, %v2637
        %v3031 = vmul.f32 %v3029, %v2637
        %v3032 = vsub.f32 %v3022, %v3030
        %v3033 = vsub.f32 %v3023, %v3031
        %v3034 = vmul.f32 %v3032, %v3032
        %v3035 = vmul.f32 %v3033, %v3033
        %3036 = vadd.xlane.f32.xlu0 %v3034
        %v3037 = vpop.xlane.xlu0 %3036
        %3038 = vadd.xlane.f32.xlu0 %v3035
        %v3039 = vpop.xlane.xlu0 %3038
        %v3040 = vmul.f32 %v3037, %v2637
        %v3041 = vmul.f32 %v3039, %v2637
        %v3042 = vadd.f32 %v3040, 1e-12
        %v3043 = vadd.f32 %v3041, 1e-12
        %v3044 = vrsqrt.pop %v3042
        %v3045 = vrsqrt.pop %v3043
        %v3046 = vmul.f32 %v3032, %v3044
        %v3047 = vmul.f32 %v3033, %v3045
        %v3049 = vlaneseq
        %v3050 = vshrl.u32 %v3049, 7
        %v3051 = vsub.s32 0, %v3050
        %v3052 = vrot.slane %v3024, %v3051
        %v3054 = vmul.f32 %v3046, %v3052
        %v3055 = vmul.f32 %v3047, %v3052
        %v3057 = vlaneseq
        %v3058 = vshrl.u32 %v3057, 7
        %v3059 = vsub.s32 0, %v3058
        %v3060 = vrot.slane %v3025, %v3059
        %v3062 = vadd.f32 %v3054, %v3060
        %v3063 = vadd.f32 %v3055, %v3060
        %3064 = vst [vmem:[%s577] sm:$0xff] %v3062
        %3065 = vst [vmem:[%s577 + $0x8] sm:$0xff] %v3063
        %s3066 = sand.u32 %s348, 1
        %s3067 = scalar_lea.sflag [#allocation4], %s3066
        %s3068 = sand.u32 %s348, 1
        %s3069 = smul.addr %s3068, 16
        %s3070 = scalar_lea.vmem [#allocation13], %s3069
        // Predicated region
        $region101: #{tpu_custom_call.1} parent=75 // pred_check
          %p3071 = pneg %p358
        $region102: #{tpu_custom_call.1} parent=75 // pred_check_branch
          %3073 = sbr.rel (%p3071) target = $region104
        $region103: #{tpu_custom_call.1} parent=75 // pred_region
          %s3075 = ssub.s32 256, 256
          %3076 = vsyncadd %s3067, %s3075
          %s3077 = smul.addr %s36, 2
          %s3078 = smul.addr %s3077, 128
          %s3079 = scalar_lea.hbm %s14, %s3078
          %s3080 = sshll.u32 %s3070, 4
          %s3081 = int_to_ptr.vmem [resolvable:$true] %s3080
          %3086 = dma.vmem_to_hbm [thread:$0]  %s3081, 256, %s3079, %s3067, 128, 128, 8
        $region104: #{tpu_custom_call.1} parent=75 // pred_fallthru
          _
      $region76: #{tpu_custom_call.1} parent=5 // pred_fallthru
        _
      %p3087 = scmp.le.s32.totalorder 2, %s31
      // Predicated region
      $region105: #{tpu_custom_call.1} parent=5 // pred_check
        %p3088 = pneg %p3087
      $region106: #{tpu_custom_call.1} parent=5 // pred_check_branch
        %3090 = sbr.rel (%p3088) target = $region108
      $region107: #{tpu_custom_call.1} parent=5 // pred_region
        %s3091 = ssub.s32 %s31, 2
        // Predicated region
        $region109: #{tpu_custom_call.1} parent=107 // pred_check
          %p3092 = pneg %p364
        $region110: #{tpu_custom_call.1} parent=107 // pred_check_branch
          %3094 = sbr.rel (%p3092) target = $region112
        $region111: #{tpu_custom_call.1} parent=107 // pred_region
          %s3095 = sand.u32 %s349, 1
          %s3096 = scalar_lea.sflag [#allocation4], %s3095
          %s3097 = sand.u32 %s349, 1
          %s3098 = smul.addr %s3097, 16
          %s3099 = scalar_lea.vmem [#allocation13], %s3098
          %3100 = dma.done %s3096, 256
        $region112: #{tpu_custom_call.1} parent=107 // pred_fallthru
          _
      $region108: #{tpu_custom_call.1} parent=5 // pred_fallthru
        _
    $region6: #{tpu_custom_call.1} parent=1 // loop_footer
      %s35 = sadd.s32 1, %s31
    $region7: #{tpu_custom_call.1} parent=1 // loop_footer_branch
      %30 = sbr.rel target = $region3
    $region8: #{tpu_custom_call.1} parent=1 // loop_exit
      _
    %3101 = vsyncpa [#allocation3], 1
    %s3102 = scalar_lea.sflag [#allocation3], 1
    %3103 = vsyncpa %s3102, 1
    %3104 = vsyncpa [#allocation6], 1
    %s3105 = scalar_lea.sflag [#allocation6], 1
    %3106 = vsyncpa %s3105, 1
    %3107 = vsyncpa [#allocation9], 1
    %3108 = vsyncpa [#allocation12], 1
    %3109 = vsyncpa [#allocation4], 1
    %s3110 = scalar_lea.sflag [#allocation4], 1
    %3111 = vsyncpa %s3110, 1

</llo_original>
